<compile_context>
chip_gen: v7x
topology: tpu7x:2x2x1
jax: 0.10.0
libtpu: 0.0.40
codegen_flags: <defaults>
</compile_context>

<pallas_src>
import functools

import jax
import jax.numpy as jnp
from jax.experimental import pallas as pl
from jax.experimental.pallas import tpu as pltpu

# MXU operand dtype for the in-kernel ee @ [h|1] aggregation.  float32 keeps numerics
# identical to the torch module / f32 reference.  On v6e / v7x this can be flipped to
# jnp.bfloat16 (~2x MXU throughput, half the h-tile footprint; accumulation stays f32 via
# preferred_element_type).  On v5e keep elementwise math in f32 regardless (no bf16 VPU/EUP).
MATMUL_DTYPE = jnp.float32

_LANE = 128


def _round_up(n, m):
    return ((n + m - 1) // m) * m


def _pick_tiles(n_pad):
    """Row tile tm and neighbor tile tk for a padded node count (multiple of 128)."""
    tm = 128                      # keeps >= 2 row tiles for N >= 256 (v7x megacore)
    tk = 128
    for cand in (1024, 512, 256):
        if n_pad % cand == 0:
            tk = cand
            break
    return tm, tk


# ----------------------------------------------------------------------------
# Fused multi-head SpGraphAttentionLayer kernel
# ----------------------------------------------------------------------------
def _gat_fused_kernel(g1_ref, g2t_ref, haug_ref, adj_ref, out_ref, acc_ref,
                      *, nheads, dhead, fout, apply_elu):
    """Grid = (row tiles i ["parallel"], neighbor tiles k ["arbitrary" reduction]).

    Per head h:
        ee_ij = adj_ij * exp(-leakyrelu_a(f1_i + f2_j))
              = adj_ij * min(e^{-f1_i} e^{-f2_j}, e^{-a f1_i} e^{-a f2_j})  (0 < a <= 1)
        [num_i | den_i] = sum_j ee_ij * [h_j | 1]    (one MXU matmul, rowsum folded in)
        out_i = elu(num_i / den_i)                   (finalize, lane-dense store)
    """
    k = pl.program_id(1)

    @pl.when(k == 0)
    def _init():
        acc_ref[...] = jnp.zeros_like(acc_ref)

    mask = adj_ref[...].astype(jnp.float32)        # adjacency is 0/1 int8 by construction
    g1 = g1_ref[...]                               # (2, TM, H): [e^{-f1}, e^{-a f1}]
    g2t = g2t_ref[...]                             # (2, H, TK): [e^{-f2}, e^{-a f2}]^T

    for h in range(nheads):
        ee_pos = g1[0, :, h:h + 1] * g2t[0, h:h + 1, :]            # (TM, TK)
        ee_neg = g1[1, :, h:h + 1] * g2t[1, h:h + 1, :]
        ee = jnp.minimum(ee_pos, ee_neg) * mask                    # VALU only, no EUP
        acc_ref[h] += jnp.dot(ee.astype(MATMUL_DTYPE),
                              haug_ref[h].astype(MATMUL_DTYPE),
                              preferred_element_type=jnp.float32)  # (TM, D+1)

    @pl.when(k == pl.num_programs(1) - 1)
    def _finalize():
        cols = []
        for h in range(nheads):
            blk = acc_ref[h]                                       # (TM, D+1)
            num = blk[:, :dhead]
            den = blk[:, dhead:dhead + 1]
            # Exact divide (epilogue only); guard isolated / padded rows (0/0 -> 0).
            hp = num / jnp.maximum(den, 1e-30)
            if apply_elu:
                hp = jnp.where(hp > 0, hp, jnp.exp(jnp.minimum(hp, 0.0)) - 1.0)
            cols.append(hp)
        res = jnp.concatenate(cols, axis=1) if len(cols) > 1 else cols[0]  # (TM, fout)
        pad = out_ref.shape[1] - fout
        if pad:
            res = jnp.concatenate(
                [res, jnp.zeros((res.shape[0], pad), jnp.float32)], axis=1)
        out_ref[...] = res                                          # single unmasked store


def gat_layer_fused(x, adj_i8, W_all, a1_list, a2_list, *, alpha, nheads, dhead,
                    apply_elu):
    """One fused multi-head SpGraphAttentionLayer (inference).

    x       : (Np, f_in)  node features; rows beyond the real N are zero padding
    adj_i8  : (Np, Np)    0/1 adjacency, int8
    W_all   : (f_in, nheads*dhead)   [W_1 | ... | W_H]
    a1_list / a2_list : per-head (dhead, 1) attention vectors
    returns : (Np, nheads*dhead) float32
    """
    assert 0.0 < alpha <= 1.0   # needed for leakyrelu(s) = max(s, alpha*s) factorization
    n_pad, _ = x.shape
    fout = nheads * dhead
    fout_pad = _round_up(fout, _LANE)

    # --- hoisted projection: one wide matmul per layer (was recomputed per row tile) ----
    h = (x @ W_all).astype(jnp.float32)                                 # (Np, H*D)
    heads = [h[:, i * dhead:(i + 1) * dhead] for i in range(nheads)]

    # --- tiny per-head attention projections and their exp tables ((Np, H) each) --------
    f1 = jnp.concatenate([heads[i] @ a1_list[i] for i in range(nheads)], axis=1)
    f2 = jnp.concatenate([heads[i] @ a2_list[i] for i in range(nheads)], axis=1)
    # Clamp so e^{-f1} * e^{-f2} never becomes inf * 0 = nan; exact wherever the torch
    # reference's own exp(-(f1+f2)) is representable.
    f1 = jnp.clip(f1, -40.0, 40.0)
    f2 = jnp.clip(f2, -40.0, 40.0)
    g1 = jnp.stack([jnp.exp(-f1), jnp.exp(-alpha * f1)], axis=0)        # (2, Np, H)
    g2t = jnp.stack([jnp.exp(-f2).T, jnp.exp(-alpha * f2).T], axis=0)   # (2, H, Np)

    # --- per-head h with an appended ones column (folds the row-sum into the MXU) -------
    ones = jnp.ones((n_pad, 1), jnp.float32)
    haug = jnp.stack(
        [jnp.concatenate([heads[i], ones], axis=1) for i in range(nheads)], axis=0)

    tm, tk = _pick_tiles(n_pad)
    grid = (n_pad // tm, n_pad // tk)

    kernel = functools.partial(_gat_fused_kernel, nheads=nheads, dhead=dhead,
                               fout=fout, apply_elu=apply_elu)
    out = pl.pallas_call(
        kernel,
        out_shape=jax.ShapeDtypeStruct((n_pad, fout_pad), jnp.float32),
        grid_spec=pltpu.PrefetchScalarGridSpec(
            num_scalar_prefetch=0,
            grid=grid,
            in_specs=[
                pl.BlockSpec((2, tm, nheads), lambda i, k: (0, i, 0)),         # exp(-f1) tables
                pl.BlockSpec((2, nheads, tk), lambda i, k: (0, 0, k)),         # exp(-f2)^T tables
                pl.BlockSpec((nheads, tk, dhead + 1), lambda i, k: (0, k, 0)),  # [h | 1]
                pl.BlockSpec((tm, tk), lambda i, k: (i, k)),                    # int8 adjacency
            ],
            out_specs=pl.BlockSpec((tm, fout_pad), lambda i, k: (i, 0)),
            scratch_shapes=[
                pltpu.VMEM((nheads, tm, dhead + 1), jnp.float32),              # [num | den]
            ],
        ),
        compiler_params=pltpu.CompilerParams(
            dimension_semantics=("parallel", "arbitrary"),
            vmem_limit_bytes=48 * 1024 * 1024,         # fits v7x's 64 MiB VMEM with headroom
        ),
        cost_estimate=pl.CostEstimate(
            flops=int(2 * n_pad * n_pad * nheads * (dhead + 1)       # ee @ [h|1] on the MXU
                      + 5 * n_pad * n_pad * nheads),                 # ee construction (VALU)
            transcendentals=int(n_pad * (fout + nheads)),            # ELU in the epilogue
            bytes_accessed=int(n_pad * n_pad                         # int8 adjacency
                               + 4 * (n_pad // tm) * n_pad * nheads * (dhead + 3)
                               + 4 * n_pad * (2 * nheads + fout_pad)),
        ),
    )(g1, g2t, haug, adj_i8)
    return out[:, :fout]


# ----------------------------------------------------------------------------
# Pair-score kernel: rows gathered in the wrapper, lane-dense 128-wide MXU output
# ----------------------------------------------------------------------------
def _score_kernel(e1_ref, e2_ref, w_ref, out_ref):
    """out[p, :] = broadcast( (e1[p] @ weight) . e2[p] )  -- dense 128-lane store."""
    t = jnp.dot(e1_ref[...], w_ref[...], preferred_element_type=jnp.float32)   # (Pp, d)
    prod = t * e2_ref[...]
    # Fold the row reduction into the MXU (no XLU cross-lane reduce); every output
    # column holds the score, the wrapper reads column 0.
    ones = jnp.ones((prod.shape[1], out_ref.shape[1]), jnp.float32)
    out_ref[...] = jnp.dot(prod, ones, preferred_element_type=jnp.float32)


def score_op(x, weight, idx1, idx2):
    """scores[p] = x[idx1[p]] @ weight @ x[idx2[p]]   (the diag(.) of the torch module)."""
    _, d = x.shape
    p = int(idx1.shape[0])
    p_pad = _round_up(max(p, 8), 8)
    # Gather pair rows in the wrapper: no per-row in-kernel loads, no full-x residency.
    e1 = jnp.zeros((p_pad, d), jnp.float32).at[:p].set(jnp.take(x, idx1, axis=0))
    e2 = jnp.zeros((p_pad, d), jnp.float32).at[:p].set(jnp.take(x, idx2, axis=0))
    out = pl.pallas_call(
        _score_kernel,
        out_shape=jax.ShapeDtypeStruct((p_pad, _LANE), jnp.float32),
        grid=(1,),
        in_specs=[
            pl.BlockSpec((p_pad, d), lambda i: (0, 0)),
            pl.BlockSpec((p_pad, d), lambda i: (0, 0)),
            pl.BlockSpec((d, d), lambda i: (0, 0)),
        ],
        out_specs=pl.BlockSpec((p_pad, _LANE), lambda i: (0, 0)),
        cost_estimate=pl.CostEstimate(
            flops=int(2 * p_pad * d * d + p_pad * d + 2 * p_pad * d * _LANE),
            transcendentals=0,
            bytes_accessed=int(4 * (2 * p_pad * d + d * d + p_pad * _LANE)),
        ),
    )(e1, e2, weight)
    return out[:p, 0]


# ----------------------------------------------------------------------------
# Full SpGAT forward (inference)
# ----------------------------------------------------------------------------
def spgat_forward(x, adj, idx1, idx2, params, *, alpha):
    """SpGAT.forward in eval mode.  pair1_map / pair2_map (sparse one-hot row selectors)
    are represented by their row indices idx1 / idx2."""
    # TODO(synk): train-mode stochastic dropout (on x and on edge_e) not implemented.
    n = x.shape[0]
    n_pad = _round_up(max(n, _LANE), _LANE)

    # Pad the node dimension once for both layers; padded nodes are isolated (zero
    # adjacency rows/cols), produce zero features, and are never read by the pair gather.
    xp = jnp.zeros((n_pad, x.shape[1]), jnp.float32).at[:n].set(x)
    adj_i8 = jnp.zeros((n_pad, n_pad), jnp.int8).at[:n, :n].set(
        (adj != 0).astype(jnp.int8))

    heads = params["heads"]
    nheads = len(heads)
    nhid = heads[0][0].shape[1]
    W_all = jnp.concatenate([W for (W, _, _) in heads], axis=1)
    a1s = [a1 for (_, a1, _) in heads]
    a2s = [a2 for (_, _, a2) in heads]

    # x = F.dropout(x) -> identity (eval); concat of all attention heads (concat=True => ELU).
    xh = gat_layer_fused(xp, adj_i8, W_all, a1s, a2s, alpha=alpha,
                         nheads=nheads, dhead=nhid, apply_elu=True)
    # x = F.dropout(x) -> identity; out_att has concat=False, but SpGAT.forward wraps it
    # in F.elu, so the ELU is fused into the second layer's finalize as well.
    Wo, a1o, a2o = params["out"]
    xo = gat_layer_fused(xh, adj_i8, Wo, [a1o], [a2o], alpha=alpha,
                         nheads=1, dhead=nhid, apply_elu=True)
    return score_op(xo, params["weight"], idx1, idx2)


# ----------------------------------------------------------------------------
# Deterministic parameter init (mirrors the torch module's __init__ shapes)
# ----------------------------------------------------------------------------
def _xavier_uniform(key, shape, gain):
    fan_in, fan_out = shape
    bound = gain * (6.0 / (fan_in + fan_out)) ** 0.5
    return jax.random.uniform(key, shape, jnp.float32, -bound, bound)


def _xavier_normal(key, shape, gain):
    fan_in, fan_out = shape
    std = gain * (2.0 / (fan_in + fan_out)) ** 0.5
    return std * jax.random.normal(key, shape, dtype=jnp.float32)


def init_params(key, nfeat, nhid, nheads):
    gain = 1.414
    keys = jax.random.split(key, 2 * nheads + 3)
    heads = []
    for h in range(nheads):
        W = _xavier_normal(keys[2 * h], (nfeat, nhid), gain)
        a = _xavier_normal(keys[2 * h + 1], (1, 2 * nhid), gain)
        a1 = a[0, :nhid].reshape(nhid, 1)
        a2 = a[0, nhid:].reshape(nhid, 1)
        heads.append((W, a1, a2))
    Wo = _xavier_normal(keys[2 * nheads], (nhid * nheads, nhid), gain)
    ao = _xavier_normal(keys[2 * nheads + 1], (1, 2 * nhid), gain)
    out = (Wo, ao[0, :nhid].reshape(nhid, 1), ao[0, nhid:].reshape(nhid, 1))
    weight = _xavier_uniform(keys[2 * nheads + 2], (nhid, nhid), gain)
    return {"heads": heads, "out": out, "weight": weight}


# ----------------------------------------------------------------------------
# Pure-JAX reference (dense one-hot pair maps, exactly the torch math)
# ----------------------------------------------------------------------------
def spgat_reference(x, adj, pair1, pair2, params, alpha):
    def layer(xi, W, a1, a2):
        h = xi @ W
        e = h @ a1 + (h @ a2).T
        e = jnp.where(e > 0, e, alpha * e)
        ee = jnp.where(adj != 0, jnp.exp(-e), 0.0)
        hp = (ee @ h) / jnp.sum(ee, axis=1, keepdims=True)
        return jnp.where(hp > 0, hp, jnp.exp(jnp.minimum(hp, 0.0)) - 1.0)

    heads = [layer(x, W, a1, a2) for (W, a1, a2) in params["heads"]]
    xh = jnp.concatenate(heads, axis=1)
    Wo, a1o, a2o = params["out"]
    xo = layer(xh, Wo, a1o, a2o)
    e1 = pair1 @ xo
    e2 = pair2 @ xo
    return jnp.sum((e1 @ params["weight"]) * e2, axis=1)


# ----------------------------------------------------------------------------
if __name__ == "__main__":
    N, NFEAT, NHID, NHEADS, P = 256, 32, 16, 4, 8
    ALPHA = 0.2

    key = jax.random.PRNGKey(0)
    k_x, k_adj, k_p1, k_p2, k_par = jax.random.split(key, 5)

    x = jax.random.normal(k_x, (N, NFEAT), dtype=jnp.float32)
    adj = (jax.random.uniform(k_adj, (N, N)) < 0.05).astype(jnp.float32)
    adj = jnp.clip(adj + jnp.eye(N, dtype=jnp.float32), 0.0, 1.0)       # self-loops
    # pair1_map / pair2_map (sparse row-selection matrices) represented by row indices.
    idx1 = jax.random.randint(k_p1, (P,), 0, N, dtype=jnp.int32)
    idx2 = jax.random.randint(k_p2, (P,), 0, N, dtype=jnp.int32)

    params = init_params(k_par, NFEAT, NHID, NHEADS)

    fwd = jax.jit(lambda x_, adj_, i1_, i2_, p_: spgat_forward(x_, adj_, i1_, i2_, p_,
                                                               alpha=ALPHA))
    scores = fwd(x, adj, idx1, idx2, params)
    scores = jax.block_until_ready(scores)

    pair1 = jax.nn.one_hot(idx1, N, dtype=jnp.float32)
    pair2 = jax.nn.one_hot(idx2, N, dtype=jnp.float32)
    ref = spgat_reference(x, adj, pair1, pair2, params, ALPHA)

    assert scores.shape == (P,)
    assert bool(jnp.all(jnp.isfinite(scores)))
    assert bool(jnp.allclose(scores, ref, rtol=2e-2, atol=2e-2)), (scores, ref)

    print("KERNEL_OK")
</pallas_src>

<mosaic_0001>
module attributes {stable_mosaic.version = 11 : i64} {
  func.func @_gat_fused_kernel(%arg0: i32, %arg1: i32, %arg2: memref<2x128x4xf32, #tpu.memory_space<vmem>>, %arg3: memref<2x4x256xf32, #tpu.memory_space<vmem>>, %arg4: memref<4x256x17xf32, #tpu.memory_space<vmem>>, %arg5: memref<128x256xi8, #tpu.memory_space<vmem>>, %arg6: memref<128x128xf32, #tpu.memory_space<vmem>>, %arg7: memref<4x128x17xf32, #tpu.memory_space<vmem>>) attributes {dimension_semantics = [#tpu.dimension_semantics<parallel>, #tpu.dimension_semantics<arbitrary>], iteration_bounds = array<i64: 2, 1>, scalar_prefetch = 0 : i64, scratch_operands = 1 : i64, tpu.core_type = #tpu.core_type<tc>, window_params = [{transform_indices = @transform_0, window_bounds = array<i64: 2, 128, 4>}, {transform_indices = @transform_1, window_bounds = array<i64: 2, 4, 256>}, {transform_indices = @transform_2, window_bounds = array<i64: 4, 256, 17>}, {transform_indices = @transform_3, window_bounds = array<i64: 128, 256>}, {transform_indices = @transform_4, window_bounds = array<i64: 128, 128>}]} {
    %c0_i32 = arith.constant 0 : i32
    %0 = arith.cmpi eq, %arg1, %c0_i32 : i32
    %1 = arith.extui %0 : i1 to i32
    %c0_i32_0 = arith.constant 0 : i32
    %2 = arith.cmpi ne, %1, %c0_i32_0 : i32
    scf.if %2 {
      %cst_46 = arith.constant 0.000000e+00 : f32
      %110 = vector.broadcast %cst_46 : f32 to vector<4x128x17xf32>
      %c0_47 = arith.constant 0 : index
      %c0_48 = arith.constant 0 : index
      %c0_49 = arith.constant 0 : index
      %111 = vector.load %arg7[%c0_47, %c0_48, %c0_49] : memref<4x128x17xf32, #tpu.memory_space<vmem>>, vector<4x128x17xf32>
      tpu.vector_store %arg7[%c0_47, %c0_48, %c0_49], %110 {strides = array<i32>} : memref<4x128x17xf32, #tpu.memory_space<vmem>>, vector<4x128x17xf32>,
    } else {
    }
    %c0 = arith.constant 0 : index
    %c0_1 = arith.constant 0 : index
    %3 = vector.load %arg5[%c0, %c0_1] : memref<128x256xi8, #tpu.memory_space<vmem>>, vector<128x256xi8>
    %4 = arith.sitofp %3 : vector<128x256xi8> to vector<128x256xf32>
    %c0_2 = arith.constant 0 : index
    %c0_3 = arith.constant 0 : index
    %c0_4 = arith.constant 0 : index
    %5 = vector.load %arg2[%c0_2, %c0_3, %c0_4] : memref<2x128x4xf32, #tpu.memory_space<vmem>>, vector<2x128x4xf32>
    %c0_5 = arith.constant 0 : index
    %c0_6 = arith.constant 0 : index
    %c0_7 = arith.constant 0 : index
    %6 = vector.load %arg3[%c0_5, %c0_6, %c0_7] : memref<2x4x256xf32, #tpu.memory_space<vmem>>, vector<2x4x256xf32>
    %7 = vector.extract_strided_slice %5 {offsets = [0, 0, 0], sizes = [1, 128, 1], strides = [1, 1, 1]} : vector<2x128x4xf32> to vector<1x128x1xf32>
    %8 = vector.shape_cast %7 : vector<1x128x1xf32> to vector<128x1xf32>
    %9 = vector.extract_strided_slice %6 {offsets = [0, 0, 0], sizes = [1, 1, 256], strides = [1, 1, 1]} : vector<2x4x256xf32> to vector<1x1x256xf32>
    %10 = vector.shape_cast %9 : vector<1x1x256xf32> to vector<1x256xf32>
    %11 = vector.broadcast %8 : vector<128x1xf32> to vector<128x256xf32>
    %12 = vector.broadcast %10 : vector<1x256xf32> to vector<128x256xf32>
    %13 = arith.mulf %11, %12 : vector<128x256xf32>
    %14 = vector.extract_strided_slice %5 {offsets = [1, 0, 0], sizes = [1, 128, 1], strides = [1, 1, 1]} : vector<2x128x4xf32> to vector<1x128x1xf32>
    %15 = vector.shape_cast %14 : vector<1x128x1xf32> to vector<128x1xf32>
    %16 = vector.extract_strided_slice %6 {offsets = [1, 0, 0], sizes = [1, 1, 256], strides = [1, 1, 1]} : vector<2x4x256xf32> to vector<1x1x256xf32>
    %17 = vector.shape_cast %16 : vector<1x1x256xf32> to vector<1x256xf32>
    %18 = vector.broadcast %15 : vector<128x1xf32> to vector<128x256xf32>
    %19 = vector.broadcast %17 : vector<1x256xf32> to vector<128x256xf32>
    %20 = arith.mulf %18, %19 : vector<128x256xf32>
    %21 = arith.minimumf %13, %20 : vector<128x256xf32>
    %22 = arith.mulf %21, %4 : vector<128x256xf32>
    %c0_8 = arith.constant 0 : index
    %c0_9 = arith.constant 0 : index
    %c0_10 = arith.constant 0 : index
    %23 = vector.load %arg7[%c0_8, %c0_9, %c0_10] : memref<4x128x17xf32, #tpu.memory_space<vmem>>, vector<1x128x17xf32>
    %24 = vector.shape_cast %23 : vector<1x128x17xf32> to vector<128x17xf32>
    %c0_11 = arith.constant 0 : index
    %c0_12 = arith.constant 0 : index
    %c0_13 = arith.constant 0 : index
    %25 = vector.load %arg4[%c0_11, %c0_12, %c0_13] : memref<4x256x17xf32, #tpu.memory_space<vmem>>, vector<1x256x17xf32>
    %26 = vector.shape_cast %25 : vector<1x256x17xf32> to vector<256x17xf32>
    %cst = arith.constant dense<0.000000e+00> : vector<128x17xf32>
    %27 = tpu.matmul %22, %26, %cst {dimension_numbers = #tpu.dot_dimension_numbers<[1], [0], [0], [1], [0, 0, 1, 1], [], []>} : vector<128x256xf32>, vector<256x17xf32>, vector<128x17xf32> -> vector<128x17xf32>
    %28 = arith.addf %24, %27 : vector<128x17xf32>
    %c0_14 = arith.constant 0 : index
    %c0_15 = arith.constant 0 : index
    %c0_16 = arith.constant 0 : index
    %29 = vector.load %arg7[%c0_14, %c0_15, %c0_16] : memref<4x128x17xf32, #tpu.memory_space<vmem>>, vector<1x128x17xf32>
    %30 = vector.shape_cast %29 : vector<1x128x17xf32> to vector<128x17xf32>
    %31 = vector.shape_cast %28 : vector<128x17xf32> to vector<1x128x17xf32>
    tpu.vector_store %arg7[%c0_14, %c0_15, %c0_16], %31 {strides = array<i32>} : memref<4x128x17xf32, #tpu.memory_space<vmem>>, vector<1x128x17xf32>,
    %32 = vector.extract_strided_slice %5 {offsets = [0, 0, 1], sizes = [1, 128, 1], strides = [1, 1, 1]} : vector<2x128x4xf32> to vector<1x128x1xf32>
    %33 = vector.shape_cast %32 : vector<1x128x1xf32> to vector<128x1xf32>
    %34 = vector.extract_strided_slice %6 {offsets = [0, 1, 0], sizes = [1, 1, 256], strides = [1, 1, 1]} : vector<2x4x256xf32> to vector<1x1x256xf32>
    %35 = vector.shape_cast %34 : vector<1x1x256xf32> to vector<1x256xf32>
    %36 = vector.broadcast %33 : vector<128x1xf32> to vector<128x256xf32>
    %37 = vector.broadcast %35 : vector<1x256xf32> to vector<128x256xf32>
    %38 = arith.mulf %36, %37 : vector<128x256xf32>
    %39 = vector.extract_strided_slice %5 {offsets = [1, 0, 1], sizes = [1, 128, 1], strides = [1, 1, 1]} : vector<2x128x4xf32> to vector<1x128x1xf32>
    %40 = vector.shape_cast %39 : vector<1x128x1xf32> to vector<128x1xf32>
    %41 = vector.extract_strided_slice %6 {offsets = [1, 1, 0], sizes = [1, 1, 256], strides = [1, 1, 1]} : vector<2x4x256xf32> to vector<1x1x256xf32>
    %42 = vector.shape_cast %41 : vector<1x1x256xf32> to vector<1x256xf32>
    %43 = vector.broadcast %40 : vector<128x1xf32> to vector<128x256xf32>
    %44 = vector.broadcast %42 : vector<1x256xf32> to vector<128x256xf32>
    %45 = arith.mulf %43, %44 : vector<128x256xf32>
    %46 = arith.minimumf %38, %45 : vector<128x256xf32>
    %47 = arith.mulf %46, %4 : vector<128x256xf32>
    %c1 = arith.constant 1 : index
    %c0_17 = arith.constant 0 : index
    %c0_18 = arith.constant 0 : index
    %48 = vector.load %arg7[%c1, %c0_17, %c0_18] : memref<4x128x17xf32, #tpu.memory_space<vmem>>, vector<1x128x17xf32>
    %49 = vector.shape_cast %48 : vector<1x128x17xf32> to vector<128x17xf32>
    %c1_19 = arith.constant 1 : index
    %c0_20 = arith.constant 0 : index
    %c0_21 = arith.constant 0 : index
    %50 = vector.load %arg4[%c1_19, %c0_20, %c0_21] : memref<4x256x17xf32, #tpu.memory_space<vmem>>, vector<1x256x17xf32>
    %51 = vector.shape_cast %50 : vector<1x256x17xf32> to vector<256x17xf32>
    %cst_22 = arith.constant dense<0.000000e+00> : vector<128x17xf32>
    %52 = tpu.matmul %47, %51, %cst_22 {dimension_numbers = #tpu.dot_dimension_numbers<[1], [0], [0], [1], [0, 0, 1, 1], [], []>} : vector<128x256xf32>, vector<256x17xf32>, vector<128x17xf32> -> vector<128x17xf32>
    %53 = arith.addf %49, %52 : vector<128x17xf32>
    %c1_23 = arith.constant 1 : index
    %c0_24 = arith.constant 0 : index
    %c0_25 = arith.constant 0 : index
    %54 = vector.load %arg7[%c1_23, %c0_24, %c0_25] : memref<4x128x17xf32, #tpu.memory_space<vmem>>, vector<1x128x17xf32>
    %55 = vector.shape_cast %54 : vector<1x128x17xf32> to vector<128x17xf32>
    %56 = vector.shape_cast %53 : vector<128x17xf32> to vector<1x128x17xf32>
    tpu.vector_store %arg7[%c1_23, %c0_24, %c0_25], %56 {strides = array<i32>} : memref<4x128x17xf32, #tpu.memory_space<vmem>>, vector<1x128x17xf32>,
    %57 = vector.extract_strided_slice %5 {offsets = [0, 0, 2], sizes = [1, 128, 1], strides = [1, 1, 1]} : vector<2x128x4xf32> to vector<1x128x1xf32>
    %58 = vector.shape_cast %57 : vector<1x128x1xf32> to vector<128x1xf32>
    %59 = vector.extract_strided_slice %6 {offsets = [0, 2, 0], sizes = [1, 1, 256], strides = [1, 1, 1]} : vector<2x4x256xf32> to vector<1x1x256xf32>
    %60 = vector.shape_cast %59 : vector<1x1x256xf32> to vector<1x256xf32>
    %61 = vector.broadcast %58 : vector<128x1xf32> to vector<128x256xf32>
    %62 = vector.broadcast %60 : vector<1x256xf32> to vector<128x256xf32>
    %63 = arith.mulf %61, %62 : vector<128x256xf32>
    %64 = vector.extract_strided_slice %5 {offsets = [1, 0, 2], sizes = [1, 128, 1], strides = [1, 1, 1]} : vector<2x128x4xf32> to vector<1x128x1xf32>
    %65 = vector.shape_cast %64 : vector<1x128x1xf32> to vector<128x1xf32>
    %66 = vector.extract_strided_slice %6 {offsets = [1, 2, 0], sizes = [1, 1, 256], strides = [1, 1, 1]} : vector<2x4x256xf32> to vector<1x1x256xf32>
    %67 = vector.shape_cast %66 : vector<1x1x256xf32> to vector<1x256xf32>
    %68 = vector.broadcast %65 : vector<128x1xf32> to vector<128x256xf32>
    %69 = vector.broadcast %67 : vector<1x256xf32> to vector<128x256xf32>
    %70 = arith.mulf %68, %69 : vector<128x256xf32>
    %71 = arith.minimumf %63, %70 : vector<128x256xf32>
    %72 = arith.mulf %71, %4 : vector<128x256xf32>
    %c2 = arith.constant 2 : index
    %c0_26 = arith.constant 0 : index
    %c0_27 = arith.constant 0 : index
    %73 = vector.load %arg7[%c2, %c0_26, %c0_27] : memref<4x128x17xf32, #tpu.memory_space<vmem>>, vector<1x128x17xf32>
    %74 = vector.shape_cast %73 : vector<1x128x17xf32> to vector<128x17xf32>
    %c2_28 = arith.constant 2 : index
    %c0_29 = arith.constant 0 : index
    %c0_30 = arith.constant 0 : index
    %75 = vector.load %arg4[%c2_28, %c0_29, %c0_30] : memref<4x256x17xf32, #tpu.memory_space<vmem>>, vector<1x256x17xf32>
    %76 = vector.shape_cast %75 : vector<1x256x17xf32> to vector<256x17xf32>
    %cst_31 = arith.constant dense<0.000000e+00> : vector<128x17xf32>
    %77 = tpu.matmul %72, %76, %cst_31 {dimension_numbers = #tpu.dot_dimension_numbers<[1], [0], [0], [1], [0, 0, 1, 1], [], []>} : vector<128x256xf32>, vector<256x17xf32>, vector<128x17xf32> -> vector<128x17xf32>
    %78 = arith.addf %74, %77 : vector<128x17xf32>
    %c2_32 = arith.constant 2 : index
    %c0_33 = arith.constant 0 : index
    %c0_34 = arith.constant 0 : index
    %79 = vector.load %arg7[%c2_32, %c0_33, %c0_34] : memref<4x128x17xf32, #tpu.memory_space<vmem>>, vector<1x128x17xf32>
    %80 = vector.shape_cast %79 : vector<1x128x17xf32> to vector<128x17xf32>
    %81 = vector.shape_cast %78 : vector<128x17xf32> to vector<1x128x17xf32>
    tpu.vector_store %arg7[%c2_32, %c0_33, %c0_34], %81 {strides = array<i32>} : memref<4x128x17xf32, #tpu.memory_space<vmem>>, vector<1x128x17xf32>,
    %82 = vector.extract_strided_slice %5 {offsets = [0, 0, 3], sizes = [1, 128, 1], strides = [1, 1, 1]} : vector<2x128x4xf32> to vector<1x128x1xf32>
    %83 = vector.shape_cast %82 : vector<1x128x1xf32> to vector<128x1xf32>
    %84 = vector.extract_strided_slice %6 {offsets = [0, 3, 0], sizes = [1, 1, 256], strides = [1, 1, 1]} : vector<2x4x256xf32> to vector<1x1x256xf32>
    %85 = vector.shape_cast %84 : vector<1x1x256xf32> to vector<1x256xf32>
    %86 = vector.broadcast %83 : vector<128x1xf32> to vector<128x256xf32>
    %87 = vector.broadcast %85 : vector<1x256xf32> to vector<128x256xf32>
    %88 = arith.mulf %86, %87 : vector<128x256xf32>
    %89 = vector.extract_strided_slice %5 {offsets = [1, 0, 3], sizes = [1, 128, 1], strides = [1, 1, 1]} : vector<2x128x4xf32> to vector<1x128x1xf32>
    %90 = vector.shape_cast %89 : vector<1x128x1xf32> to vector<128x1xf32>
    %91 = vector.extract_strided_slice %6 {offsets = [1, 3, 0], sizes = [1, 1, 256], strides = [1, 1, 1]} : vector<2x4x256xf32> to vector<1x1x256xf32>
    %92 = vector.shape_cast %91 : vector<1x1x256xf32> to vector<1x256xf32>
    %93 = vector.broadcast %90 : vector<128x1xf32> to vector<128x256xf32>
    %94 = vector.broadcast %92 : vector<1x256xf32> to vector<128x256xf32>
    %95 = arith.mulf %93, %94 : vector<128x256xf32>
    %96 = arith.minimumf %88, %95 : vector<128x256xf32>
    %97 = arith.mulf %96, %4 : vector<128x256xf32>
    %c3 = arith.constant 3 : index
    %c0_35 = arith.constant 0 : index
    %c0_36 = arith.constant 0 : index
    %98 = vector.load %arg7[%c3, %c0_35, %c0_36] : memref<4x128x17xf32, #tpu.memory_space<vmem>>, vector<1x128x17xf32>
    %99 = vector.shape_cast %98 : vector<1x128x17xf32> to vector<128x17xf32>
    %c3_37 = arith.constant 3 : index
    %c0_38 = arith.constant 0 : index
    %c0_39 = arith.constant 0 : index
    %100 = vector.load %arg4[%c3_37, %c0_38, %c0_39] : memref<4x256x17xf32, #tpu.memory_space<vmem>>, vector<1x256x17xf32>
    %101 = vector.shape_cast %100 : vector<1x256x17xf32> to vector<256x17xf32>
    %cst_40 = arith.constant dense<0.000000e+00> : vector<128x17xf32>
    %102 = tpu.matmul %97, %101, %cst_40 {dimension_numbers = #tpu.dot_dimension_numbers<[1], [0], [0], [1], [0, 0, 1, 1], [], []>} : vector<128x256xf32>, vector<256x17xf32>, vector<128x17xf32> -> vector<128x17xf32>
    %103 = arith.addf %99, %102 : vector<128x17xf32>
    %c3_41 = arith.constant 3 : index
    %c0_42 = arith.constant 0 : index
    %c0_43 = arith.constant 0 : index
    %104 = vector.load %arg7[%c3_41, %c0_42, %c0_43] : memref<4x128x17xf32, #tpu.memory_space<vmem>>, vector<1x128x17xf32>
    %105 = vector.shape_cast %104 : vector<1x128x17xf32> to vector<128x17xf32>
    %106 = vector.shape_cast %103 : vector<128x17xf32> to vector<1x128x17xf32>
    tpu.vector_store %arg7[%c3_41, %c0_42, %c0_43], %106 {strides = array<i32>} : memref<4x128x17xf32, #tpu.memory_space<vmem>>, vector<1x128x17xf32>,
    %c0_i32_44 = arith.constant 0 : i32
    %107 = arith.cmpi eq, %arg1, %c0_i32_44 : i32
    %108 = arith.extui %107 : i1 to i32
    %c0_i32_45 = arith.constant 0 : i32
    %109 = arith.cmpi ne, %108, %c0_i32_45 : i32
    scf.if %109 {
      %c0_46 = arith.constant 0 : index
      %c0_47 = arith.constant 0 : index
      %c0_48 = arith.constant 0 : index
      %110 = vector.load %arg7[%c0_46, %c0_47, %c0_48] : memref<4x128x17xf32, #tpu.memory_space<vmem>>, vector<1x128x17xf32>
      %111 = vector.shape_cast %110 : vector<1x128x17xf32> to vector<128x17xf32>
      %112 = vector.extract_strided_slice %111 {offsets = [0, 0], sizes = [128, 16], strides = [1, 1]} : vector<128x17xf32> to vector<128x16xf32>
      %113 = vector.extract_strided_slice %111 {offsets = [0, 16], sizes = [128, 1], strides = [1, 1]} : vector<128x17xf32> to vector<128x1xf32>
      %cst_49 = arith.constant 1.000000e-30 : f32
      %114 = vector.broadcast %cst_49 : f32 to vector<128x1xf32>
      %115 = arith.maximumf %113, %114 : vector<128x1xf32>
      %116 = vector.broadcast %115 : vector<128x1xf32> to vector<128x16xf32>
      %117 = arith.divf %112, %116 : vector<128x16xf32>
      %cst_50 = arith.constant 0.000000e+00 : f32
      %118 = vector.broadcast %cst_50 : f32 to vector<128x16xf32>
      %119 = arith.cmpf ogt, %117, %118 : vector<128x16xf32>
      %cst_51 = arith.constant 0.000000e+00 : f32
      %120 = vector.broadcast %cst_51 : f32 to vector<128x16xf32>
      %121 = arith.minimumf %117, %120 : vector<128x16xf32>
      %122 = math.exp %121 : vector<128x16xf32>
      %cst_52 = arith.constant 1.000000e+00 : f32
      %123 = vector.broadcast %cst_52 : f32 to vector<128x16xf32>
      %124 = arith.subf %122, %123 : vector<128x16xf32>
      %125 = arith.select %119, %117, %124 : vector<128x16xi1>, vector<128x16xf32>
      %c1_53 = arith.constant 1 : index
      %c0_54 = arith.constant 0 : index
      %c0_55 = arith.constant 0 : index
      %126 = vector.load %arg7[%c1_53, %c0_54, %c0_55] : memref<4x128x17xf32, #tpu.memory_space<vmem>>, vector<1x128x17xf32>
      %127 = vector.shape_cast %126 : vector<1x128x17xf32> to vector<128x17xf32>
      %128 = vector.extract_strided_slice %127 {offsets = [0, 0], sizes = [128, 16], strides = [1, 1]} : vector<128x17xf32> to vector<128x16xf32>
      %129 = vector.extract_strided_slice %127 {offsets = [0, 16], sizes = [128, 1], strides = [1, 1]} : vector<128x17xf32> to vector<128x1xf32>
      %cst_56 = arith.constant 1.000000e-30 : f32
      %130 = vector.broadcast %cst_56 : f32 to vector<128x1xf32>
      %131 = arith.maximumf %129, %130 : vector<128x1xf32>
      %132 = vector.broadcast %131 : vector<128x1xf32> to vector<128x16xf32>
      %133 = arith.divf %128, %132 : vector<128x16xf32>
      %cst_57 = arith.constant 0.000000e+00 : f32
      %134 = vector.broadcast %cst_57 : f32 to vector<128x16xf32>
      %135 = arith.cmpf ogt, %133, %134 : vector<128x16xf32>
      %cst_58 = arith.constant 0.000000e+00 : f32
      %136 = vector.broadcast %cst_58 : f32 to vector<128x16xf32>
      %137 = arith.minimumf %133, %136 : vector<128x16xf32>
      %138 = math.exp %137 : vector<128x16xf32>
      %cst_59 = arith.constant 1.000000e+00 : f32
      %139 = vector.broadcast %cst_59 : f32 to vector<128x16xf32>
      %140 = arith.subf %138, %139 : vector<128x16xf32>
      %141 = arith.select %135, %133, %140 : vector<128x16xi1>, vector<128x16xf32>
      %c2_60 = arith.constant 2 : index
      %c0_61 = arith.constant 0 : index
      %c0_62 = arith.constant 0 : index
      %142 = vector.load %arg7[%c2_60, %c0_61, %c0_62] : memref<4x128x17xf32, #tpu.memory_space<vmem>>, vector<1x128x17xf32>
      %143 = vector.shape_cast %142 : vector<1x128x17xf32> to vector<128x17xf32>
      %144 = vector.extract_strided_slice %143 {offsets = [0, 0], sizes = [128, 16], strides = [1, 1]} : vector<128x17xf32> to vector<128x16xf32>
      %145 = vector.extract_strided_slice %143 {offsets = [0, 16], sizes = [128, 1], strides = [1, 1]} : vector<128x17xf32> to vector<128x1xf32>
      %cst_63 = arith.constant 1.000000e-30 : f32
      %146 = vector.broadcast %cst_63 : f32 to vector<128x1xf32>
      %147 = arith.maximumf %145, %146 : vector<128x1xf32>
      %148 = vector.broadcast %147 : vector<128x1xf32> to vector<128x16xf32>
      %149 = arith.divf %144, %148 : vector<128x16xf32>
      %cst_64 = arith.constant 0.000000e+00 : f32
      %150 = vector.broadcast %cst_64 : f32 to vector<128x16xf32>
      %151 = arith.cmpf ogt, %149, %150 : vector<128x16xf32>
      %cst_65 = arith.constant 0.000000e+00 : f32
      %152 = vector.broadcast %cst_65 : f32 to vector<128x16xf32>
      %153 = arith.minimumf %149, %152 : vector<128x16xf32>
      %154 = math.exp %153 : vector<128x16xf32>
      %cst_66 = arith.constant 1.000000e+00 : f32
      %155 = vector.broadcast %cst_66 : f32 to vector<128x16xf32>
      %156 = arith.subf %154, %155 : vector<128x16xf32>
      %157 = arith.select %151, %149, %156 : vector<128x16xi1>, vector<128x16xf32>
      %c3_67 = arith.constant 3 : index
      %c0_68 = arith.constant 0 : index
      %c0_69 = arith.constant 0 : index
      %158 = vector.load %arg7[%c3_67, %c0_68, %c0_69] : memref<4x128x17xf32, #tpu.memory_space<vmem>>, vector<1x128x17xf32>
      %159 = vector.shape_cast %158 : vector<1x128x17xf32> to vector<128x17xf32>
      %160 = vector.extract_strided_slice %159 {offsets = [0, 0], sizes = [128, 16], strides = [1, 1]} : vector<128x17xf32> to vector<128x16xf32>
      %161 = vector.extract_strided_slice %159 {offsets = [0, 16], sizes = [128, 1], strides = [1, 1]} : vector<128x17xf32> to vector<128x1xf32>
      %cst_70 = arith.constant 1.000000e-30 : f32
      %162 = vector.broadcast %cst_70 : f32 to vector<128x1xf32>
      %163 = arith.maximumf %161, %162 : vector<128x1xf32>
      %164 = vector.broadcast %163 : vector<128x1xf32> to vector<128x16xf32>
      %165 = arith.divf %160, %164 : vector<128x16xf32>
      %cst_71 = arith.constant 0.000000e+00 : f32
      %166 = vector.broadcast %cst_71 : f32 to vector<128x16xf32>
      %167 = arith.cmpf ogt, %165, %166 : vector<128x16xf32>
      %cst_72 = arith.constant 0.000000e+00 : f32
      %168 = vector.broadcast %cst_72 : f32 to vector<128x16xf32>
      %169 = arith.minimumf %165, %168 : vector<128x16xf32>
      %170 = math.exp %169 : vector<128x16xf32>
      %cst_73 = arith.constant 1.000000e+00 : f32
      %171 = vector.broadcast %cst_73 : f32 to vector<128x16xf32>
      %172 = arith.subf %170, %171 : vector<128x16xf32>
      %173 = arith.select %167, %165, %172 : vector<128x16xi1>, vector<128x16xf32>
      %174 = tpu.concatenate %125, %141, %157, %173 in 1 : vector<128x16xf32>, vector<128x16xf32>, vector<128x16xf32>, vector<128x16xf32> -> vector<128x64xf32>
      %cst_74 = arith.constant 0.000000e+00 : f32
      %175 = vector.broadcast %cst_74 : f32 to vector<128x64xf32>
      %176 = tpu.concatenate %174, %175 in 1 : vector<128x64xf32>, vector<128x64xf32> -> vector<128x128xf32>
      %c0_75 = arith.constant 0 : index
      %c0_76 = arith.constant 0 : index
      %177 = vector.load %arg6[%c0_75, %c0_76] : memref<128x128xf32, #tpu.memory_space<vmem>>, vector<128x128xf32>
      tpu.vector_store %arg6[%c0_75, %c0_76], %176 {strides = array<i32>} : memref<128x128xf32, #tpu.memory_space<vmem>>, vector<128x128xf32>,
    } else {
    }
    return
  }
  func.func @transform_0(%arg0: i32, %arg1: i32) -> (i32, i32, i32) {
    %c0_i32 = arith.constant 0 : i32
    %c0_i32_0 = arith.constant 0 : i32
    %c0_i32_1 = arith.constant 0 : i32
    return %c0_i32, %arg0, %c0_i32_0 : i32, i32, i32
  }
  func.func @transform_1(%arg0: i32, %arg1: i32) -> (i32, i32, i32) {
    %c0_i32 = arith.constant 0 : i32
    %c0_i32_0 = arith.constant 0 : i32
    %c0_i32_1 = arith.constant 0 : i32
    return %c0_i32, %c0_i32_0, %arg1 : i32, i32, i32
  }
  func.func @transform_2(%arg0: i32, %arg1: i32) -> (i32, i32, i32) {
    %c0_i32 = arith.constant 0 : i32
    %c0_i32_0 = arith.constant 0 : i32
    %c0_i32_1 = arith.constant 0 : i32
    return %c0_i32, %arg1, %c0_i32_0 : i32, i32, i32
  }
  func.func @transform_3(%arg0: i32, %arg1: i32) -> (i32, i32) {
    %c0_i32 = arith.constant 0 : i32
    return %arg0, %arg1 : i32, i32
  }
  func.func @transform_4(%arg0: i32, %arg1: i32) -> (i32, i32) {
    %c0_i32 = arith.constant 0 : i32
    %c0_i32_0 = arith.constant 0 : i32
    return %arg0, %c0_i32 : i32, i32
  }
}

module attributes {stable_mosaic.version = 11 : i64} {
  func.func @_gat_fused_kernel(%arg0: i32, %arg1: i32, %arg2: memref<2x128x1xf32, #tpu.memory_space<vmem>>, %arg3: memref<2x1x256xf32, #tpu.memory_space<vmem>>, %arg4: memref<1x256x17xf32, #tpu.memory_space<vmem>>, %arg5: memref<128x256xi8, #tpu.memory_space<vmem>>, %arg6: memref<128x128xf32, #tpu.memory_space<vmem>>, %arg7: memref<1x128x17xf32, #tpu.memory_space<vmem>>) attributes {dimension_semantics = [#tpu.dimension_semantics<parallel>, #tpu.dimension_semantics<arbitrary>], iteration_bounds = array<i64: 2, 1>, scalar_prefetch = 0 : i64, scratch_operands = 1 : i64, tpu.core_type = #tpu.core_type<tc>, window_params = [{transform_indices = @transform_0, window_bounds = array<i64: 2, 128, 1>}, {transform_indices = @transform_1, window_bounds = array<i64: 2, 1, 256>}, {transform_indices = @transform_2, window_bounds = array<i64: 1, 256, 17>}, {transform_indices = @transform_3, window_bounds = array<i64: 128, 256>}, {transform_indices = @transform_4, window_bounds = array<i64: 128, 128>}]} {
    %c0_i32 = arith.constant 0 : i32
    %0 = arith.cmpi eq, %arg1, %c0_i32 : i32
    %1 = arith.extui %0 : i1 to i32
    %c0_i32_0 = arith.constant 0 : i32
    %2 = arith.cmpi ne, %1, %c0_i32_0 : i32
    scf.if %2 {
      %cst_19 = arith.constant 0.000000e+00 : f32
      %35 = vector.broadcast %cst_19 : f32 to vector<1x128x17xf32>
      %c0_20 = arith.constant 0 : index
      %c0_21 = arith.constant 0 : index
      %c0_22 = arith.constant 0 : index
      %36 = vector.load %arg7[%c0_20, %c0_21, %c0_22] : memref<1x128x17xf32, #tpu.memory_space<vmem>>, vector<1x128x17xf32>
      tpu.vector_store %arg7[%c0_20, %c0_21, %c0_22], %35 {strides = array<i32>} : memref<1x128x17xf32, #tpu.memory_space<vmem>>, vector<1x128x17xf32>,
    } else {
    }
    %c0 = arith.constant 0 : index
    %c0_1 = arith.constant 0 : index
    %3 = vector.load %arg5[%c0, %c0_1] : memref<128x256xi8, #tpu.memory_space<vmem>>, vector<128x256xi8>
    %4 = arith.sitofp %3 : vector<128x256xi8> to vector<128x256xf32>
    %c0_2 = arith.constant 0 : index
    %c0_3 = arith.constant 0 : index
    %c0_4 = arith.constant 0 : index
    %5 = vector.load %arg2[%c0_2, %c0_3, %c0_4] : memref<2x128x1xf32, #tpu.memory_space<vmem>>, vector<2x128x1xf32>
    %c0_5 = arith.constant 0 : index
    %c0_6 = arith.constant 0 : index
    %c0_7 = arith.constant 0 : index
    %6 = vector.load %arg3[%c0_5, %c0_6, %c0_7] : memref<2x1x256xf32, #tpu.memory_space<vmem>>, vector<2x1x256xf32>
    %7 = vector.extract_strided_slice %5 {offsets = [0, 0, 0], sizes = [1, 128, 1], strides = [1, 1, 1]} : vector<2x128x1xf32> to vector<1x128x1xf32>
    %8 = vector.shape_cast %7 : vector<1x128x1xf32> to vector<128x1xf32>
    %9 = vector.extract_strided_slice %6 {offsets = [0, 0, 0], sizes = [1, 1, 256], strides = [1, 1, 1]} : vector<2x1x256xf32> to vector<1x1x256xf32>
    %10 = vector.shape_cast %9 : vector<1x1x256xf32> to vector<1x256xf32>
    %11 = vector.broadcast %8 : vector<128x1xf32> to vector<128x256xf32>
    %12 = vector.broadcast %10 : vector<1x256xf32> to vector<128x256xf32>
    %13 = arith.mulf %11, %12 : vector<128x256xf32>
    %14 = vector.extract_strided_slice %5 {offsets = [1, 0, 0], sizes = [1, 128, 1], strides = [1, 1, 1]} : vector<2x128x1xf32> to vector<1x128x1xf32>
    %15 = vector.shape_cast %14 : vector<1x128x1xf32> to vector<128x1xf32>
    %16 = vector.extract_strided_slice %6 {offsets = [1, 0, 0], sizes = [1, 1, 256], strides = [1, 1, 1]} : vector<2x1x256xf32> to vector<1x1x256xf32>
    %17 = vector.shape_cast %16 : vector<1x1x256xf32> to vector<1x256xf32>
    %18 = vector.broadcast %15 : vector<128x1xf32> to vector<128x256xf32>
    %19 = vector.broadcast %17 : vector<1x256xf32> to vector<128x256xf32>
    %20 = arith.mulf %18, %19 : vector<128x256xf32>
    %21 = arith.minimumf %13, %20 : vector<128x256xf32>
    %22 = arith.mulf %21, %4 : vector<128x256xf32>
    %c0_8 = arith.constant 0 : index
    %c0_9 = arith.constant 0 : index
    %c0_10 = arith.constant 0 : index
    %23 = vector.load %arg7[%c0_8, %c0_9, %c0_10] : memref<1x128x17xf32, #tpu.memory_space<vmem>>, vector<1x128x17xf32>
    %24 = vector.shape_cast %23 : vector<1x128x17xf32> to vector<128x17xf32>
    %c0_11 = arith.constant 0 : index
    %c0_12 = arith.constant 0 : index
    %c0_13 = arith.constant 0 : index
    %25 = vector.load %arg4[%c0_11, %c0_12, %c0_13] : memref<1x256x17xf32, #tpu.memory_space<vmem>>, vector<1x256x17xf32>
    %26 = vector.shape_cast %25 : vector<1x256x17xf32> to vector<256x17xf32>
    %cst = arith.constant dense<0.000000e+00> : vector<128x17xf32>
    %27 = tpu.matmul %22, %26, %cst {dimension_numbers = #tpu.dot_dimension_numbers<[1], [0], [0], [1], [0, 0, 1, 1], [], []>} : vector<128x256xf32>, vector<256x17xf32>, vector<128x17xf32> -> vector<128x17xf32>
    %28 = arith.addf %24, %27 : vector<128x17xf32>
    %c0_14 = arith.constant 0 : index
    %c0_15 = arith.constant 0 : index
    %c0_16 = arith.constant 0 : index
    %29 = vector.load %arg7[%c0_14, %c0_15, %c0_16] : memref<1x128x17xf32, #tpu.memory_space<vmem>>, vector<1x128x17xf32>
    %30 = vector.shape_cast %29 : vector<1x128x17xf32> to vector<128x17xf32>
    %31 = vector.shape_cast %28 : vector<128x17xf32> to vector<1x128x17xf32>
    tpu.vector_store %arg7[%c0_14, %c0_15, %c0_16], %31 {strides = array<i32>} : memref<1x128x17xf32, #tpu.memory_space<vmem>>, vector<1x128x17xf32>,
    %c0_i32_17 = arith.constant 0 : i32
    %32 = arith.cmpi eq, %arg1, %c0_i32_17 : i32
    %33 = arith.extui %32 : i1 to i32
    %c0_i32_18 = arith.constant 0 : i32
    %34 = arith.cmpi ne, %33, %c0_i32_18 : i32
    scf.if %34 {
      %c0_19 = arith.constant 0 : index
      %c0_20 = arith.constant 0 : index
      %c0_21 = arith.constant 0 : index
      %35 = vector.load %arg7[%c0_19, %c0_20, %c0_21] : memref<1x128x17xf32, #tpu.memory_space<vmem>>, vector<1x128x17xf32>
      %36 = vector.shape_cast %35 : vector<1x128x17xf32> to vector<128x17xf32>
      %37 = vector.extract_strided_slice %36 {offsets = [0, 0], sizes = [128, 16], strides = [1, 1]} : vector<128x17xf32> to vector<128x16xf32>
      %38 = vector.extract_strided_slice %36 {offsets = [0, 16], sizes = [128, 1], strides = [1, 1]} : vector<128x17xf32> to vector<128x1xf32>
      %cst_22 = arith.constant 1.000000e-30 : f32
      %39 = vector.broadcast %cst_22 : f32 to vector<128x1xf32>
      %40 = arith.maximumf %38, %39 : vector<128x1xf32>
      %41 = vector.broadcast %40 : vector<128x1xf32> to vector<128x16xf32>
      %42 = arith.divf %37, %41 : vector<128x16xf32>
      %cst_23 = arith.constant 0.000000e+00 : f32
      %43 = vector.broadcast %cst_23 : f32 to vector<128x16xf32>
      %44 = arith.cmpf ogt, %42, %43 : vector<128x16xf32>
      %cst_24 = arith.constant 0.000000e+00 : f32
      %45 = vector.broadcast %cst_24 : f32 to vector<128x16xf32>
      %46 = arith.minimumf %42, %45 : vector<128x16xf32>
      %47 = math.exp %46 : vector<128x16xf32>
      %cst_25 = arith.constant 1.000000e+00 : f32
      %48 = vector.broadcast %cst_25 : f32 to vector<128x16xf32>
      %49 = arith.subf %47, %48 : vector<128x16xf32>
      %50 = arith.select %44, %42, %49 : vector<128x16xi1>, vector<128x16xf32>
      %cst_26 = arith.constant 0.000000e+00 : f32
      %51 = vector.broadcast %cst_26 : f32 to vector<128x112xf32>
      %52 = tpu.concatenate %50, %51 in 1 : vector<128x16xf32>, vector<128x112xf32> -> vector<128x128xf32>
      %c0_27 = arith.constant 0 : index
      %c0_28 = arith.constant 0 : index
      %53 = vector.load %arg6[%c0_27, %c0_28] : memref<128x128xf32, #tpu.memory_space<vmem>>, vector<128x128xf32>
      tpu.vector_store %arg6[%c0_27, %c0_28], %52 {strides = array<i32>} : memref<128x128xf32, #tpu.memory_space<vmem>>, vector<128x128xf32>,
    } else {
    }
    return
  }
  func.func @transform_0(%arg0: i32, %arg1: i32) -> (i32, i32, i32) {
    %c0_i32 = arith.constant 0 : i32
    %c0_i32_0 = arith.constant 0 : i32
    %c0_i32_1 = arith.constant 0 : i32
    return %c0_i32, %arg0, %c0_i32_0 : i32, i32, i32
  }
  func.func @transform_1(%arg0: i32, %arg1: i32) -> (i32, i32, i32) {
    %c0_i32 = arith.constant 0 : i32
    %c0_i32_0 = arith.constant 0 : i32
    %c0_i32_1 = arith.constant 0 : i32
    return %c0_i32, %c0_i32_0, %arg1 : i32, i32, i32
  }
  func.func @transform_2(%arg0: i32, %arg1: i32) -> (i32, i32, i32) {
    %c0_i32 = arith.constant 0 : i32
    %c0_i32_0 = arith.constant 0 : i32
    %c0_i32_1 = arith.constant 0 : i32
    return %c0_i32, %arg1, %c0_i32_0 : i32, i32, i32
  }
  func.func @transform_3(%arg0: i32, %arg1: i32) -> (i32, i32) {
    %c0_i32 = arith.constant 0 : i32
    return %arg0, %arg1 : i32, i32
  }
  func.func @transform_4(%arg0: i32, %arg1: i32) -> (i32, i32) {
    %c0_i32 = arith.constant 0 : i32
    %c0_i32_0 = arith.constant 0 : i32
    return %arg0, %c0_i32 : i32, i32
  }
}

module attributes {stable_mosaic.version = 11 : i64} {
  func.func @_score_kernel(%arg0: i32, %arg1: memref<8x16xf32, #tpu.memory_space<vmem>>, %arg2: memref<8x16xf32, #tpu.memory_space<vmem>>, %arg3: memref<16x16xf32, #tpu.memory_space<vmem>>, %arg4: memref<8x128xf32, #tpu.memory_space<vmem>>) attributes {dimension_semantics = [#tpu.dimension_semantics<arbitrary>], iteration_bounds = array<i64: 1>, scalar_prefetch = 0 : i64, scratch_operands = 0 : i64, tpu.core_type = #tpu.core_type<tc>, window_params = [{pipeline_mode = #tpu.pipeline_mode<synchronous>, transform_indices = @transform_0, window_bounds = array<i64: 8, 16>}, {pipeline_mode = #tpu.pipeline_mode<synchronous>, transform_indices = @transform_1, window_bounds = array<i64: 8, 16>}, {pipeline_mode = #tpu.pipeline_mode<synchronous>, transform_indices = @transform_2, window_bounds = array<i64: 16, 16>}, {pipeline_mode = #tpu.pipeline_mode<synchronous>, transform_indices = @transform_3, window_bounds = array<i64: 8, 128>}]} {
    %c0 = arith.constant 0 : index
    %c0_0 = arith.constant 0 : index
    %0 = vector.load %arg1[%c0, %c0_0] : memref<8x16xf32, #tpu.memory_space<vmem>>, vector<8x16xf32>
    %c0_1 = arith.constant 0 : index
    %c0_2 = arith.constant 0 : index
    %1 = vector.load %arg3[%c0_1, %c0_2] : memref<16x16xf32, #tpu.memory_space<vmem>>, vector<16x16xf32>
    %cst = arith.constant dense<0.000000e+00> : vector<8x16xf32>
    %2 = tpu.matmul %0, %1, %cst {dimension_numbers = #tpu.dot_dimension_numbers<[1], [0], [0], [1], [0, 0, 1, 1], [], []>} : vector<8x16xf32>, vector<16x16xf32>, vector<8x16xf32> -> vector<8x16xf32>
    %c0_3 = arith.constant 0 : index
    %c0_4 = arith.constant 0 : index
    %3 = vector.load %arg2[%c0_3, %c0_4] : memref<8x16xf32, #tpu.memory_space<vmem>>, vector<8x16xf32>
    %4 = arith.mulf %2, %3 : vector<8x16xf32>
    %cst_5 = arith.constant 1.000000e+00 : f32
    %5 = vector.broadcast %cst_5 : f32 to vector<16x128xf32>
    %cst_6 = arith.constant dense<0.000000e+00> : vector<8x128xf32>
    %6 = tpu.matmul %4, %5, %cst_6 {dimension_numbers = #tpu.dot_dimension_numbers<[1], [0], [0], [1], [0, 0, 1, 1], [], []>} : vector<8x16xf32>, vector<16x128xf32>, vector<8x128xf32> -> vector<8x128xf32>
    %c0_7 = arith.constant 0 : index
    %c0_8 = arith.constant 0 : index
    %7 = vector.load %arg4[%c0_7, %c0_8] : memref<8x128xf32, #tpu.memory_space<vmem>>, vector<8x128xf32>
    tpu.vector_store %arg4[%c0_7, %c0_8], %6 {strides = array<i32>} : memref<8x128xf32, #tpu.memory_space<vmem>>, vector<8x128xf32>,
    return
  }
  func.func @transform_0(%arg0: i32) -> (i32, i32) {
    %c0_i32 = arith.constant 0 : i32
    %c0_i32_0 = arith.constant 0 : i32
    %c0_i32_1 = arith.constant 0 : i32
    return %c0_i32, %c0_i32_0 : i32, i32
  }
  func.func @transform_1(%arg0: i32) -> (i32, i32) {
    %c0_i32 = arith.constant 0 : i32
    %c0_i32_0 = arith.constant 0 : i32
    %c0_i32_1 = arith.constant 0 : i32
    return %c0_i32, %c0_i32_0 : i32, i32
  }
  func.func @transform_2(%arg0: i32) -> (i32, i32) {
    %c0_i32 = arith.constant 0 : i32
    %c0_i32_0 = arith.constant 0 : i32
    %c0_i32_1 = arith.constant 0 : i32
    return %c0_i32, %c0_i32_0 : i32, i32
  }
  func.func @transform_3(%arg0: i32) -> (i32, i32) {
    %c0_i32 = arith.constant 0 : i32
    %c0_i32_0 = arith.constant 0 : i32
    %c0_i32_1 = arith.constant 0 : i32
    return %c0_i32, %c0_i32_0 : i32, i32
  }
}

</mosaic_0001>

<llo_original>
// kernel: _lambda_.5
$region0: #{_lambda_.5}
  #allocation0 [shape = 'u32[]', space=smem, size = 0x4, offset = 0x4, fixed_abs, tag = 'smem constant byte address 0x4 - core index']
  #allocation1 [shape = 'u32[144,128]{1,0:T(1,128)}', space=vmem, size = 0x12000, scoped, tag = 'internal scratch']
  %s0 = inlined_call_operand.vmem [shape: f32[8,16], index: 0, kind: input, shape index: {}]
  %s1 = inlined_call_operand.vmem [shape: f32[8,16], index: 1, kind: input, shape index: {}]
  %s2 = inlined_call_operand.vmem [shape: f32[16,16], index: 2, kind: input, shape index: {}]
  %s3 = inlined_call_operand.vmem [shape: f32[8,128], index: 3, kind: output, shape index: {}]
  %s4 = sld [smem:[#allocation0]]
  $region22: #{_lambda_.5} parent=0
    _
  %s6 = ssub.s32 1, %s4
  %s7 = scalar_select 0, %s6, %s4
  // Predicated region
  $region2: #{_lambda_.5} parent=0 // pred_check
    _
  $region3: #{_lambda_.5} parent=0 // pred_check_branch
    %9 = sbr.rel (0) target = $region5
  $region4: #{_lambda_.5} parent=0 // pred_region
    _
  $region5: #{_lambda_.5} parent=0 // pred_fallthru
    _
  // Predicated region
  $region6: #{_lambda_.5} parent=0 // pred_check
    _
  $region7: #{_lambda_.5} parent=0 // pred_check_branch
    %11 = sbr.rel (0) target = $region9
  $region8: #{_lambda_.5} parent=0 // pred_region
    _
  $region9: #{_lambda_.5} parent=0 // pred_fallthru
    _
  // Predicated region
  $region10: #{_lambda_.5} parent=0 // pred_check
    _
  $region11: #{_lambda_.5} parent=0 // pred_check_branch
    %13 = sbr.rel (0) target = $region13
  $region12: #{_lambda_.5} parent=0 // pred_region
    _
  $region13: #{_lambda_.5} parent=0 // pred_fallthru
    _
  %v14 = vld [vmem:[%s0] sm:$0xff]
  %v15 = vld [vmem:[%s2] sm:$0xff]
  %v16 = vld [vmem:[%s2 + $0x8] sm:$0xff]
  %vm17 = vcmask 130048
  %v19 = vsel %vm17, %v14, 0
  %21 = vmatprep.subr.mxu0 0.0
  %22 = vmatpush1.msra.mxu0 %v15
  %23 = vmatprep.subr.mxu0 0.0
  %24 = vmatpush1.msra.mxu0 %v16
  %25 = vmatprep.subr.mxu0 0.0
  %26 = vmatpush1.msra.mxu0 0.0
  %27 = vmatprep.subr.mxu0 0.0
  %28 = vmatpush1.msra.mxu0 0.0
  %29 = vmatprep.subr.mxu0 0.0
  %30 = vmatpush1.msra.mxu0 0.0
  %31 = vmatprep.subr.mxu0 0.0
  %32 = vmatpush1.msra.mxu0 0.0
  %33 = vmatprep.subr.mxu0 0.0
  %34 = vmatpush1.msra.mxu0 0.0
  %35 = vmatprep.subr.mxu0 0.0
  %36 = vmatpush1.msra.mxu0 0.0
  %37 = vmatprep.subr.mxu0 0.0
  %38 = vmatpush1.msra.mxu0 0.0
  %39 = vmatprep.subr.mxu0 0.0
  %40 = vmatpush1.msra.mxu0 0.0
  %41 = vmatprep.subr.mxu0 0.0
  %42 = vmatpush1.msra.mxu0 0.0
  %43 = vmatprep.subr.mxu0 0.0
  %44 = vmatpush1.msra.mxu0 0.0
  %45 = vmatprep.subr.mxu0 0.0
  %46 = vmatpush1.msra.mxu0 0.0
  %47 = vmatprep.subr.mxu0 0.0
  %48 = vmatpush1.msra.mxu0 0.0
  %49 = vmatprep.subr.mxu0 0.0
  %50 = vmatpush1.msra.mxu0 0.0
  %51 = vmatprep.subr.mxu0 0.0
  %52 = vmatpush1.msra.mxu0 0.0
  %53 = vmatprep.subr.mxu0 0.0
  %54 = vmatpush1.msra.mxu0 0.0
  %55 = vmatprep.subr.mxu0 0.0
  %56 = vmatpush1.msra.mxu0 0.0
  %57 = vmatprep.subr.mxu0 0.0
  %58 = vmatpush1.msra.mxu0 0.0
  %59 = vmatprep.subr.mxu0 0.0
  %60 = vmatpush1.msra.mxu0 0.0
  %61 = vmatprep.subr.mxu0 0.0
  %62 = vmatpush1.msra.mxu0 0.0
  %63 = vmatprep.subr.mxu0 0.0
  %64 = vmatpush1.msra.mxu0 0.0
  %65 = vmatprep.subr.mxu0 0.0
  %66 = vmatpush1.msra.mxu0 0.0
  %67 = vmatprep.subr.mxu0 0.0
  %68 = vmatpush1.msra.mxu0 0.0
  %69 = vmatprep.subr.mxu0 0.0
  %70 = vmatpush1.msra.mxu0 0.0
  %71 = vmatprep.subr.mxu0 0.0
  %72 = vmatpush1.msra.mxu0 0.0
  %73 = vmatprep.subr.mxu0 0.0
  %74 = vmatpush1.msra.mxu0 0.0
  %75 = vmatprep.subr.mxu0 0.0
  %76 = vmatpush1.msra.mxu0 0.0
  %77 = vmatprep.subr.mxu0 0.0
  %78 = vmatpush1.msra.mxu0 0.0
  %79 = vmatprep.subr.mxu0 0.0
  %80 = vmatpush1.msra.mxu0 0.0
  %81 = vmatprep.subr.mxu0 0.0
  %82 = vmatpush1.msra.mxu0 0.0
  %83 = vmatprep.subr.mxu0 0.0
  %84 = vmatpush1.msra.mxu0 0.0
  %85 = vmatprep.mubr.f32.mxu0 0.0
  %86 = vmatmul.mubr.f32.gmra.mrb[0].mxu0 %v19
  %v87 = vpop.f32.mrb[0].mxu0
  %v88 = vadd.f32 0.0, %v87
  %v89 = vpop.f32.mrb[0].mxu0
  %90 = vdwg.mxu0
  %v91 = vld [vmem:[%s1] sm:$0xff]
  %v92 = vmul.f32 %v88, %v91
  %v94 = vsel %vm17, %v92, 0
  %96 = vmatprep.subr.mxu0 0.0
  %97 = vmatpush1.msra.mxu0 1.0
  %98 = vmatprep.subr.mxu0 0.0
  %99 = vmatpush1.msra.mxu0 1.0
  %100 = vmatprep.subr.mxu0 0.0
  %101 = vmatpush1.msra.mxu0 0.0
  %102 = vmatprep.subr.mxu0 0.0
  %103 = vmatpush1.msra.mxu0 0.0
  %104 = vmatprep.subr.mxu0 0.0
  %105 = vmatpush1.msra.mxu0 0.0
  %106 = vmatprep.subr.mxu0 0.0
  %107 = vmatpush1.msra.mxu0 0.0
  %108 = vmatprep.subr.mxu0 0.0
  %109 = vmatpush1.msra.mxu0 0.0
  %110 = vmatprep.subr.mxu0 0.0
  %111 = vmatpush1.msra.mxu0 0.0
  %112 = vmatprep.subr.mxu0 0.0
  %113 = vmatpush1.msra.mxu0 0.0
  %114 = vmatprep.subr.mxu0 0.0
  %115 = vmatpush1.msra.mxu0 0.0
  %116 = vmatprep.subr.mxu0 0.0
  %117 = vmatpush1.msra.mxu0 0.0
  %118 = vmatprep.subr.mxu0 0.0
  %119 = vmatpush1.msra.mxu0 0.0
  %120 = vmatprep.subr.mxu0 0.0
  %121 = vmatpush1.msra.mxu0 0.0
  %122 = vmatprep.subr.mxu0 0.0
  %123 = vmatpush1.msra.mxu0 0.0
  %124 = vmatprep.subr.mxu0 0.0
  %125 = vmatpush1.msra.mxu0 0.0
  %126 = vmatprep.subr.mxu0 0.0
  %127 = vmatpush1.msra.mxu0 0.0
  %128 = vmatprep.subr.mxu0 0.0
  %129 = vmatpush1.msra.mxu0 0.0
  %130 = vmatprep.subr.mxu0 0.0
  %131 = vmatpush1.msra.mxu0 0.0
  %132 = vmatprep.subr.mxu0 0.0
  %133 = vmatpush1.msra.mxu0 0.0
  %134 = vmatprep.subr.mxu0 0.0
  %135 = vmatpush1.msra.mxu0 0.0
  %136 = vmatprep.subr.mxu0 0.0
  %137 = vmatpush1.msra.mxu0 0.0
  %138 = vmatprep.subr.mxu0 0.0
  %139 = vmatpush1.msra.mxu0 0.0
  %140 = vmatprep.subr.mxu0 0.0
  %141 = vmatpush1.msra.mxu0 0.0
  %142 = vmatprep.subr.mxu0 0.0
  %143 = vmatpush1.msra.mxu0 0.0
  %144 = vmatprep.subr.mxu0 0.0
  %145 = vmatpush1.msra.mxu0 0.0
  %146 = vmatprep.subr.mxu0 0.0
  %147 = vmatpush1.msra.mxu0 0.0
  %148 = vmatprep.subr.mxu0 0.0
  %149 = vmatpush1.msra.mxu0 0.0
  %150 = vmatprep.subr.mxu0 0.0
  %151 = vmatpush1.msra.mxu0 0.0
  %152 = vmatprep.subr.mxu0 0.0
  %153 = vmatpush1.msra.mxu0 0.0
  %154 = vmatprep.subr.mxu0 0.0
  %155 = vmatpush1.msra.mxu0 0.0
  %156 = vmatprep.subr.mxu0 0.0
  %157 = vmatpush1.msra.mxu0 0.0
  %158 = vmatprep.subr.mxu0 0.0
  %159 = vmatpush1.msra.mxu0 0.0
  %160 = vmatprep.mubr.f32.mxu0 0.0
  %161 = vmatmul.mubr.f32.gmra.mrb[0].mxu0 %v94
  %v162 = vpop.f32.mrb[0].mxu0
  %v163 = vadd.f32 0.0, %v162
  %v164 = vpop.f32.mrb[0].mxu0
  %165 = vdwg.mxu0
  %166 = vst [vmem:[%s3] sm:$0xff] %v163
  // Predicated region
  $region14: #{_lambda_.5} parent=0 // pred_check
    _
  $region15: #{_lambda_.5} parent=0 // pred_check_branch
    %168 = sbr.rel (0) target = $region17
  $region16: #{_lambda_.5} parent=0 // pred_region
    _
  $region17: #{_lambda_.5} parent=0 // pred_fallthru
    _
  // Predicated region
  $region18: #{_lambda_.5} parent=0 // pred_check
    _
  $region19: #{_lambda_.5} parent=0 // pred_check_branch
    %170 = sbr.rel (0) target = $region21
  $region20: #{_lambda_.5} parent=0 // pred_region
    _
  $region21: #{_lambda_.5} parent=0 // pred_fallthru
    _

// kernel: _lambda_.4
$region0: #{_lambda_.4}
  #allocation0 [shape = 'u32[]', space=smem, size = 0x4, offset = 0x4, fixed_abs, tag = 'smem constant byte address 0x4 - core index']
  #allocation1 [shape = 'u32[144,128]{1,0:T(1,128)}', space=vmem, size = 0x12000, scoped, tag = 'internal scratch']
  #allocation2 [shape = 'f32[1,128,17]{2,1,0:T(8,128)}', space=vmem, size = 0x10000, scoped, tag = 'scratch operand']
  %s0 = inlined_call_operand.vmem [shape: f32[2,256,1], index: 0, kind: input, shape index: {}]
  %s1 = inlined_call_operand.vmem [shape: f32[2,1,256], index: 1, kind: input, shape index: {}]
  %s2 = inlined_call_operand.vmem [shape: f32[1,256,17], index: 2, kind: input, shape index: {}]
  %s3 = inlined_call_operand.vmem [shape: s8[256,256], index: 3, kind: input, shape index: {}]
  %s4 = inlined_call_operand.vmem [shape: f32[256,128], index: 4, kind: output, shape index: {}]
  %s5 = sld [smem:[#allocation0]]
  $region95: #{_lambda_.4} parent=0
    _
  %s7 = ssub.s32 1, %s5
  %s8 = scalar_select 0, %s7, %s5
  $region1: #{_lambda_.4} parent=0
    #allocation3 [shape = 'u8[262144]{0}', space=vmem, size = 0x40000, scoped, tag = 'input window, operand 0']
    loop: start=0, step=1, limit=4
    $region2: #{_lambda_.4} parent=1 // loop_pre_header
      _
    $region3: #{_lambda_.4} parent=1 // loop_header
      %s10 = sphi 0, %s14
      %p11 = scmp.ge.s32.totalorder %s10, 4
      %s17 = sphi 0, %s29
      %s18 = sphi 0, %s25
      %s19 = sphi 0, %s17
      %s20 = sphi 0, %s18
      %s21 = sphi 0, %s19
      %s22 = sphi 0, %s20
      %s32 = sphi 0, %s34
      %s35 = sphi 0, %s32
      %s36 = sphi 0, %s35
      %s52 = sphi 0, %s36
      %s58 = sphi 0, %s60
      %s61 = sphi 0, %s58
      %s62 = sphi 0, %s61
      %s78 = sphi 0, %s62
      %s84 = sphi 0, %s86
      %s87 = sphi 0, %s84
      %s88 = sphi 0, %s87
      %s104 = sphi 0, %s88
      %s112 = sphi 0, %s114
      %s115 = sphi 0, %s112
      %s116 = sphi 0, %s115
      %s132 = sphi 0, %s116
      %s138 = sphi 0, %s140
      %s141 = sphi 0, %s138
      %s142 = sphi 0, %s141
      %s158 = sphi 0, %s142
    $region4: #{_lambda_.4} parent=1 // loop_header_branch
      %13 = sbr.rel (%p11) target = $region8
    $region5: #{_lambda_.4} parent=1 // loop_body
      %s15 = ssub.s32 %s10, 1
      %s16 = ssub.s32 %s10, 2
      %s23 = sadd.s32 1, %s18
      %p24 = scmp.ge.s32.totalorder %s23, 1
      %s25 = scalar_select %p24, 0, %s23
      %s26 = sadd.s32 1, %s17
      %s27 = scalar_select %p24, %s26, %s17
      %p28 = scmp.ge.s32.totalorder %s27, 2
      %s29 = scalar_select %p28, 0, %s27
      %s30 = ssub.s32 %s17, %s29
      %p31 = scmp.eq.s32.totalorder %s30, 0
      %s33 = sadd.s32 %s32, 1
      %s34 = scalar_select %p31, %s32, %s33
      %p37 = pneg %p31
      %p38 = scmp.eq.s32.totalorder %s10, 1
      %p39 = por %p37, %p38
      %p40 = scmp.ne.s32.totalorder %s32, %s35
      %p41 = scmp.eq.s32.totalorder %s10, 0
      %p42 = por %p40, %p41
      %p43 = scmp.ne.s32.totalorder %s32, %s35
      %p44 = scmp.eq.s32.totalorder %s15, 1
      %p45 = por %p43, %p44
      %p46 = scmp.ne.s32.totalorder %s35, %s36
      %p47 = scmp.eq.s32.totalorder %s15, 0
      %p48 = por %p46, %p47
      %p49 = scmp.ne.s32.totalorder %s35, %s36
      %p50 = scmp.eq.s32.totalorder %s16, 1
      %p51 = por %p49, %p50
      %p53 = scmp.ne.s32.totalorder %s36, %s52
      %p54 = scmp.eq.s32.totalorder %s16, 0
      %p55 = por %p53, %p54
      %s56 = ssub.s32 %s18, %s25
      %p57 = scmp.eq.s32.totalorder %s56, 0
      %s59 = sadd.s32 %s58, 1
      %s60 = scalar_select %p57, %s58, %s59
      %p63 = pneg %p57
      %p64 = scmp.eq.s32.totalorder %s10, 1
      %p65 = por %p63, %p64
      %p66 = scmp.ne.s32.totalorder %s58, %s61
      %p67 = scmp.eq.s32.totalorder %s10, 0
      %p68 = por %p66, %p67
      %p69 = scmp.ne.s32.totalorder %s58, %s61
      %p70 = scmp.eq.s32.totalorder %s15, 1
      %p71 = por %p69, %p70
      %p72 = scmp.ne.s32.totalorder %s61, %s62
      %p73 = scmp.eq.s32.totalorder %s15, 0
      %p74 = por %p72, %p73
      %p75 = scmp.ne.s32.totalorder %s61, %s62
      %p76 = scmp.eq.s32.totalorder %s16, 1
      %p77 = por %p75, %p76
      %p79 = scmp.ne.s32.totalorder %s62, %s78
      %p80 = scmp.eq.s32.totalorder %s16, 0
      %p81 = por %p79, %p80
      %s82 = ssub.s32 %s18, %s25
      %p83 = scmp.eq.s32.totalorder %s82, 0
      %s85 = sadd.s32 %s84, 1
      %s86 = scalar_select %p83, %s84, %s85
      %p89 = pneg %p83
      %p90 = scmp.eq.s32.totalorder %s10, 1
      %p91 = por %p89, %p90
      %p92 = scmp.ne.s32.totalorder %s84, %s87
      %p93 = scmp.eq.s32.totalorder %s10, 0
      %p94 = por %p92, %p93
      %p95 = scmp.ne.s32.totalorder %s84, %s87
      %p96 = scmp.eq.s32.totalorder %s15, 1
      %p97 = por %p95, %p96
      %p98 = scmp.ne.s32.totalorder %s87, %s88
      %p99 = scmp.eq.s32.totalorder %s15, 0
      %p100 = por %p98, %p99
      %p101 = scmp.ne.s32.totalorder %s87, %s88
      %p102 = scmp.eq.s32.totalorder %s16, 1
      %p103 = por %p101, %p102
      %p105 = scmp.ne.s32.totalorder %s88, %s104
      %p106 = scmp.eq.s32.totalorder %s16, 0
      %p107 = por %p105, %p106
      %s108 = ssub.s32 %s17, %s29
      %s109 = ssub.s32 %s18, %s25
      %s110 = sor.u32 %s108, %s109
      %p111 = scmp.eq.s32.totalorder %s110, 0
      %s113 = sadd.s32 %s112, 1
      %s114 = scalar_select %p111, %s112, %s113
      %p117 = pneg %p111
      %p118 = scmp.eq.s32.totalorder %s10, 1
      %p119 = por %p117, %p118
      %p120 = scmp.ne.s32.totalorder %s112, %s115
      %p121 = scmp.eq.s32.totalorder %s10, 0
      %p122 = por %p120, %p121
      %p123 = scmp.ne.s32.totalorder %s112, %s115
      %p124 = scmp.eq.s32.totalorder %s15, 1
      %p125 = por %p123, %p124
      %p126 = scmp.ne.s32.totalorder %s115, %s116
      %p127 = scmp.eq.s32.totalorder %s15, 0
      %p128 = por %p126, %p127
      %p129 = scmp.ne.s32.totalorder %s115, %s116
      %p130 = scmp.eq.s32.totalorder %s16, 1
      %p131 = por %p129, %p130
      %p133 = scmp.ne.s32.totalorder %s116, %s132
      %p134 = scmp.eq.s32.totalorder %s16, 0
      %p135 = por %p133, %p134
      %s136 = ssub.s32 %s17, %s29
      %p137 = scmp.eq.s32.totalorder %s136, 0
      %s139 = sadd.s32 %s138, 1
      %s140 = scalar_select %p137, %s138, %s139
      %p143 = pneg %p137
      %p144 = scmp.eq.s32.totalorder %s10, 1
      %p145 = por %p143, %p144
      %p146 = scmp.ne.s32.totalorder %s138, %s141
      %p147 = scmp.eq.s32.totalorder %s10, 0
      %p148 = por %p146, %p147
      %p149 = scmp.ne.s32.totalorder %s138, %s141
      %p150 = scmp.eq.s32.totalorder %s15, 1
      %p151 = por %p149, %p150
      %p152 = scmp.ne.s32.totalorder %s141, %s142
      %p153 = scmp.eq.s32.totalorder %s15, 0
      %p154 = por %p152, %p153
      %p155 = scmp.ne.s32.totalorder %s141, %s142
      %p156 = scmp.eq.s32.totalorder %s16, 1
      %p157 = por %p155, %p156
      %p159 = scmp.ne.s32.totalorder %s142, %s158
      %p160 = scmp.eq.s32.totalorder %s16, 0
      %p161 = por %p159, %p160
      %p162 = scmp.le.s32.totalorder 1, %s10
      %p163 = scmp.lt.s32.totalorder %s10, 3
      %p164 = pnand %p162, %p163
      %p165 = pneg %p164
      // Predicated region
      $region9: #{_lambda_.4} parent=5 // pred_check
        _
      $region10: #{_lambda_.4} parent=5 // pred_check_branch
        %167 = sbr.rel (%p164) target = $region12
      $region11: #{_lambda_.4} parent=5 // pred_region
        %s168 = ssub.s32 %s10, 1
        // Predicated region
        $region13: #{_lambda_.4} parent=11 // pred_check
          %p169 = pneg %p74
        $region14: #{_lambda_.4} parent=11 // pred_check_branch
          %171 = sbr.rel (%p169) target = $region16
        $region15: #{_lambda_.4} parent=11 // pred_region
          %s172 = smul.u32 2, %s20
          %p173 = scmp.lt.s32.totalorder %s172, 1
          %s174 = scalar_select %p173, %s172, 1
          %s175 = scalar_lea.vmem %s1, %s174
          %s176 = smul.u32 2, %s20
        $region16: #{_lambda_.4} parent=11 // pred_fallthru
          _
        // Predicated region
        $region17: #{_lambda_.4} parent=11 // pred_check
          %p177 = pneg %p100
        $region18: #{_lambda_.4} parent=11 // pred_check_branch
          %179 = sbr.rel (%p177) target = $region20
        $region19: #{_lambda_.4} parent=11 // pred_region
          %s180 = smul.u32 32, %s20
          %p181 = scmp.lt.s32.totalorder %s180, 31
          %s182 = scalar_select %p181, %s180, 31
          %s183 = smul.addr %s182, 8
          %s184 = scalar_lea.vmem %s2, %s183
          %s185 = smul.u32 32, %s20
        $region20: #{_lambda_.4} parent=11 // pred_fallthru
          _
      $region12: #{_lambda_.4} parent=5 // pred_fallthru
        _
      %p186 = scmp.lt.s32.totalorder %s10, 2
      // Predicated region
      $region21: #{_lambda_.4} parent=5 // pred_check
        %p187 = pneg %p186
      $region22: #{_lambda_.4} parent=5 // pred_check_branch
        %189 = sbr.rel (%p187) target = $region24
      $region23: #{_lambda_.4} parent=5 // pred_region
        // Predicated region
        $region25: #{_lambda_.4} parent=23 // pred_check
          %p190 = pneg %p42
        $region26: #{_lambda_.4} parent=23 // pred_check_branch
          %192 = sbr.rel (%p190) target = $region28
        $region27: #{_lambda_.4} parent=23 // pred_region
          %s193 = sand.u32 %s32, 1
          %s194 = sand.u32 %s32, 1
          %s195 = smul.addr %s194, 256
          %s196 = scalar_lea.vmem [#allocation3], %s195
          %s197 = smul.u32 16, %s17
          %s198 = smul.addr %s197, 8
          %s199 = scalar_lea.vmem %s0, %s198
          // Predicated region
          $region29: #{_lambda_.4} parent=27 // pred_check
            _
          $region30: #{_lambda_.4} parent=27 // pred_check_branch
            %201 = sbr.rel (0) target = $region32
          $region31: #{_lambda_.4} parent=27 // pred_region
            // Predicated region
            $region33: #{_lambda_.4} parent=31 // pred_check
              _
            $region34: #{_lambda_.4} parent=31 // pred_check_branch
              %203 = sbr.rel (0) target = $region36
            $region35: #{_lambda_.4} parent=31 // pred_region
              // Predicated region
              $region48: #{_lambda_.4} parent=35 // pred_check
                _
              $region49: #{_lambda_.4} parent=35 // pred_check_branch
                %280 = sbr.rel (0) target = $region51
              $region50: #{_lambda_.4} parent=35 // pred_region
                loop: start=0, step=1, limit=1
                $region52: #{_lambda_.4} parent=50 // loop_pre_header
                  _
                $region53: #{_lambda_.4} parent=50 // loop_header
                  %s282 = sphi 0, %s286
                  %p283 = scmp.ge.s32.totalorder %s282, 1
                  %s287 = sphi %s199, %s199
                  %s288 = sphi %s196, %s196
                $region54: #{_lambda_.4} parent=50 // loop_header_branch
                  %285 = sbr.rel (%p283) target = $region58
                $region55: #{_lambda_.4} parent=50 // loop_body
                  %v289 = vld [vmem:[%s287] sm:$0xff]
                  %290 = vst [vmem:[%s288] sm:$0xff] %v289
                  %v291 = vld [vmem:[%s287 + $0x8] sm:$0xff]
                  %292 = vst [vmem:[%s288 + $0x8] sm:$0xff] %v291
                  %v293 = vld [vmem:[%s287 + $0x10] sm:$0xff]
                  %294 = vst [vmem:[%s288 + $0x10] sm:$0xff] %v293
                  %v295 = vld [vmem:[%s287 + $0x18] sm:$0xff]
                  %296 = vst [vmem:[%s288 + $0x18] sm:$0xff] %v295
                  %v297 = vld [vmem:[%s287 + $0x20] sm:$0xff]
                  %298 = vst [vmem:[%s288 + $0x20] sm:$0xff] %v297
                  %v299 = vld [vmem:[%s287 + $0x28] sm:$0xff]
                  %300 = vst [vmem:[%s288 + $0x28] sm:$0xff] %v299
                  %v301 = vld [vmem:[%s287 + $0x30] sm:$0xff]
                  %302 = vst [vmem:[%s288 + $0x30] sm:$0xff] %v301
                  %v303 = vld [vmem:[%s287 + $0x38] sm:$0xff]
                  %304 = vst [vmem:[%s288 + $0x38] sm:$0xff] %v303
                  %v305 = vld [vmem:[%s287 + $0x40] sm:$0xff]
                  %306 = vst [vmem:[%s288 + $0x40] sm:$0xff] %v305
                  %v307 = vld [vmem:[%s287 + $0x48] sm:$0xff]
                  %308 = vst [vmem:[%s288 + $0x48] sm:$0xff] %v307
                  %v309 = vld [vmem:[%s287 + $0x50] sm:$0xff]
                  %310 = vst [vmem:[%s288 + $0x50] sm:$0xff] %v309
                  %v311 = vld [vmem:[%s287 + $0x58] sm:$0xff]
                  %312 = vst [vmem:[%s288 + $0x58] sm:$0xff] %v311
                  %v313 = vld [vmem:[%s287 + $0x60] sm:$0xff]
                  %314 = vst [vmem:[%s288 + $0x60] sm:$0xff] %v313
                  %v315 = vld [vmem:[%s287 + $0x68] sm:$0xff]
                  %316 = vst [vmem:[%s288 + $0x68] sm:$0xff] %v315
                  %v317 = vld [vmem:[%s287 + $0x70] sm:$0xff]
                  %318 = vst [vmem:[%s288 + $0x70] sm:$0xff] %v317
                  %v319 = vld [vmem:[%s287 + $0x78] sm:$0xff]
                  %320 = vst [vmem:[%s288 + $0x78] sm:$0xff] %v319
                  %v321 = vld [vmem:[%s287 + $0x100] sm:$0xff]
                  %322 = vst [vmem:[%s288 + $0x80] sm:$0xff] %v321
                  %v323 = vld [vmem:[%s287 + $0x108] sm:$0xff]
                  %324 = vst [vmem:[%s288 + $0x88] sm:$0xff] %v323
                  %v325 = vld [vmem:[%s287 + $0x110] sm:$0xff]
                  %326 = vst [vmem:[%s288 + $0x90] sm:$0xff] %v325
                  %v327 = vld [vmem:[%s287 + $0x118] sm:$0xff]
                  %328 = vst [vmem:[%s288 + $0x98] sm:$0xff] %v327
                  %v329 = vld [vmem:[%s287 + $0x120] sm:$0xff]
                  %330 = vst [vmem:[%s288 + $0xa0] sm:$0xff] %v329
                  %v331 = vld [vmem:[%s287 + $0x128] sm:$0xff]
                  %332 = vst [vmem:[%s288 + $0xa8] sm:$0xff] %v331
                  %v333 = vld [vmem:[%s287 + $0x130] sm:$0xff]
                  %334 = vst [vmem:[%s288 + $0xb0] sm:$0xff] %v333
                  %v335 = vld [vmem:[%s287 + $0x138] sm:$0xff]
                  %336 = vst [vmem:[%s288 + $0xb8] sm:$0xff] %v335
                  %v337 = vld [vmem:[%s287 + $0x140] sm:$0xff]
                  %338 = vst [vmem:[%s288 + $0xc0] sm:$0xff] %v337
                  %v339 = vld [vmem:[%s287 + $0x148] sm:$0xff]
                  %340 = vst [vmem:[%s288 + $0xc8] sm:$0xff] %v339
                  %v341 = vld [vmem:[%s287 + $0x150] sm:$0xff]
                  %342 = vst [vmem:[%s288 + $0xd0] sm:$0xff] %v341
                  %v343 = vld [vmem:[%s287 + $0x158] sm:$0xff]
                  %344 = vst [vmem:[%s288 + $0xd8] sm:$0xff] %v343
                  %v345 = vld [vmem:[%s287 + $0x160] sm:$0xff]
                  %346 = vst [vmem:[%s288 + $0xe0] sm:$0xff] %v345
                  %v347 = vld [vmem:[%s287 + $0x168] sm:$0xff]
                  %348 = vst [vmem:[%s288 + $0xe8] sm:$0xff] %v347
                  %v349 = vld [vmem:[%s287 + $0x170] sm:$0xff]
                  %350 = vst [vmem:[%s288 + $0xf0] sm:$0xff] %v349
                  %v351 = vld [vmem:[%s287 + $0x178] sm:$0xff]
                  %352 = vst [vmem:[%s288 + $0xf8] sm:$0xff] %v351
                $region56: #{_lambda_.4} parent=50 // loop_footer
                  %s286 = sadd.s32 1, %s282
                $region57: #{_lambda_.4} parent=50 // loop_footer_branch
                  %281 = sbr.rel target = $region53
                $region58: #{_lambda_.4} parent=50 // loop_exit
                  _
              $region51: #{_lambda_.4} parent=35 // pred_fallthru
                _
              // Predicated region
              $region59: #{_lambda_.4} parent=35 // pred_check
                _
              $region60: #{_lambda_.4} parent=35 // pred_check_branch
                %354 = sbr.rel target = $region62
              $region61: #{_lambda_.4} parent=35 // pred_region
                _
              $region62: #{_lambda_.4} parent=35 // pred_fallthru
                _
            $region36: #{_lambda_.4} parent=31 // pred_fallthru
              _
            // Predicated region
            $region37: #{_lambda_.4} parent=31 // pred_check
              _
            $region38: #{_lambda_.4} parent=31 // pred_check_branch
              %205 = sbr.rel target = $region40
            $region39: #{_lambda_.4} parent=31 // pred_region
              loop: start=0, step=1, limit=1
              $region41: #{_lambda_.4} parent=39 // loop_pre_header
                _
              $region42: #{_lambda_.4} parent=39 // loop_header
                %s208 = sphi 0, %s212
                %p209 = scmp.ge.s32.totalorder %s208, 1
                %s213 = sphi %s199, %s199
                %s214 = sphi %s196, %s196
              $region43: #{_lambda_.4} parent=39 // loop_header_branch
                %211 = sbr.rel (%p209) target = $region47
              $region44: #{_lambda_.4} parent=39 // loop_body
                %v215 = vld [vmem:[%s213] sm:$0xff]
                %216 = vst [vmem:[%s214] sm:$0xff] %v215
                %v217 = vld [vmem:[%s213 + $0x8] sm:$0xff]
                %218 = vst [vmem:[%s214 + $0x8] sm:$0xff] %v217
                %v219 = vld [vmem:[%s213 + $0x10] sm:$0xff]
                %220 = vst [vmem:[%s214 + $0x10] sm:$0xff] %v219
                %v221 = vld [vmem:[%s213 + $0x18] sm:$0xff]
                %222 = vst [vmem:[%s214 + $0x18] sm:$0xff] %v221
                %v223 = vld [vmem:[%s213 + $0x20] sm:$0xff]
                %224 = vst [vmem:[%s214 + $0x20] sm:$0xff] %v223
                %v225 = vld [vmem:[%s213 + $0x28] sm:$0xff]
                %226 = vst [vmem:[%s214 + $0x28] sm:$0xff] %v225
                %v227 = vld [vmem:[%s213 + $0x30] sm:$0xff]
                %228 = vst [vmem:[%s214 + $0x30] sm:$0xff] %v227
                %v229 = vld [vmem:[%s213 + $0x38] sm:$0xff]
                %230 = vst [vmem:[%s214 + $0x38] sm:$0xff] %v229
                %v231 = vld [vmem:[%s213 + $0x40] sm:$0xff]
                %232 = vst [vmem:[%s214 + $0x40] sm:$0xff] %v231
                %v233 = vld [vmem:[%s213 + $0x48] sm:$0xff]
                %234 = vst [vmem:[%s214 + $0x48] sm:$0xff] %v233
                %v235 = vld [vmem:[%s213 + $0x50] sm:$0xff]
                %236 = vst [vmem:[%s214 + $0x50] sm:$0xff] %v235
                %v237 = vld [vmem:[%s213 + $0x58] sm:$0xff]
                %238 = vst [vmem:[%s214 + $0x58] sm:$0xff] %v237
                %v239 = vld [vmem:[%s213 + $0x60] sm:$0xff]
                %240 = vst [vmem:[%s214 + $0x60] sm:$0xff] %v239
                %v241 = vld [vmem:[%s213 + $0x68] sm:$0xff]
                %242 = vst [vmem:[%s214 + $0x68] sm:$0xff] %v241
                %v243 = vld [vmem:[%s213 + $0x70] sm:$0xff]
                %244 = vst [vmem:[%s214 + $0x70] sm:$0xff] %v243
                %v245 = vld [vmem:[%s213 + $0x78] sm:$0xff]
                %246 = vst [vmem:[%s214 + $0x78] sm:$0xff] %v245
                %v247 = vld [vmem:[%s213 + $0x100] sm:$0xff]
                %248 = vst [vmem:[%s214 + $0x80] sm:$0xff] %v247
                %v249 = vld [vmem:[%s213 + $0x108] sm:$0xff]
                %250 = vst [vmem:[%s214 + $0x88] sm:$0xff] %v249
                %v251 = vld [vmem:[%s213 + $0x110] sm:$0xff]
                %252 = vst [vmem:[%s214 + $0x90] sm:$0xff] %v251
                %v253 = vld [vmem:[%s213 + $0x118] sm:$0xff]
                %254 = vst [vmem:[%s214 + $0x98] sm:$0xff] %v253
                %v255 = vld [vmem:[%s213 + $0x120] sm:$0xff]
                %256 = vst [vmem:[%s214 + $0xa0] sm:$0xff] %v255
                %v257 = vld [vmem:[%s213 + $0x128] sm:$0xff]
                %258 = vst [vmem:[%s214 + $0xa8] sm:$0xff] %v257
                %v259 = vld [vmem:[%s213 + $0x130] sm:$0xff]
                %260 = vst [vmem:[%s214 + $0xb0] sm:$0xff] %v259
                %v261 = vld [vmem:[%s213 + $0x138] sm:$0xff]
                %262 = vst [vmem:[%s214 + $0xb8] sm:$0xff] %v261
                %v263 = vld [vmem:[%s213 + $0x140] sm:$0xff]
                %264 = vst [vmem:[%s214 + $0xc0] sm:$0xff] %v263
                %v265 = vld [vmem:[%s213 + $0x148] sm:$0xff]
                %266 = vst [vmem:[%s214 + $0xc8] sm:$0xff] %v265
                %v267 = vld [vmem:[%s213 + $0x150] sm:$0xff]
                %268 = vst [vmem:[%s214 + $0xd0] sm:$0xff] %v267
                %v269 = vld [vmem:[%s213 + $0x158] sm:$0xff]
                %270 = vst [vmem:[%s214 + $0xd8] sm:$0xff] %v269
                %v271 = vld [vmem:[%s213 + $0x160] sm:$0xff]
                %272 = vst [vmem:[%s214 + $0xe0] sm:$0xff] %v271
                %v273 = vld [vmem:[%s213 + $0x168] sm:$0xff]
                %274 = vst [vmem:[%s214 + $0xe8] sm:$0xff] %v273
                %v275 = vld [vmem:[%s213 + $0x170] sm:$0xff]
                %276 = vst [vmem:[%s214 + $0xf0] sm:$0xff] %v275
                %v277 = vld [vmem:[%s213 + $0x178] sm:$0xff]
                %278 = vst [vmem:[%s214 + $0xf8] sm:$0xff] %v277
              $region45: #{_lambda_.4} parent=39 // loop_footer
                %s212 = sadd.s32 1, %s208
              $region46: #{_lambda_.4} parent=39 // loop_footer_branch
                %207 = sbr.rel target = $region42
              $region47: #{_lambda_.4} parent=39 // loop_exit
                _
            $region40: #{_lambda_.4} parent=31 // pred_fallthru
              _
          $region32: #{_lambda_.4} parent=27 // pred_fallthru
            _
          %355 = vnop
        $region28: #{_lambda_.4} parent=23 // pred_fallthru
          _
        // Predicated region
        $region63: #{_lambda_.4} parent=23 // pred_check
          %p356 = pneg %p122
        $region64: #{_lambda_.4} parent=23 // pred_check_branch
          %358 = sbr.rel (%p356) target = $region66
        $region65: #{_lambda_.4} parent=23 // pred_region
          %s359 = smul.u32 4, %s17
          %s360 = smul.u32 2, %s18
          %p361 = scmp.lt.s32.totalorder %s359, 7
          %s362 = scalar_select %p361, %s359, 7
          %p363 = scmp.lt.s32.totalorder %s360, 1
          %s364 = scalar_select %p363, %s360, 1
          %s365 = smul.addr %s362, 2
          %s366 = sadd.s32 %s364, %s365
          %s367 = smul.addr %s366, 8
          %s368 = scalar_lea.vmem %s3, %s367
          %s369 = smul.u32 4, %s17
          %s370 = smul.u32 2, %s18
        $region66: #{_lambda_.4} parent=23 // pred_fallthru
          _
      $region24: #{_lambda_.4} parent=5 // pred_fallthru
        _
      %p371 = scmp.le.s32.totalorder 1, %s10
      %p372 = scmp.lt.s32.totalorder %s10, 3
      %p373 = pnand %p371, %p372
      %p374 = pneg %p373
      // Predicated region
      $region67: #{_lambda_.4} parent=5 // pred_check
        _
      $region68: #{_lambda_.4} parent=5 // pred_check_branch
        %376 = sbr.rel (%p373) target = $region70
      $region69: #{_lambda_.4} parent=5 // pred_region
        %s377 = ssub.s32 %s10, 1
        %s378 = sand.u32 %s35, 1
        %s379 = sand.u32 %s35, 1
        %s380 = smul.addr %s379, 256
        %s381 = scalar_lea.vmem [#allocation3], %s380
        // Predicated region
        $region71: #{_lambda_.4} parent=69 // pred_check
          %p382 = pneg %p48
        $region72: #{_lambda_.4} parent=69 // pred_check_branch
          %384 = sbr.rel (%p382) target = $region74
        $region73: #{_lambda_.4} parent=69 // pred_region
          _
        $region74: #{_lambda_.4} parent=69 // pred_fallthru
          _
        %s385 = sand.u32 %s35, 1
        %s386 = sand.u32 %s35, 1
        %s387 = smul.addr %s386, 256
        %s388 = scalar_lea.vmem [#allocation3], %s387
        %p389 = pneg %p48
        %p390 = pneg %p45
        %s391 = smul.u32 2, %s20
        %p392 = scmp.lt.s32.totalorder %s391, 1
        %s393 = scalar_select %p392, %s391, 1
        %s394 = scalar_lea.vmem %s1, %s393
        %p395 = pneg %p74
        %p396 = pneg %p71
        %s397 = smul.u32 32, %s20
        %p398 = scmp.lt.s32.totalorder %s397, 31
        %s399 = scalar_select %p398, %s397, 31
        %s400 = smul.addr %s399, 8
        %s401 = scalar_lea.vmem %s2, %s400
        %p402 = pneg %p100
        %p403 = pneg %p97
        %s404 = smul.u32 4, %s19
        %s405 = smul.u32 2, %s20
        %p406 = scmp.lt.s32.totalorder %s404, 7
        %s407 = scalar_select %p406, %s404, 7
        %p408 = scmp.lt.s32.totalorder %s405, 1
        %s409 = scalar_select %p408, %s405, 1
        %s410 = smul.addr %s407, 2
        %s411 = sadd.s32 %s409, %s410
        %s412 = smul.addr %s411, 8
        %s413 = scalar_lea.vmem %s3, %s412
        %p414 = pneg %p128
        %p415 = pneg %p125
        %p416 = pneg %p154
        %p417 = pneg %p151
        %s418 = smul.u32 16, %s19
        %p419 = scmp.lt.s32.totalorder %s418, 31
        %s420 = scalar_select %p419, %s418, 31
        %s421 = smul.addr %s420, 8
        %s422 = scalar_lea.vmem %s4, %s421
        %s423 = smul.u32 16, %s19
        %s424 = smul.u32 2, %s20
        %p425 = scmp.lt.s32.totalorder %s424, 1
        %s426 = scalar_select %p425, %s424, 1
        %s427 = scalar_lea.vmem %s1, %s426
        %s428 = smul.u32 2, %s20
        %s429 = smul.u32 32, %s20
        %p430 = scmp.lt.s32.totalorder %s429, 31
        %s431 = scalar_select %p430, %s429, 31
        %s432 = smul.addr %s431, 8
        %s433 = scalar_lea.vmem %s2, %s432
        %s434 = smul.u32 32, %s20
        %s435 = smul.u32 4, %s19
        %s436 = smul.u32 2, %s20
        %p437 = scmp.lt.s32.totalorder %s435, 7
        %s438 = scalar_select %p437, %s435, 7
        %p439 = scmp.lt.s32.totalorder %s436, 1
        %s440 = scalar_select %p439, %s436, 1
        %s441 = smul.addr %s438, 2
        %s442 = sadd.s32 %s440, %s441
        %s443 = smul.addr %s442, 8
        %s444 = scalar_lea.vmem %s3, %s443
        %s445 = smul.u32 4, %s19
        %s446 = smul.u32 2, %s20
        %s447 = smul.u32 16, %s19
        %p448 = scmp.lt.s32.totalorder %s447, 31
        %s449 = scalar_select %p448, %s447, 31
        %s450 = smul.addr %s449, 8
        %s451 = scalar_lea.vmem %s4, %s450
        %s452 = smul.u32 16, %s19
        %p453 = scmp.eq.s32.totalorder %s20, 0
        // Predicated region
        $region75: #{_lambda_.4} parent=69 // pred_check
          %p454 = pneg %p453
        $region76: #{_lambda_.4} parent=69 // pred_check_branch
          %456 = sbr.rel (%p454) target = $region78
        $region77: #{_lambda_.4} parent=69 // pred_region
          %vm457 = vcmask 138240
          %458 = vst.msk [vmem:[#allocation2] sm:$0xff] %vm457, 0.0
          %459 = vst.msk [vmem:[#allocation2 + $0x8] sm:$0xff] %vm457, 0.0
          %460 = vst.msk [vmem:[#allocation2 + $0x10] sm:$0xff] %vm457, 0.0
          %461 = vst.msk [vmem:[#allocation2 + $0x18] sm:$0xff] %vm457, 0.0
          %462 = vst.msk [vmem:[#allocation2 + $0x20] sm:$0xff] %vm457, 0.0
          %463 = vst.msk [vmem:[#allocation2 + $0x28] sm:$0xff] %vm457, 0.0
          %464 = vst.msk [vmem:[#allocation2 + $0x30] sm:$0xff] %vm457, 0.0
          %465 = vst.msk [vmem:[#allocation2 + $0x38] sm:$0xff] %vm457, 0.0
          %466 = vst.msk [vmem:[#allocation2 + $0x40] sm:$0xff] %vm457, 0.0
          %467 = vst.msk [vmem:[#allocation2 + $0x48] sm:$0xff] %vm457, 0.0
          %468 = vst.msk [vmem:[#allocation2 + $0x50] sm:$0xff] %vm457, 0.0
          %469 = vst.msk [vmem:[#allocation2 + $0x58] sm:$0xff] %vm457, 0.0
          %470 = vst.msk [vmem:[#allocation2 + $0x60] sm:$0xff] %vm457, 0.0
          %471 = vst.msk [vmem:[#allocation2 + $0x68] sm:$0xff] %vm457, 0.0
          %472 = vst.msk [vmem:[#allocation2 + $0x70] sm:$0xff] %vm457, 0.0
          %473 = vst.msk [vmem:[#allocation2 + $0x78] sm:$0xff] %vm457, 0.0
        $region78: #{_lambda_.4} parent=69 // pred_fallthru
          _
        %v474 = vld [vmem:[%s444] sm:$0xff]
        %v475 = vld [vmem:[%s444 + $0x8] sm:$0xff]
        %v476 = vld [vmem:[%s444 + $0x10] sm:$0xff]
        %v477 = vld [vmem:[%s444 + $0x18] sm:$0xff]
        %v478 = vld [vmem:[%s444 + $0x20] sm:$0xff]
        %v479 = vld [vmem:[%s444 + $0x28] sm:$0xff]
        %v480 = vld [vmem:[%s444 + $0x30] sm:$0xff]
        %v481 = vld [vmem:[%s444 + $0x38] sm:$0xff]
        %v482 = vunpack.c.0.s8 %v474
        %v483 = vunpack.c.0.s8 %v475
        %v484 = vunpack.c.1.s8 %v474
        %v485 = vunpack.c.1.s8 %v475
        %v486 = vunpack.c.2.s8 %v474
        %v487 = vunpack.c.2.s8 %v475
        %v488 = vunpack.c.3.s8 %v474
        %v489 = vunpack.c.3.s8 %v475
        %v490 = vunpack.c.0.s8 %v476
        %v491 = vunpack.c.0.s8 %v477
        %v492 = vunpack.c.1.s8 %v476
        %v493 = vunpack.c.1.s8 %v477
        %v494 = vunpack.c.2.s8 %v476
        %v495 = vunpack.c.2.s8 %v477
        %v496 = vunpack.c.3.s8 %v476
        %v497 = vunpack.c.3.s8 %v477
        %v498 = vunpack.c.0.s8 %v478
        %v499 = vunpack.c.0.s8 %v479
        %v500 = vunpack.c.1.s8 %v478
        %v501 = vunpack.c.1.s8 %v479
        %v502 = vunpack.c.2.s8 %v478
        %v503 = vunpack.c.2.s8 %v479
        %v504 = vunpack.c.3.s8 %v478
        %v505 = vunpack.c.3.s8 %v479
        %v506 = vunpack.c.0.s8 %v480
        %v507 = vunpack.c.0.s8 %v481
        %v508 = vunpack.c.1.s8 %v480
        %v509 = vunpack.c.1.s8 %v481
        %v510 = vunpack.c.2.s8 %v480
        %v511 = vunpack.c.2.s8 %v481
        %v512 = vunpack.c.3.s8 %v480
        %v513 = vunpack.c.3.s8 %v481
        %v514 = vcvt.s32.f32 %v482
        %v515 = vcvt.s32.f32 %v483
        %v516 = vcvt.s32.f32 %v484
        %v517 = vcvt.s32.f32 %v485
        %v518 = vcvt.s32.f32 %v486
        %v519 = vcvt.s32.f32 %v487
        %v520 = vcvt.s32.f32 %v488
        %v521 = vcvt.s32.f32 %v489
        %v522 = vcvt.s32.f32 %v490
        %v523 = vcvt.s32.f32 %v491
        %v524 = vcvt.s32.f32 %v492
        %v525 = vcvt.s32.f32 %v493
        %v526 = vcvt.s32.f32 %v494
        %v527 = vcvt.s32.f32 %v495
        %v528 = vcvt.s32.f32 %v496
        %v529 = vcvt.s32.f32 %v497
        %v530 = vcvt.s32.f32 %v498
        %v531 = vcvt.s32.f32 %v499
        %v532 = vcvt.s32.f32 %v500
        %v533 = vcvt.s32.f32 %v501
        %v534 = vcvt.s32.f32 %v502
        %v535 = vcvt.s32.f32 %v503
        %v536 = vcvt.s32.f32 %v504
        %v537 = vcvt.s32.f32 %v505
        %v538 = vcvt.s32.f32 %v506
        %v539 = vcvt.s32.f32 %v507
        %v540 = vcvt.s32.f32 %v508
        %v541 = vcvt.s32.f32 %v509
        %v542 = vcvt.s32.f32 %v510
        %v543 = vcvt.s32.f32 %v511
        %v544 = vcvt.s32.f32 %v512
        %v545 = vcvt.s32.f32 %v513
        %v546 = vld [vmem:[%s381] sm:$0xff]
        %v547 = vld [vmem:[%s381 + $0x8] sm:$0xff]
        %v548 = vld [vmem:[%s381 + $0x10] sm:$0xff]
        %v549 = vld [vmem:[%s381 + $0x18] sm:$0xff]
        %v550 = vld [vmem:[%s381 + $0x20] sm:$0xff]
        %v551 = vld [vmem:[%s381 + $0x28] sm:$0xff]
        %v552 = vld [vmem:[%s381 + $0x30] sm:$0xff]
        %v553 = vld [vmem:[%s381 + $0x38] sm:$0xff]
        %v554 = vld [vmem:[%s381 + $0x40] sm:$0xff]
        %v555 = vld [vmem:[%s381 + $0x48] sm:$0xff]
        %v556 = vld [vmem:[%s381 + $0x50] sm:$0xff]
        %v557 = vld [vmem:[%s381 + $0x58] sm:$0xff]
        %v558 = vld [vmem:[%s381 + $0x60] sm:$0xff]
        %v559 = vld [vmem:[%s381 + $0x68] sm:$0xff]
        %v560 = vld [vmem:[%s381 + $0x70] sm:$0xff]
        %v561 = vld [vmem:[%s381 + $0x78] sm:$0xff]
        %v562 = vld [vmem:[%s381 + $0x80] sm:$0xff]
        %v563 = vld [vmem:[%s381 + $0x88] sm:$0xff]
        %v564 = vld [vmem:[%s381 + $0x90] sm:$0xff]
        %v565 = vld [vmem:[%s381 + $0x98] sm:$0xff]
        %v566 = vld [vmem:[%s381 + $0xa0] sm:$0xff]
        %v567 = vld [vmem:[%s381 + $0xa8] sm:$0xff]
        %v568 = vld [vmem:[%s381 + $0xb0] sm:$0xff]
        %v569 = vld [vmem:[%s381 + $0xb8] sm:$0xff]
        %v570 = vld [vmem:[%s381 + $0xc0] sm:$0xff]
        %v571 = vld [vmem:[%s381 + $0xc8] sm:$0xff]
        %v572 = vld [vmem:[%s381 + $0xd0] sm:$0xff]
        %v573 = vld [vmem:[%s381 + $0xd8] sm:$0xff]
        %v574 = vld [vmem:[%s381 + $0xe0] sm:$0xff]
        %v575 = vld [vmem:[%s381 + $0xe8] sm:$0xff]
        %v576 = vld [vmem:[%s381 + $0xf0] sm:$0xff]
        %v577 = vld [vmem:[%s381 + $0xf8] sm:$0xff]
        %v578 = vld [vmem:[%s427] sm:$0x3]
        %v579 = vld [vmem:[%s427 + $0x2] sm:$0x3]
        %581 = vset.pattern.permute.xlu0 0
        %582 = vperm.xlu0 %581, %v546
        %v583 = vpop.permute.xlu0 %582
        %586 = vset.pattern.permute.xlu0 0
        %587 = vperm.xlu0 %586, %v547
        %v588 = vpop.permute.xlu0 %587
        %591 = vset.pattern.permute.xlu0 0
        %592 = vperm.xlu0 %591, %v548
        %v593 = vpop.permute.xlu0 %592
        %596 = vset.pattern.permute.xlu0 0
        %597 = vperm.xlu0 %596, %v549
        %v598 = vpop.permute.xlu0 %597
        %601 = vset.pattern.permute.xlu0 0
        %602 = vperm.xlu0 %601, %v550
        %v603 = vpop.permute.xlu0 %602
        %606 = vset.pattern.permute.xlu0 0
        %607 = vperm.xlu0 %606, %v551
        %v608 = vpop.permute.xlu0 %607
        %611 = vset.pattern.permute.xlu0 0
        %612 = vperm.xlu0 %611, %v552
        %v613 = vpop.permute.xlu0 %612
        %616 = vset.pattern.permute.xlu0 0
        %617 = vperm.xlu0 %616, %v553
        %v618 = vpop.permute.xlu0 %617
        %621 = vset.pattern.permute.xlu0 0
        %622 = vperm.xlu0 %621, %v554
        %v623 = vpop.permute.xlu0 %622
        %626 = vset.pattern.permute.xlu0 0
        %627 = vperm.xlu0 %626, %v555
        %v628 = vpop.permute.xlu0 %627
        %631 = vset.pattern.permute.xlu0 0
        %632 = vperm.xlu0 %631, %v556
        %v633 = vpop.permute.xlu0 %632
        %636 = vset.pattern.permute.xlu0 0
        %637 = vperm.xlu0 %636, %v557
        %v638 = vpop.permute.xlu0 %637
        %641 = vset.pattern.permute.xlu0 0
        %642 = vperm.xlu0 %641, %v558
        %v643 = vpop.permute.xlu0 %642
        %646 = vset.pattern.permute.xlu0 0
        %647 = vperm.xlu0 %646, %v559
        %v648 = vpop.permute.xlu0 %647
        %651 = vset.pattern.permute.xlu0 0
        %652 = vperm.xlu0 %651, %v560
        %v653 = vpop.permute.xlu0 %652
        %656 = vset.pattern.permute.xlu0 0
        %657 = vperm.xlu0 %656, %v561
        %v658 = vpop.permute.xlu0 %657
        %v661 = vlaneseq
        %v662 = vshrl.u32 %v661, 7
        %v663 = vsub.s32 0, %v662
        %v664 = vrot.slane %v578, %v663
        %v665 = vlaneseq
        %v666 = vshrl.u32 %v665, 7
        %v667 = vsub.s32 1, %v666
        %v668 = vrot.slane %v578, %v667
        %v671 = vmul.f32 %v583, %v664
        %v672 = vmul.f32 %v583, %v668
        %v673 = vmul.f32 %v588, %v664
        %v674 = vmul.f32 %v588, %v668
        %v675 = vmul.f32 %v593, %v664
        %v676 = vmul.f32 %v593, %v668
        %v677 = vmul.f32 %v598, %v664
        %v678 = vmul.f32 %v598, %v668
        %v679 = vmul.f32 %v603, %v664
        %v680 = vmul.f32 %v603, %v668
        %v681 = vmul.f32 %v608, %v664
        %v682 = vmul.f32 %v608, %v668
        %v683 = vmul.f32 %v613, %v664
        %v684 = vmul.f32 %v613, %v668
        %v685 = vmul.f32 %v618, %v664
        %v686 = vmul.f32 %v618, %v668
        %v687 = vmul.f32 %v623, %v664
        %v688 = vmul.f32 %v623, %v668
        %v689 = vmul.f32 %v628, %v664
        %v690 = vmul.f32 %v628, %v668
        %v691 = vmul.f32 %v633, %v664
        %v692 = vmul.f32 %v633, %v668
        %v693 = vmul.f32 %v638, %v664
        %v694 = vmul.f32 %v638, %v668
        %v695 = vmul.f32 %v643, %v664
        %v696 = vmul.f32 %v643, %v668
        %v697 = vmul.f32 %v648, %v664
        %v698 = vmul.f32 %v648, %v668
        %v699 = vmul.f32 %v653, %v664
        %v700 = vmul.f32 %v653, %v668
        %v701 = vmul.f32 %v658, %v664
        %v702 = vmul.f32 %v658, %v668
        %704 = vset.pattern.permute.xlu0 0
        %705 = vperm.xlu0 %704, %v562
        %v706 = vpop.permute.xlu0 %705
        %709 = vset.pattern.permute.xlu0 0
        %710 = vperm.xlu0 %709, %v563
        %v711 = vpop.permute.xlu0 %710
        %714 = vset.pattern.permute.xlu0 0
        %715 = vperm.xlu0 %714, %v564
        %v716 = vpop.permute.xlu0 %715
        %719 = vset.pattern.permute.xlu0 0
        %720 = vperm.xlu0 %719, %v565
        %v721 = vpop.permute.xlu0 %720
        %724 = vset.pattern.permute.xlu0 0
        %725 = vperm.xlu0 %724, %v566
        %v726 = vpop.permute.xlu0 %725
        %729 = vset.pattern.permute.xlu0 0
        %730 = vperm.xlu0 %729, %v567
        %v731 = vpop.permute.xlu0 %730
        %734 = vset.pattern.permute.xlu0 0
        %735 = vperm.xlu0 %734, %v568
        %v736 = vpop.permute.xlu0 %735
        %739 = vset.pattern.permute.xlu0 0
        %740 = vperm.xlu0 %739, %v569
        %v741 = vpop.permute.xlu0 %740
        %744 = vset.pattern.permute.xlu0 0
        %745 = vperm.xlu0 %744, %v570
        %v746 = vpop.permute.xlu0 %745
        %749 = vset.pattern.permute.xlu0 0
        %750 = vperm.xlu0 %749, %v571
        %v751 = vpop.permute.xlu0 %750
        %754 = vset.pattern.permute.xlu0 0
        %755 = vperm.xlu0 %754, %v572
        %v756 = vpop.permute.xlu0 %755
        %759 = vset.pattern.permute.xlu0 0
        %760 = vperm.xlu0 %759, %v573
        %v761 = vpop.permute.xlu0 %760
        %764 = vset.pattern.permute.xlu0 0
        %765 = vperm.xlu0 %764, %v574
        %v766 = vpop.permute.xlu0 %765
        %769 = vset.pattern.permute.xlu0 0
        %770 = vperm.xlu0 %769, %v575
        %v771 = vpop.permute.xlu0 %770
        %774 = vset.pattern.permute.xlu0 0
        %775 = vperm.xlu0 %774, %v576
        %v776 = vpop.permute.xlu0 %775
        %779 = vset.pattern.permute.xlu0 0
        %780 = vperm.xlu0 %779, %v577
        %v781 = vpop.permute.xlu0 %780
        %v784 = vlaneseq
        %v785 = vshrl.u32 %v784, 7
        %v786 = vsub.s32 0, %v785
        %v787 = vrot.slane %v579, %v786
        %v788 = vlaneseq
        %v789 = vshrl.u32 %v788, 7
        %v790 = vsub.s32 1, %v789
        %v791 = vrot.slane %v579, %v790
        %v794 = vmul.f32 %v706, %v787
        %v795 = vmul.f32 %v706, %v791
        %v796 = vmul.f32 %v711, %v787
        %v797 = vmul.f32 %v711, %v791
        %v798 = vmul.f32 %v716, %v787
        %v799 = vmul.f32 %v716, %v791
        %v800 = vmul.f32 %v721, %v787
        %v801 = vmul.f32 %v721, %v791
        %v802 = vmul.f32 %v726, %v787
        %v803 = vmul.f32 %v726, %v791
        %v804 = vmul.f32 %v731, %v787
        %v805 = vmul.f32 %v731, %v791
        %v806 = vmul.f32 %v736, %v787
        %v807 = vmul.f32 %v736, %v791
        %v808 = vmul.f32 %v741, %v787
        %v809 = vmul.f32 %v741, %v791
        %v810 = vmul.f32 %v746, %v787
        %v811 = vmul.f32 %v746, %v791
        %v812 = vmul.f32 %v751, %v787
        %v813 = vmul.f32 %v751, %v791
        %v814 = vmul.f32 %v756, %v787
        %v815 = vmul.f32 %v756, %v791
        %v816 = vmul.f32 %v761, %v787
        %v817 = vmul.f32 %v761, %v791
        %v818 = vmul.f32 %v766, %v787
        %v819 = vmul.f32 %v766, %v791
        %v820 = vmul.f32 %v771, %v787
        %v821 = vmul.f32 %v771, %v791
        %v822 = vmul.f32 %v776, %v787
        %v823 = vmul.f32 %v776, %v791
        %v824 = vmul.f32 %v781, %v787
        %v825 = vmul.f32 %v781, %v791
        %v826 = vmin.f32 %v671, %v794
        %v827 = vmin.f32 %v672, %v795
        %v828 = vmin.f32 %v673, %v796
        %v829 = vmin.f32 %v674, %v797
        %v830 = vmin.f32 %v675, %v798
        %v831 = vmin.f32 %v676, %v799
        %v832 = vmin.f32 %v677, %v800
        %v833 = vmin.f32 %v678, %v801
        %v834 = vmin.f32 %v679, %v802
        %v835 = vmin.f32 %v680, %v803
        %v836 = vmin.f32 %v681, %v804
        %v837 = vmin.f32 %v682, %v805
        %v838 = vmin.f32 %v683, %v806
        %v839 = vmin.f32 %v684, %v807
        %v840 = vmin.f32 %v685, %v808
        %v841 = vmin.f32 %v686, %v809
        %v842 = vmin.f32 %v687, %v810
        %v843 = vmin.f32 %v688, %v811
        %v844 = vmin.f32 %v689, %v812
        %v845 = vmin.f32 %v690, %v813
        %v846 = vmin.f32 %v691, %v814
        %v847 = vmin.f32 %v692, %v815
        %v848 = vmin.f32 %v693, %v816
        %v849 = vmin.f32 %v694, %v817
        %v850 = vmin.f32 %v695, %v818
        %v851 = vmin.f32 %v696, %v819
        %v852 = vmin.f32 %v697, %v820
        %v853 = vmin.f32 %v698, %v821
        %v854 = vmin.f32 %v699, %v822
        %v855 = vmin.f32 %v700, %v823
        %v856 = vmin.f32 %v701, %v824
        %v857 = vmin.f32 %v702, %v825
        %v858 = vmul.f32 %v826, %v514
        %v859 = vmul.f32 %v827, %v515
        %v860 = vmul.f32 %v828, %v516
        %v861 = vmul.f32 %v829, %v517
        %v862 = vmul.f32 %v830, %v518
        %v863 = vmul.f32 %v831, %v519
        %v864 = vmul.f32 %v832, %v520
        %v865 = vmul.f32 %v833, %v521
        %v866 = vmul.f32 %v834, %v522
        %v867 = vmul.f32 %v835, %v523
        %v868 = vmul.f32 %v836, %v524
        %v869 = vmul.f32 %v837, %v525
        %v870 = vmul.f32 %v838, %v526
        %v871 = vmul.f32 %v839, %v527
        %v872 = vmul.f32 %v840, %v528
        %v873 = vmul.f32 %v841, %v529
        %v874 = vmul.f32 %v842, %v530
        %v875 = vmul.f32 %v843, %v531
        %v876 = vmul.f32 %v844, %v532
        %v877 = vmul.f32 %v845, %v533
        %v878 = vmul.f32 %v846, %v534
        %v879 = vmul.f32 %v847, %v535
        %v880 = vmul.f32 %v848, %v536
        %v881 = vmul.f32 %v849, %v537
        %v882 = vmul.f32 %v850, %v538
        %v883 = vmul.f32 %v851, %v539
        %v884 = vmul.f32 %v852, %v540
        %v885 = vmul.f32 %v853, %v541
        %v886 = vmul.f32 %v854, %v542
        %v887 = vmul.f32 %v855, %v543
        %v888 = vmul.f32 %v856, %v544
        %v889 = vmul.f32 %v857, %v545
        %v890 = vld [vmem:[#allocation2] sm:$0xff]
        %v891 = vld [vmem:[#allocation2 + $0x8] sm:$0xff]
        %v892 = vld [vmem:[#allocation2 + $0x10] sm:$0xff]
        %v893 = vld [vmem:[#allocation2 + $0x18] sm:$0xff]
        %v894 = vld [vmem:[#allocation2 + $0x20] sm:$0xff]
        %v895 = vld [vmem:[#allocation2 + $0x28] sm:$0xff]
        %v896 = vld [vmem:[#allocation2 + $0x30] sm:$0xff]
        %v897 = vld [vmem:[#allocation2 + $0x38] sm:$0xff]
        %v898 = vld [vmem:[#allocation2 + $0x40] sm:$0xff]
        %v899 = vld [vmem:[#allocation2 + $0x48] sm:$0xff]
        %v900 = vld [vmem:[#allocation2 + $0x50] sm:$0xff]
        %v901 = vld [vmem:[#allocation2 + $0x58] sm:$0xff]
        %v902 = vld [vmem:[#allocation2 + $0x60] sm:$0xff]
        %v903 = vld [vmem:[#allocation2 + $0x68] sm:$0xff]
        %v904 = vld [vmem:[#allocation2 + $0x70] sm:$0xff]
        %v905 = vld [vmem:[#allocation2 + $0x78] sm:$0xff]
        %v906 = vld [vmem:[%s433] sm:$0xff]
        %v907 = vld [vmem:[%s433 + $0x8] sm:$0xff]
        %v908 = vld [vmem:[%s433 + $0x10] sm:$0xff]
        %v909 = vld [vmem:[%s433 + $0x18] sm:$0xff]
        %v910 = vld [vmem:[%s433 + $0x20] sm:$0xff]
        %v911 = vld [vmem:[%s433 + $0x28] sm:$0xff]
        %v912 = vld [vmem:[%s433 + $0x30] sm:$0xff]
        %v913 = vld [vmem:[%s433 + $0x38] sm:$0xff]
        %v914 = vld [vmem:[%s433 + $0x40] sm:$0xff]
        %v915 = vld [vmem:[%s433 + $0x48] sm:$0xff]
        %v916 = vld [vmem:[%s433 + $0x50] sm:$0xff]
        %v917 = vld [vmem:[%s433 + $0x58] sm:$0xff]
        %v918 = vld [vmem:[%s433 + $0x60] sm:$0xff]
        %v919 = vld [vmem:[%s433 + $0x68] sm:$0xff]
        %v920 = vld [vmem:[%s433 + $0x70] sm:$0xff]
        %v921 = vld [vmem:[%s433 + $0x78] sm:$0xff]
        %v922 = vld [vmem:[%s433 + $0x80] sm:$0xff]
        %v923 = vld [vmem:[%s433 + $0x88] sm:$0xff]
        %v924 = vld [vmem:[%s433 + $0x90] sm:$0xff]
        %v925 = vld [vmem:[%s433 + $0x98] sm:$0xff]
        %v926 = vld [vmem:[%s433 + $0xa0] sm:$0xff]
        %v927 = vld [vmem:[%s433 + $0xa8] sm:$0xff]
        %v928 = vld [vmem:[%s433 + $0xb0] sm:$0xff]
        %v929 = vld [vmem:[%s433 + $0xb8] sm:$0xff]
        %v930 = vld [vmem:[%s433 + $0xc0] sm:$0xff]
        %v931 = vld [vmem:[%s433 + $0xc8] sm:$0xff]
        %v932 = vld [vmem:[%s433 + $0xd0] sm:$0xff]
        %v933 = vld [vmem:[%s433 + $0xd8] sm:$0xff]
        %v934 = vld [vmem:[%s433 + $0xe0] sm:$0xff]
        %v935 = vld [vmem:[%s433 + $0xe8] sm:$0xff]
        %v936 = vld [vmem:[%s433 + $0xf0] sm:$0xff]
        %v937 = vld [vmem:[%s433 + $0xf8] sm:$0xff]
        %938 = vmatprep.subr.mxu0 0.0
        %939 = vmatpush1.msra.mxu0 %v906
        %940 = vmatprep.subr.mxu0 0.0
        %941 = vmatpush1.msra.mxu0 %v907
        %942 = vmatprep.subr.mxu0 0.0
        %943 = vmatpush1.msra.mxu0 %v908
        %944 = vmatprep.subr.mxu0 0.0
        %945 = vmatpush1.msra.mxu0 %v909
        %946 = vmatprep.subr.mxu0 0.0
        %947 = vmatpush1.msra.mxu0 %v910
        %948 = vmatprep.subr.mxu0 0.0
        %949 = vmatpush1.msra.mxu0 %v911
        %950 = vmatprep.subr.mxu0 0.0
        %951 = vmatpush1.msra.mxu0 %v912
        %952 = vmatprep.subr.mxu0 0.0
        %953 = vmatpush1.msra.mxu0 %v913
        %954 = vmatprep.subr.mxu0 0.0
        %955 = vmatpush1.msra.mxu0 %v914
        %956 = vmatprep.subr.mxu0 0.0
        %957 = vmatpush1.msra.mxu0 %v915
        %958 = vmatprep.subr.mxu0 0.0
        %959 = vmatpush1.msra.mxu0 %v916
        %960 = vmatprep.subr.mxu0 0.0
        %961 = vmatpush1.msra.mxu0 %v917
        %962 = vmatprep.subr.mxu0 0.0
        %963 = vmatpush1.msra.mxu0 %v918
        %964 = vmatprep.subr.mxu0 0.0
        %965 = vmatpush1.msra.mxu0 %v919
        %966 = vmatprep.subr.mxu0 0.0
        %967 = vmatpush1.msra.mxu0 %v920
        %968 = vmatprep.subr.mxu0 0.0
        %969 = vmatpush1.msra.mxu0 %v921
        %970 = vmatprep.subr.mxu0 0.0
        %971 = vmatpush1.msra.mxu0 %v922
        %972 = vmatprep.subr.mxu0 0.0
        %973 = vmatpush1.msra.mxu0 %v923
        %974 = vmatprep.subr.mxu0 0.0
        %975 = vmatpush1.msra.mxu0 %v924
        %976 = vmatprep.subr.mxu0 0.0
        %977 = vmatpush1.msra.mxu0 %v925
        %978 = vmatprep.subr.mxu0 0.0
        %979 = vmatpush1.msra.mxu0 %v926
        %980 = vmatprep.subr.mxu0 0.0
        %981 = vmatpush1.msra.mxu0 %v927
        %982 = vmatprep.subr.mxu0 0.0
        %983 = vmatpush1.msra.mxu0 %v928
        %984 = vmatprep.subr.mxu0 0.0
        %985 = vmatpush1.msra.mxu0 %v929
        %986 = vmatprep.subr.mxu0 0.0
        %987 = vmatpush1.msra.mxu0 %v930
        %988 = vmatprep.subr.mxu0 0.0
        %989 = vmatpush1.msra.mxu0 %v931
        %990 = vmatprep.subr.mxu0 0.0
        %991 = vmatpush1.msra.mxu0 %v932
        %992 = vmatprep.subr.mxu0 0.0
        %993 = vmatpush1.msra.mxu0 %v933
        %994 = vmatprep.subr.mxu0 0.0
        %995 = vmatpush1.msra.mxu0 %v934
        %996 = vmatprep.subr.mxu0 0.0
        %997 = vmatpush1.msra.mxu0 %v935
        %998 = vmatprep.subr.mxu0 0.0
        %999 = vmatpush1.msra.mxu0 %v936
        %1000 = vmatprep.subr.mxu0 0.0
        %1001 = vmatpush1.msra.mxu0 %v937
        %1002 = vmatprep.mubr.f32.mxu0 %v859
        %1003 = vmatmul.mubr.f32.gmra.mrb[0].mxu0 %v858
        %v1004 = vpop.f32.mrb[0].mxu0
        %v1005 = vadd.f32 0.0, %v1004
        %v1006 = vpop.f32.mrb[0].mxu0
        %1007 = vmatprep.mubr.f32.mxu0 %v861
        %1008 = vmatmul.mubr.f32.gmra.mrb[0].mxu0 %v860
        %v1009 = vpop.f32.mrb[0].mxu0
        %v1010 = vadd.f32 0.0, %v1009
        %v1011 = vpop.f32.mrb[0].mxu0
        %1012 = vmatprep.mubr.f32.mxu0 %v863
        %1013 = vmatmul.mubr.f32.gmra.mrb[0].mxu0 %v862
        %v1014 = vpop.f32.mrb[0].mxu0
        %v1015 = vadd.f32 0.0, %v1014
        %v1016 = vpop.f32.mrb[0].mxu0
        %1017 = vmatprep.mubr.f32.mxu0 %v865
        %1018 = vmatmul.mubr.f32.gmra.mrb[0].mxu0 %v864
        %v1019 = vpop.f32.mrb[0].mxu0
        %v1020 = vadd.f32 0.0, %v1019
        %v1021 = vpop.f32.mrb[0].mxu0
        %1022 = vmatprep.mubr.f32.mxu0 %v867
        %1023 = vmatmul.mubr.f32.gmra.mrb[0].mxu0 %v866
        %v1024 = vpop.f32.mrb[0].mxu0
        %v1025 = vadd.f32 0.0, %v1024
        %v1026 = vpop.f32.mrb[0].mxu0
        %1027 = vmatprep.mubr.f32.mxu0 %v869
        %1028 = vmatmul.mubr.f32.gmra.mrb[0].mxu0 %v868
        %v1029 = vpop.f32.mrb[0].mxu0
        %v1030 = vadd.f32 0.0, %v1029
        %v1031 = vpop.f32.mrb[0].mxu0
        %1032 = vmatprep.mubr.f32.mxu0 %v871
        %1033 = vmatmul.mubr.f32.gmra.mrb[0].mxu0 %v870
        %v1034 = vpop.f32.mrb[0].mxu0
        %v1035 = vadd.f32 0.0, %v1034
        %v1036 = vpop.f32.mrb[0].mxu0
        %1037 = vmatprep.mubr.f32.mxu0 %v873
        %1038 = vmatmul.mubr.f32.gmra.mrb[0].mxu0 %v872
        %v1039 = vpop.f32.mrb[0].mxu0
        %v1040 = vadd.f32 0.0, %v1039
        %v1041 = vpop.f32.mrb[0].mxu0
        %1042 = vmatprep.mubr.f32.mxu0 %v875
        %1043 = vmatmul.mubr.f32.gmra.mrb[0].mxu0 %v874
        %v1044 = vpop.f32.mrb[0].mxu0
        %v1045 = vadd.f32 0.0, %v1044
        %v1046 = vpop.f32.mrb[0].mxu0
        %1047 = vmatprep.mubr.f32.mxu0 %v877
        %1048 = vmatmul.mubr.f32.gmra.mrb[0].mxu0 %v876
        %v1049 = vpop.f32.mrb[0].mxu0
        %v1050 = vadd.f32 0.0, %v1049
        %v1051 = vpop.f32.mrb[0].mxu0
        %1052 = vmatprep.mubr.f32.mxu0 %v879
        %1053 = vmatmul.mubr.f32.gmra.mrb[0].mxu0 %v878
        %v1054 = vpop.f32.mrb[0].mxu0
        %v1055 = vadd.f32 0.0, %v1054
        %v1056 = vpop.f32.mrb[0].mxu0
        %1057 = vmatprep.mubr.f32.mxu0 %v881
        %1058 = vmatmul.mubr.f32.gmra.mrb[0].mxu0 %v880
        %v1059 = vpop.f32.mrb[0].mxu0
        %v1060 = vadd.f32 0.0, %v1059
        %v1061 = vpop.f32.mrb[0].mxu0
        %1062 = vmatprep.mubr.f32.mxu0 %v883
        %1063 = vmatmul.mubr.f32.gmra.mrb[0].mxu0 %v882
        %v1064 = vpop.f32.mrb[0].mxu0
        %v1065 = vadd.f32 0.0, %v1064
        %v1066 = vpop.f32.mrb[0].mxu0
        %1067 = vmatprep.mubr.f32.mxu0 %v885
        %1068 = vmatmul.mubr.f32.gmra.mrb[0].mxu0 %v884
        %v1069 = vpop.f32.mrb[0].mxu0
        %v1070 = vadd.f32 0.0, %v1069
        %v1071 = vpop.f32.mrb[0].mxu0
        %1072 = vmatprep.mubr.f32.mxu0 %v887
        %1073 = vmatmul.mubr.f32.gmra.mrb[0].mxu0 %v886
        %v1074 = vpop.f32.mrb[0].mxu0
        %v1075 = vadd.f32 0.0, %v1074
        %v1076 = vpop.f32.mrb[0].mxu0
        %1077 = vmatprep.mubr.f32.mxu0 %v889
        %1078 = vmatmul.mubr.f32.gmra.mrb[0].mxu0 %v888
        %v1079 = vpop.f32.mrb[0].mxu0
        %v1080 = vadd.f32 0.0, %v1079
        %v1081 = vpop.f32.mrb[0].mxu0
        %1082 = vdwg.mxu0
        %v1083 = vadd.f32 %v890, %v1005
        %v1084 = vadd.f32 %v891, %v1010
        %v1085 = vadd.f32 %v892, %v1015
        %v1086 = vadd.f32 %v893, %v1020
        %v1087 = vadd.f32 %v894, %v1025
        %v1088 = vadd.f32 %v895, %v1030
        %v1089 = vadd.f32 %v896, %v1035
        %v1090 = vadd.f32 %v897, %v1040
        %v1091 = vadd.f32 %v898, %v1045
        %v1092 = vadd.f32 %v899, %v1050
        %v1093 = vadd.f32 %v900, %v1055
        %v1094 = vadd.f32 %v901, %v1060
        %v1095 = vadd.f32 %v902, %v1065
        %v1096 = vadd.f32 %v903, %v1070
        %v1097 = vadd.f32 %v904, %v1075
        %v1098 = vadd.f32 %v905, %v1080
        %vm1099 = vcmask 138240
        %1100 = vst.msk [vmem:[#allocation2] sm:$0xff] %vm1099, %v1083
        %1101 = vst.msk [vmem:[#allocation2 + $0x8] sm:$0xff] %vm1099, %v1084
        %1102 = vst.msk [vmem:[#allocation2 + $0x10] sm:$0xff] %vm1099, %v1085
        %1103 = vst.msk [vmem:[#allocation2 + $0x18] sm:$0xff] %vm1099, %v1086
        %1104 = vst.msk [vmem:[#allocation2 + $0x20] sm:$0xff] %vm1099, %v1087
        %1105 = vst.msk [vmem:[#allocation2 + $0x28] sm:$0xff] %vm1099, %v1088
        %1106 = vst.msk [vmem:[#allocation2 + $0x30] sm:$0xff] %vm1099, %v1089
        %1107 = vst.msk [vmem:[#allocation2 + $0x38] sm:$0xff] %vm1099, %v1090
        %1108 = vst.msk [vmem:[#allocation2 + $0x40] sm:$0xff] %vm1099, %v1091
        %1109 = vst.msk [vmem:[#allocation2 + $0x48] sm:$0xff] %vm1099, %v1092
        %1110 = vst.msk [vmem:[#allocation2 + $0x50] sm:$0xff] %vm1099, %v1093
        %1111 = vst.msk [vmem:[#allocation2 + $0x58] sm:$0xff] %vm1099, %v1094
        %1112 = vst.msk [vmem:[#allocation2 + $0x60] sm:$0xff] %vm1099, %v1095
        %1113 = vst.msk [vmem:[#allocation2 + $0x68] sm:$0xff] %vm1099, %v1096
        %1114 = vst.msk [vmem:[#allocation2 + $0x70] sm:$0xff] %vm1099, %v1097
        %1115 = vst.msk [vmem:[#allocation2 + $0x78] sm:$0xff] %vm1099, %v1098
        // Predicated region
        $region79: #{_lambda_.4} parent=69 // pred_check
          %p1116 = pneg %p453
        $region80: #{_lambda_.4} parent=69 // pred_check_branch
          %1118 = sbr.rel (%p1116) target = $region82
        $region81: #{_lambda_.4} parent=69 // pred_region
          %v1119 = vld [vmem:[#allocation2] sm:$0xff]
          %v1120 = vld [vmem:[#allocation2 + $0x8] sm:$0xff]
          %v1121 = vld [vmem:[#allocation2 + $0x10] sm:$0xff]
          %v1122 = vld [vmem:[#allocation2 + $0x18] sm:$0xff]
          %v1123 = vld [vmem:[#allocation2 + $0x20] sm:$0xff]
          %v1124 = vld [vmem:[#allocation2 + $0x28] sm:$0xff]
          %v1125 = vld [vmem:[#allocation2 + $0x30] sm:$0xff]
          %v1126 = vld [vmem:[#allocation2 + $0x38] sm:$0xff]
          %v1127 = vld [vmem:[#allocation2 + $0x40] sm:$0xff]
          %v1128 = vld [vmem:[#allocation2 + $0x48] sm:$0xff]
          %v1129 = vld [vmem:[#allocation2 + $0x50] sm:$0xff]
          %v1130 = vld [vmem:[#allocation2 + $0x58] sm:$0xff]
          %v1131 = vld [vmem:[#allocation2 + $0x60] sm:$0xff]
          %v1132 = vld [vmem:[#allocation2 + $0x68] sm:$0xff]
          %v1133 = vld [vmem:[#allocation2 + $0x70] sm:$0xff]
          %v1134 = vld [vmem:[#allocation2 + $0x78] sm:$0xff]
          %v1135 = vmax.f32 %v1119, 1e-30
          %v1136 = vmax.f32 %v1120, 1e-30
          %v1137 = vmax.f32 %v1121, 1e-30
          %v1138 = vmax.f32 %v1122, 1e-30
          %v1139 = vmax.f32 %v1123, 1e-30
          %v1140 = vmax.f32 %v1124, 1e-30
          %v1141 = vmax.f32 %v1125, 1e-30
          %v1142 = vmax.f32 %v1126, 1e-30
          %v1143 = vmax.f32 %v1127, 1e-30
          %v1144 = vmax.f32 %v1128, 1e-30
          %v1145 = vmax.f32 %v1129, 1e-30
          %v1146 = vmax.f32 %v1130, 1e-30
          %v1147 = vmax.f32 %v1131, 1e-30
          %v1148 = vmax.f32 %v1132, 1e-30
          %v1149 = vmax.f32 %v1133, 1e-30
          %v1150 = vmax.f32 %v1134, 1e-30
          %1152 = vset.pattern.permute.xlu0 16
          %1153 = vperm.xlu0 %1152, %v1135
          %v1154 = vpop.permute.xlu0 %1153
          %1157 = vset.pattern.permute.xlu0 16
          %1158 = vperm.xlu0 %1157, %v1136
          %v1159 = vpop.permute.xlu0 %1158
          %1162 = vset.pattern.permute.xlu0 16
          %1163 = vperm.xlu0 %1162, %v1137
          %v1164 = vpop.permute.xlu0 %1163
          %1167 = vset.pattern.permute.xlu0 16
          %1168 = vperm.xlu0 %1167, %v1138
          %v1169 = vpop.permute.xlu0 %1168
          %1172 = vset.pattern.permute.xlu0 16
          %1173 = vperm.xlu0 %1172, %v1139
          %v1174 = vpop.permute.xlu0 %1173
          %1177 = vset.pattern.permute.xlu0 16
          %1178 = vperm.xlu0 %1177, %v1140
          %v1179 = vpop.permute.xlu0 %1178
          %1182 = vset.pattern.permute.xlu0 16
          %1183 = vperm.xlu0 %1182, %v1141
          %v1184 = vpop.permute.xlu0 %1183
          %1187 = vset.pattern.permute.xlu0 16
          %1188 = vperm.xlu0 %1187, %v1142
          %v1189 = vpop.permute.xlu0 %1188
          %1192 = vset.pattern.permute.xlu0 16
          %1193 = vperm.xlu0 %1192, %v1143
          %v1194 = vpop.permute.xlu0 %1193
          %1197 = vset.pattern.permute.xlu0 16
          %1198 = vperm.xlu0 %1197, %v1144
          %v1199 = vpop.permute.xlu0 %1198
          %1202 = vset.pattern.permute.xlu0 16
          %1203 = vperm.xlu0 %1202, %v1145
          %v1204 = vpop.permute.xlu0 %1203
          %1207 = vset.pattern.permute.xlu0 16
          %1208 = vperm.xlu0 %1207, %v1146
          %v1209 = vpop.permute.xlu0 %1208
          %1212 = vset.pattern.permute.xlu0 16
          %1213 = vperm.xlu0 %1212, %v1147
          %v1214 = vpop.permute.xlu0 %1213
          %1217 = vset.pattern.permute.xlu0 16
          %1218 = vperm.xlu0 %1217, %v1148
          %v1219 = vpop.permute.xlu0 %1218
          %1222 = vset.pattern.permute.xlu0 16
          %1223 = vperm.xlu0 %1222, %v1149
          %v1224 = vpop.permute.xlu0 %1223
          %1227 = vset.pattern.permute.xlu0 16
          %1228 = vperm.xlu0 %1227, %v1150
          %v1229 = vpop.permute.xlu0 %1228
          %v1231 = vrcp.pop %v1154
          %v1232 = vmul.f32 %v1119, %v1231
          %v1233 = vrcp.pop %v1159
          %v1234 = vmul.f32 %v1120, %v1233
          %v1235 = vrcp.pop %v1164
          %v1236 = vmul.f32 %v1121, %v1235
          %v1237 = vrcp.pop %v1169
          %v1238 = vmul.f32 %v1122, %v1237
          %v1239 = vrcp.pop %v1174
          %v1240 = vmul.f32 %v1123, %v1239
          %v1241 = vrcp.pop %v1179
          %v1242 = vmul.f32 %v1124, %v1241
          %v1243 = vrcp.pop %v1184
          %v1244 = vmul.f32 %v1125, %v1243
          %v1245 = vrcp.pop %v1189
          %v1246 = vmul.f32 %v1126, %v1245
          %v1247 = vrcp.pop %v1194
          %v1248 = vmul.f32 %v1127, %v1247
          %v1249 = vrcp.pop %v1199
          %v1250 = vmul.f32 %v1128, %v1249
          %v1251 = vrcp.pop %v1204
          %v1252 = vmul.f32 %v1129, %v1251
          %v1253 = vrcp.pop %v1209
          %v1254 = vmul.f32 %v1130, %v1253
          %v1255 = vrcp.pop %v1214
          %v1256 = vmul.f32 %v1131, %v1255
          %v1257 = vrcp.pop %v1219
          %v1258 = vmul.f32 %v1132, %v1257
          %v1259 = vrcp.pop %v1224
          %v1260 = vmul.f32 %v1133, %v1259
          %v1261 = vrcp.pop %v1229
          %v1262 = vmul.f32 %v1134, %v1261
          %vm1263 = vcmp.gt.f32.partialorder %v1232, 0.0
          %vm1264 = vcmp.gt.f32.partialorder %v1234, 0.0
          %vm1265 = vcmp.gt.f32.partialorder %v1236, 0.0
          %vm1266 = vcmp.gt.f32.partialorder %v1238, 0.0
          %vm1267 = vcmp.gt.f32.partialorder %v1240, 0.0
          %vm1268 = vcmp.gt.f32.partialorder %v1242, 0.0
          %vm1269 = vcmp.gt.f32.partialorder %v1244, 0.0
          %vm1270 = vcmp.gt.f32.partialorder %v1246, 0.0
          %vm1271 = vcmp.gt.f32.partialorder %v1248, 0.0
          %vm1272 = vcmp.gt.f32.partialorder %v1250, 0.0
          %vm1273 = vcmp.gt.f32.partialorder %v1252, 0.0
          %vm1274 = vcmp.gt.f32.partialorder %v1254, 0.0
          %vm1275 = vcmp.gt.f32.partialorder %v1256, 0.0
          %vm1276 = vcmp.gt.f32.partialorder %v1258, 0.0
          %vm1277 = vcmp.gt.f32.partialorder %v1260, 0.0
          %vm1278 = vcmp.gt.f32.partialorder %v1262, 0.0
          %v1279 = vmin.f32 %v1232, 0.0
          %v1280 = vmin.f32 %v1234, 0.0
          %v1281 = vmin.f32 %v1236, 0.0
          %v1282 = vmin.f32 %v1238, 0.0
          %v1283 = vmin.f32 %v1240, 0.0
          %v1284 = vmin.f32 %v1242, 0.0
          %v1285 = vmin.f32 %v1244, 0.0
          %v1286 = vmin.f32 %v1246, 0.0
          %v1287 = vmin.f32 %v1248, 0.0
          %v1288 = vmin.f32 %v1250, 0.0
          %v1289 = vmin.f32 %v1252, 0.0
          %v1290 = vmin.f32 %v1254, 0.0
          %v1291 = vmin.f32 %v1256, 0.0
          %v1292 = vmin.f32 %v1258, 0.0
          %v1293 = vmin.f32 %v1260, 0.0
          %v1294 = vmin.f32 %v1262, 0.0
          %v1295 = vmul.f32 %v1279, 1.442695
          %v1296 = vpow.pop %v1295
          %v1297 = vmul.f32 %v1280, 1.442695
          %v1298 = vpow.pop %v1297
          %v1299 = vmul.f32 %v1281, 1.442695
          %v1300 = vpow.pop %v1299
          %v1301 = vmul.f32 %v1282, 1.442695
          %v1302 = vpow.pop %v1301
          %v1303 = vmul.f32 %v1283, 1.442695
          %v1304 = vpow.pop %v1303
          %v1305 = vmul.f32 %v1284, 1.442695
          %v1306 = vpow.pop %v1305
          %v1307 = vmul.f32 %v1285, 1.442695
          %v1308 = vpow.pop %v1307
          %v1309 = vmul.f32 %v1286, 1.442695
          %v1310 = vpow.pop %v1309
          %v1311 = vmul.f32 %v1287, 1.442695
          %v1312 = vpow.pop %v1311
          %v1313 = vmul.f32 %v1288, 1.442695
          %v1314 = vpow.pop %v1313
          %v1315 = vmul.f32 %v1289, 1.442695
          %v1316 = vpow.pop %v1315
          %v1317 = vmul.f32 %v1290, 1.442695
          %v1318 = vpow.pop %v1317
          %v1319 = vmul.f32 %v1291, 1.442695
          %v1320 = vpow.pop %v1319
          %v1321 = vmul.f32 %v1292, 1.442695
          %v1322 = vpow.pop %v1321
          %v1323 = vmul.f32 %v1293, 1.442695
          %v1324 = vpow.pop %v1323
          %v1325 = vmul.f32 %v1294, 1.442695
          %v1326 = vpow.pop %v1325
          %v1327 = vsub.f32 %v1296, 1.0
          %v1328 = vsub.f32 %v1298, 1.0
          %v1329 = vsub.f32 %v1300, 1.0
          %v1330 = vsub.f32 %v1302, 1.0
          %v1331 = vsub.f32 %v1304, 1.0
          %v1332 = vsub.f32 %v1306, 1.0
          %v1333 = vsub.f32 %v1308, 1.0
          %v1334 = vsub.f32 %v1310, 1.0
          %v1335 = vsub.f32 %v1312, 1.0
          %v1336 = vsub.f32 %v1314, 1.0
          %v1337 = vsub.f32 %v1316, 1.0
          %v1338 = vsub.f32 %v1318, 1.0
          %v1339 = vsub.f32 %v1320, 1.0
          %v1340 = vsub.f32 %v1322, 1.0
          %v1341 = vsub.f32 %v1324, 1.0
          %v1342 = vsub.f32 %v1326, 1.0
          %v1343 = vsel %vm1263, %v1232, %v1327
          %v1344 = vsel %vm1264, %v1234, %v1328
          %v1345 = vsel %vm1265, %v1236, %v1329
          %v1346 = vsel %vm1266, %v1238, %v1330
          %v1347 = vsel %vm1267, %v1240, %v1331
          %v1348 = vsel %vm1268, %v1242, %v1332
          %v1349 = vsel %vm1269, %v1244, %v1333
          %v1350 = vsel %vm1270, %v1246, %v1334
          %v1351 = vsel %vm1271, %v1248, %v1335
          %v1352 = vsel %vm1272, %v1250, %v1336
          %v1353 = vsel %vm1273, %v1252, %v1337
          %v1354 = vsel %vm1274, %v1254, %v1338
          %v1355 = vsel %vm1275, %v1256, %v1339
          %v1356 = vsel %vm1276, %v1258, %v1340
          %v1357 = vsel %vm1277, %v1260, %v1341
          %v1358 = vsel %vm1278, %v1262, %v1342
          %vm1359 = vcmask 130048
          %v1360 = vsel %vm1359, %v1343, 0.0
          %v1361 = vsel %vm1359, %v1344, 0.0
          %v1362 = vsel %vm1359, %v1345, 0.0
          %v1363 = vsel %vm1359, %v1346, 0.0
          %v1364 = vsel %vm1359, %v1347, 0.0
          %v1365 = vsel %vm1359, %v1348, 0.0
          %v1366 = vsel %vm1359, %v1349, 0.0
          %v1367 = vsel %vm1359, %v1350, 0.0
          %v1368 = vsel %vm1359, %v1351, 0.0
          %v1369 = vsel %vm1359, %v1352, 0.0
          %v1370 = vsel %vm1359, %v1353, 0.0
          %v1371 = vsel %vm1359, %v1354, 0.0
          %v1372 = vsel %vm1359, %v1355, 0.0
          %v1373 = vsel %vm1359, %v1356, 0.0
          %v1374 = vsel %vm1359, %v1357, 0.0
          %v1375 = vsel %vm1359, %v1358, 0.0
          %1376 = vst [vmem:[%s451] sm:$0xff] %v1360
          %1377 = vst [vmem:[%s451 + $0x8] sm:$0xff] %v1361
          %1378 = vst [vmem:[%s451 + $0x10] sm:$0xff] %v1362
          %1379 = vst [vmem:[%s451 + $0x18] sm:$0xff] %v1363
          %1380 = vst [vmem:[%s451 + $0x20] sm:$0xff] %v1364
          %1381 = vst [vmem:[%s451 + $0x28] sm:$0xff] %v1365
          %1382 = vst [vmem:[%s451 + $0x30] sm:$0xff] %v1366
          %1383 = vst [vmem:[%s451 + $0x38] sm:$0xff] %v1367
          %1384 = vst [vmem:[%s451 + $0x40] sm:$0xff] %v1368
          %1385 = vst [vmem:[%s451 + $0x48] sm:$0xff] %v1369
          %1386 = vst [vmem:[%s451 + $0x50] sm:$0xff] %v1370
          %1387 = vst [vmem:[%s451 + $0x58] sm:$0xff] %v1371
          %1388 = vst [vmem:[%s451 + $0x60] sm:$0xff] %v1372
          %1389 = vst [vmem:[%s451 + $0x68] sm:$0xff] %v1373
          %1390 = vst [vmem:[%s451 + $0x70] sm:$0xff] %v1374
          %1391 = vst [vmem:[%s451 + $0x78] sm:$0xff] %v1375
        $region82: #{_lambda_.4} parent=69 // pred_fallthru
          _
        %s1392 = smul.u32 16, %s19
        %p1393 = scmp.lt.s32.totalorder %s1392, 31
        %s1394 = scalar_select %p1393, %s1392, 31
        %s1395 = smul.addr %s1394, 8
        %s1396 = scalar_lea.vmem %s4, %s1395
        // Predicated region
        $region83: #{_lambda_.4} parent=69 // pred_check
          %p1397 = pneg %p151
        $region84: #{_lambda_.4} parent=69 // pred_check_branch
          %1399 = sbr.rel (%p1397) target = $region86
        $region85: #{_lambda_.4} parent=69 // pred_region
          %s1400 = smul.u32 16, %s19
        $region86: #{_lambda_.4} parent=69 // pred_fallthru
          _
      $region70: #{_lambda_.4} parent=5 // pred_fallthru
        _
      %p1401 = scmp.le.s32.totalorder 2, %s10
      // Predicated region
      $region87: #{_lambda_.4} parent=5 // pred_check
        %p1402 = pneg %p1401
      $region88: #{_lambda_.4} parent=5 // pred_check_branch
        %1404 = sbr.rel (%p1402) target = $region90
      $region89: #{_lambda_.4} parent=5 // pred_region
        %s1405 = ssub.s32 %s10, 2
        // Predicated region
        $region91: #{_lambda_.4} parent=89 // pred_check
          %p1406 = pneg %p157
        $region92: #{_lambda_.4} parent=89 // pred_check_branch
          %1408 = sbr.rel (%p1406) target = $region94
        $region93: #{_lambda_.4} parent=89 // pred_region
          %s1409 = smul.u32 16, %s21
          %p1410 = scmp.lt.s32.totalorder %s1409, 31
          %s1411 = scalar_select %p1410, %s1409, 31
          %s1412 = smul.addr %s1411, 8
          %s1413 = scalar_lea.vmem %s4, %s1412
        $region94: #{_lambda_.4} parent=89 // pred_fallthru
          _
      $region90: #{_lambda_.4} parent=5 // pred_fallthru
        _
    $region6: #{_lambda_.4} parent=1 // loop_footer
      %s14 = sadd.s32 1, %s10
    $region7: #{_lambda_.4} parent=1 // loop_footer_branch
      %9 = sbr.rel target = $region3
    $region8: #{_lambda_.4} parent=1 // loop_exit
      _

// kernel: _lambda_.3
$region0: #{_lambda_.3}
  #allocation0 [shape = 'u32[]', space=smem, size = 0x4, offset = 0x4, fixed_abs, tag = 'smem constant byte address 0x4 - core index']
  #allocation1 [shape = 'u32[144,128]{1,0:T(1,128)}', space=vmem, size = 0x12000, scoped, tag = 'internal scratch']
  #allocation2 [shape = 'f32[4,128,17]{2,1,0:T(8,128)}', space=vmem, size = 0x40000, scoped, tag = 'scratch operand']
  %s0 = inlined_call_operand.vmem [shape: f32[2,256,4], index: 0, kind: input, shape index: {}]
  %s1 = inlined_call_operand.vmem [shape: f32[2,4,256], index: 1, kind: input, shape index: {}]
  %s2 = inlined_call_operand.vmem [shape: f32[4,256,17], index: 2, kind: input, shape index: {}]
  %s3 = inlined_call_operand.vmem [shape: s8[256,256], index: 3, kind: input, shape index: {}]
  %s4 = inlined_call_operand.vmem [shape: f32[256,128], index: 4, kind: output, shape index: {}]
  %s5 = sld [smem:[#allocation0]]
  $region95: #{_lambda_.3} parent=0
    _
  %s7 = ssub.s32 1, %s5
  %s8 = scalar_select 0, %s7, %s5
  $region1: #{_lambda_.3} parent=0
    #allocation3 [shape = 'u8[262144]{0}', space=vmem, size = 0x40000, scoped, tag = 'input window, operand 0']
    loop: start=0, step=1, limit=4
    $region2: #{_lambda_.3} parent=1 // loop_pre_header
      _
    $region3: #{_lambda_.3} parent=1 // loop_header
      %s10 = sphi 0, %s14
      %p11 = scmp.ge.s32.totalorder %s10, 4
      %s17 = sphi 0, %s29
      %s18 = sphi 0, %s25
      %s19 = sphi 0, %s17
      %s20 = sphi 0, %s18
      %s21 = sphi 0, %s19
      %s22 = sphi 0, %s20
      %s32 = sphi 0, %s34
      %s35 = sphi 0, %s32
      %s36 = sphi 0, %s35
      %s52 = sphi 0, %s36
      %s58 = sphi 0, %s60
      %s61 = sphi 0, %s58
      %s62 = sphi 0, %s61
      %s78 = sphi 0, %s62
      %s84 = sphi 0, %s86
      %s87 = sphi 0, %s84
      %s88 = sphi 0, %s87
      %s104 = sphi 0, %s88
      %s112 = sphi 0, %s114
      %s115 = sphi 0, %s112
      %s116 = sphi 0, %s115
      %s132 = sphi 0, %s116
      %s138 = sphi 0, %s140
      %s141 = sphi 0, %s138
      %s142 = sphi 0, %s141
      %s158 = sphi 0, %s142
    $region4: #{_lambda_.3} parent=1 // loop_header_branch
      %13 = sbr.rel (%p11) target = $region8
    $region5: #{_lambda_.3} parent=1 // loop_body
      %s15 = ssub.s32 %s10, 1
      %s16 = ssub.s32 %s10, 2
      %s23 = sadd.s32 1, %s18
      %p24 = scmp.ge.s32.totalorder %s23, 1
      %s25 = scalar_select %p24, 0, %s23
      %s26 = sadd.s32 1, %s17
      %s27 = scalar_select %p24, %s26, %s17
      %p28 = scmp.ge.s32.totalorder %s27, 2
      %s29 = scalar_select %p28, 0, %s27
      %s30 = ssub.s32 %s17, %s29
      %p31 = scmp.eq.s32.totalorder %s30, 0
      %s33 = sadd.s32 %s32, 1
      %s34 = scalar_select %p31, %s32, %s33
      %p37 = pneg %p31
      %p38 = scmp.eq.s32.totalorder %s10, 1
      %p39 = por %p37, %p38
      %p40 = scmp.ne.s32.totalorder %s32, %s35
      %p41 = scmp.eq.s32.totalorder %s10, 0
      %p42 = por %p40, %p41
      %p43 = scmp.ne.s32.totalorder %s32, %s35
      %p44 = scmp.eq.s32.totalorder %s15, 1
      %p45 = por %p43, %p44
      %p46 = scmp.ne.s32.totalorder %s35, %s36
      %p47 = scmp.eq.s32.totalorder %s15, 0
      %p48 = por %p46, %p47
      %p49 = scmp.ne.s32.totalorder %s35, %s36
      %p50 = scmp.eq.s32.totalorder %s16, 1
      %p51 = por %p49, %p50
      %p53 = scmp.ne.s32.totalorder %s36, %s52
      %p54 = scmp.eq.s32.totalorder %s16, 0
      %p55 = por %p53, %p54
      %s56 = ssub.s32 %s18, %s25
      %p57 = scmp.eq.s32.totalorder %s56, 0
      %s59 = sadd.s32 %s58, 1
      %s60 = scalar_select %p57, %s58, %s59
      %p63 = pneg %p57
      %p64 = scmp.eq.s32.totalorder %s10, 1
      %p65 = por %p63, %p64
      %p66 = scmp.ne.s32.totalorder %s58, %s61
      %p67 = scmp.eq.s32.totalorder %s10, 0
      %p68 = por %p66, %p67
      %p69 = scmp.ne.s32.totalorder %s58, %s61
      %p70 = scmp.eq.s32.totalorder %s15, 1
      %p71 = por %p69, %p70
      %p72 = scmp.ne.s32.totalorder %s61, %s62
      %p73 = scmp.eq.s32.totalorder %s15, 0
      %p74 = por %p72, %p73
      %p75 = scmp.ne.s32.totalorder %s61, %s62
      %p76 = scmp.eq.s32.totalorder %s16, 1
      %p77 = por %p75, %p76
      %p79 = scmp.ne.s32.totalorder %s62, %s78
      %p80 = scmp.eq.s32.totalorder %s16, 0
      %p81 = por %p79, %p80
      %s82 = ssub.s32 %s18, %s25
      %p83 = scmp.eq.s32.totalorder %s82, 0
      %s85 = sadd.s32 %s84, 1
      %s86 = scalar_select %p83, %s84, %s85
      %p89 = pneg %p83
      %p90 = scmp.eq.s32.totalorder %s10, 1
      %p91 = por %p89, %p90
      %p92 = scmp.ne.s32.totalorder %s84, %s87
      %p93 = scmp.eq.s32.totalorder %s10, 0
      %p94 = por %p92, %p93
      %p95 = scmp.ne.s32.totalorder %s84, %s87
      %p96 = scmp.eq.s32.totalorder %s15, 1
      %p97 = por %p95, %p96
      %p98 = scmp.ne.s32.totalorder %s87, %s88
      %p99 = scmp.eq.s32.totalorder %s15, 0
      %p100 = por %p98, %p99
      %p101 = scmp.ne.s32.totalorder %s87, %s88
      %p102 = scmp.eq.s32.totalorder %s16, 1
      %p103 = por %p101, %p102
      %p105 = scmp.ne.s32.totalorder %s88, %s104
      %p106 = scmp.eq.s32.totalorder %s16, 0
      %p107 = por %p105, %p106
      %s108 = ssub.s32 %s17, %s29
      %s109 = ssub.s32 %s18, %s25
      %s110 = sor.u32 %s108, %s109
      %p111 = scmp.eq.s32.totalorder %s110, 0
      %s113 = sadd.s32 %s112, 1
      %s114 = scalar_select %p111, %s112, %s113
      %p117 = pneg %p111
      %p118 = scmp.eq.s32.totalorder %s10, 1
      %p119 = por %p117, %p118
      %p120 = scmp.ne.s32.totalorder %s112, %s115
      %p121 = scmp.eq.s32.totalorder %s10, 0
      %p122 = por %p120, %p121
      %p123 = scmp.ne.s32.totalorder %s112, %s115
      %p124 = scmp.eq.s32.totalorder %s15, 1
      %p125 = por %p123, %p124
      %p126 = scmp.ne.s32.totalorder %s115, %s116
      %p127 = scmp.eq.s32.totalorder %s15, 0
      %p128 = por %p126, %p127
      %p129 = scmp.ne.s32.totalorder %s115, %s116
      %p130 = scmp.eq.s32.totalorder %s16, 1
      %p131 = por %p129, %p130
      %p133 = scmp.ne.s32.totalorder %s116, %s132
      %p134 = scmp.eq.s32.totalorder %s16, 0
      %p135 = por %p133, %p134
      %s136 = ssub.s32 %s17, %s29
      %p137 = scmp.eq.s32.totalorder %s136, 0
      %s139 = sadd.s32 %s138, 1
      %s140 = scalar_select %p137, %s138, %s139
      %p143 = pneg %p137
      %p144 = scmp.eq.s32.totalorder %s10, 1
      %p145 = por %p143, %p144
      %p146 = scmp.ne.s32.totalorder %s138, %s141
      %p147 = scmp.eq.s32.totalorder %s10, 0
      %p148 = por %p146, %p147
      %p149 = scmp.ne.s32.totalorder %s138, %s141
      %p150 = scmp.eq.s32.totalorder %s15, 1
      %p151 = por %p149, %p150
      %p152 = scmp.ne.s32.totalorder %s141, %s142
      %p153 = scmp.eq.s32.totalorder %s15, 0
      %p154 = por %p152, %p153
      %p155 = scmp.ne.s32.totalorder %s141, %s142
      %p156 = scmp.eq.s32.totalorder %s16, 1
      %p157 = por %p155, %p156
      %p159 = scmp.ne.s32.totalorder %s142, %s158
      %p160 = scmp.eq.s32.totalorder %s16, 0
      %p161 = por %p159, %p160
      %p162 = scmp.le.s32.totalorder 1, %s10
      %p163 = scmp.lt.s32.totalorder %s10, 3
      %p164 = pnand %p162, %p163
      %p165 = pneg %p164
      // Predicated region
      $region9: #{_lambda_.3} parent=5 // pred_check
        _
      $region10: #{_lambda_.3} parent=5 // pred_check_branch
        %167 = sbr.rel (%p164) target = $region12
      $region11: #{_lambda_.3} parent=5 // pred_region
        %s168 = ssub.s32 %s10, 1
        // Predicated region
        $region13: #{_lambda_.3} parent=11 // pred_check
          %p169 = pneg %p74
        $region14: #{_lambda_.3} parent=11 // pred_check_branch
          %171 = sbr.rel (%p169) target = $region16
        $region15: #{_lambda_.3} parent=11 // pred_region
          %s172 = smul.u32 2, %s20
          %p173 = scmp.lt.s32.totalorder %s172, 1
          %s174 = scalar_select %p173, %s172, 1
          %s175 = smul.addr %s174, 4
          %s176 = scalar_lea.vmem %s1, %s175
          %s177 = smul.u32 2, %s20
        $region16: #{_lambda_.3} parent=11 // pred_fallthru
          _
        // Predicated region
        $region17: #{_lambda_.3} parent=11 // pred_check
          %p178 = pneg %p100
        $region18: #{_lambda_.3} parent=11 // pred_check_branch
          %180 = sbr.rel (%p178) target = $region20
        $region19: #{_lambda_.3} parent=11 // pred_region
          %s181 = smul.u32 32, %s20
          %p182 = scmp.lt.s32.totalorder %s181, 31
          %s183 = scalar_select %p182, %s181, 31
          %s184 = smul.addr %s183, 8
          %s185 = scalar_lea.vmem %s2, %s184
          %s186 = smul.u32 32, %s20
        $region20: #{_lambda_.3} parent=11 // pred_fallthru
          _
      $region12: #{_lambda_.3} parent=5 // pred_fallthru
        _
      %p187 = scmp.lt.s32.totalorder %s10, 2
      // Predicated region
      $region21: #{_lambda_.3} parent=5 // pred_check
        %p188 = pneg %p187
      $region22: #{_lambda_.3} parent=5 // pred_check_branch
        %190 = sbr.rel (%p188) target = $region24
      $region23: #{_lambda_.3} parent=5 // pred_region
        // Predicated region
        $region25: #{_lambda_.3} parent=23 // pred_check
          %p191 = pneg %p42
        $region26: #{_lambda_.3} parent=23 // pred_check_branch
          %193 = sbr.rel (%p191) target = $region28
        $region27: #{_lambda_.3} parent=23 // pred_region
          %s194 = sand.u32 %s32, 1
          %s195 = sand.u32 %s32, 1
          %s196 = smul.addr %s195, 256
          %s197 = scalar_lea.vmem [#allocation3], %s196
          %s198 = smul.u32 16, %s17
          %s199 = smul.addr %s198, 8
          %s200 = scalar_lea.vmem %s0, %s199
          // Predicated region
          $region29: #{_lambda_.3} parent=27 // pred_check
            _
          $region30: #{_lambda_.3} parent=27 // pred_check_branch
            %202 = sbr.rel (0) target = $region32
          $region31: #{_lambda_.3} parent=27 // pred_region
            // Predicated region
            $region33: #{_lambda_.3} parent=31 // pred_check
              _
            $region34: #{_lambda_.3} parent=31 // pred_check_branch
              %204 = sbr.rel (0) target = $region36
            $region35: #{_lambda_.3} parent=31 // pred_region
              // Predicated region
              $region48: #{_lambda_.3} parent=35 // pred_check
                _
              $region49: #{_lambda_.3} parent=35 // pred_check_branch
                %281 = sbr.rel (0) target = $region51
              $region50: #{_lambda_.3} parent=35 // pred_region
                loop: start=0, step=1, limit=1
                $region52: #{_lambda_.3} parent=50 // loop_pre_header
                  _
                $region53: #{_lambda_.3} parent=50 // loop_header
                  %s283 = sphi 0, %s287
                  %p284 = scmp.ge.s32.totalorder %s283, 1
                  %s288 = sphi %s200, %s200
                  %s289 = sphi %s197, %s197
                $region54: #{_lambda_.3} parent=50 // loop_header_branch
                  %286 = sbr.rel (%p284) target = $region58
                $region55: #{_lambda_.3} parent=50 // loop_body
                  %v290 = vld [vmem:[%s288] sm:$0xff]
                  %291 = vst [vmem:[%s289] sm:$0xff] %v290
                  %v292 = vld [vmem:[%s288 + $0x8] sm:$0xff]
                  %293 = vst [vmem:[%s289 + $0x8] sm:$0xff] %v292
                  %v294 = vld [vmem:[%s288 + $0x10] sm:$0xff]
                  %295 = vst [vmem:[%s289 + $0x10] sm:$0xff] %v294
                  %v296 = vld [vmem:[%s288 + $0x18] sm:$0xff]
                  %297 = vst [vmem:[%s289 + $0x18] sm:$0xff] %v296
                  %v298 = vld [vmem:[%s288 + $0x20] sm:$0xff]
                  %299 = vst [vmem:[%s289 + $0x20] sm:$0xff] %v298
                  %v300 = vld [vmem:[%s288 + $0x28] sm:$0xff]
                  %301 = vst [vmem:[%s289 + $0x28] sm:$0xff] %v300
                  %v302 = vld [vmem:[%s288 + $0x30] sm:$0xff]
                  %303 = vst [vmem:[%s289 + $0x30] sm:$0xff] %v302
                  %v304 = vld [vmem:[%s288 + $0x38] sm:$0xff]
                  %305 = vst [vmem:[%s289 + $0x38] sm:$0xff] %v304
                  %v306 = vld [vmem:[%s288 + $0x40] sm:$0xff]
                  %307 = vst [vmem:[%s289 + $0x40] sm:$0xff] %v306
                  %v308 = vld [vmem:[%s288 + $0x48] sm:$0xff]
                  %309 = vst [vmem:[%s289 + $0x48] sm:$0xff] %v308
                  %v310 = vld [vmem:[%s288 + $0x50] sm:$0xff]
                  %311 = vst [vmem:[%s289 + $0x50] sm:$0xff] %v310
                  %v312 = vld [vmem:[%s288 + $0x58] sm:$0xff]
                  %313 = vst [vmem:[%s289 + $0x58] sm:$0xff] %v312
                  %v314 = vld [vmem:[%s288 + $0x60] sm:$0xff]
                  %315 = vst [vmem:[%s289 + $0x60] sm:$0xff] %v314
                  %v316 = vld [vmem:[%s288 + $0x68] sm:$0xff]
                  %317 = vst [vmem:[%s289 + $0x68] sm:$0xff] %v316
                  %v318 = vld [vmem:[%s288 + $0x70] sm:$0xff]
                  %319 = vst [vmem:[%s289 + $0x70] sm:$0xff] %v318
                  %v320 = vld [vmem:[%s288 + $0x78] sm:$0xff]
                  %321 = vst [vmem:[%s289 + $0x78] sm:$0xff] %v320
                  %v322 = vld [vmem:[%s288 + $0x100] sm:$0xff]
                  %323 = vst [vmem:[%s289 + $0x80] sm:$0xff] %v322
                  %v324 = vld [vmem:[%s288 + $0x108] sm:$0xff]
                  %325 = vst [vmem:[%s289 + $0x88] sm:$0xff] %v324
                  %v326 = vld [vmem:[%s288 + $0x110] sm:$0xff]
                  %327 = vst [vmem:[%s289 + $0x90] sm:$0xff] %v326
                  %v328 = vld [vmem:[%s288 + $0x118] sm:$0xff]
                  %329 = vst [vmem:[%s289 + $0x98] sm:$0xff] %v328
                  %v330 = vld [vmem:[%s288 + $0x120] sm:$0xff]
                  %331 = vst [vmem:[%s289 + $0xa0] sm:$0xff] %v330
                  %v332 = vld [vmem:[%s288 + $0x128] sm:$0xff]
                  %333 = vst [vmem:[%s289 + $0xa8] sm:$0xff] %v332
                  %v334 = vld [vmem:[%s288 + $0x130] sm:$0xff]
                  %335 = vst [vmem:[%s289 + $0xb0] sm:$0xff] %v334
                  %v336 = vld [vmem:[%s288 + $0x138] sm:$0xff]
                  %337 = vst [vmem:[%s289 + $0xb8] sm:$0xff] %v336
                  %v338 = vld [vmem:[%s288 + $0x140] sm:$0xff]
                  %339 = vst [vmem:[%s289 + $0xc0] sm:$0xff] %v338
                  %v340 = vld [vmem:[%s288 + $0x148] sm:$0xff]
                  %341 = vst [vmem:[%s289 + $0xc8] sm:$0xff] %v340
                  %v342 = vld [vmem:[%s288 + $0x150] sm:$0xff]
                  %343 = vst [vmem:[%s289 + $0xd0] sm:$0xff] %v342
                  %v344 = vld [vmem:[%s288 + $0x158] sm:$0xff]
                  %345 = vst [vmem:[%s289 + $0xd8] sm:$0xff] %v344
                  %v346 = vld [vmem:[%s288 + $0x160] sm:$0xff]
                  %347 = vst [vmem:[%s289 + $0xe0] sm:$0xff] %v346
                  %v348 = vld [vmem:[%s288 + $0x168] sm:$0xff]
                  %349 = vst [vmem:[%s289 + $0xe8] sm:$0xff] %v348
                  %v350 = vld [vmem:[%s288 + $0x170] sm:$0xff]
                  %351 = vst [vmem:[%s289 + $0xf0] sm:$0xff] %v350
                  %v352 = vld [vmem:[%s288 + $0x178] sm:$0xff]
                  %353 = vst [vmem:[%s289 + $0xf8] sm:$0xff] %v352
                $region56: #{_lambda_.3} parent=50 // loop_footer
                  %s287 = sadd.s32 1, %s283
                $region57: #{_lambda_.3} parent=50 // loop_footer_branch
                  %282 = sbr.rel target = $region53
                $region58: #{_lambda_.3} parent=50 // loop_exit
                  _
              $region51: #{_lambda_.3} parent=35 // pred_fallthru
                _
              // Predicated region
              $region59: #{_lambda_.3} parent=35 // pred_check
                _
              $region60: #{_lambda_.3} parent=35 // pred_check_branch
                %355 = sbr.rel target = $region62
              $region61: #{_lambda_.3} parent=35 // pred_region
                _
              $region62: #{_lambda_.3} parent=35 // pred_fallthru
                _
            $region36: #{_lambda_.3} parent=31 // pred_fallthru
              _
            // Predicated region
            $region37: #{_lambda_.3} parent=31 // pred_check
              _
            $region38: #{_lambda_.3} parent=31 // pred_check_branch
              %206 = sbr.rel target = $region40
            $region39: #{_lambda_.3} parent=31 // pred_region
              loop: start=0, step=1, limit=1
              $region41: #{_lambda_.3} parent=39 // loop_pre_header
                _
              $region42: #{_lambda_.3} parent=39 // loop_header
                %s209 = sphi 0, %s213
                %p210 = scmp.ge.s32.totalorder %s209, 1
                %s214 = sphi %s200, %s200
                %s215 = sphi %s197, %s197
              $region43: #{_lambda_.3} parent=39 // loop_header_branch
                %212 = sbr.rel (%p210) target = $region47
              $region44: #{_lambda_.3} parent=39 // loop_body
                %v216 = vld [vmem:[%s214] sm:$0xff]
                %217 = vst [vmem:[%s215] sm:$0xff] %v216
                %v218 = vld [vmem:[%s214 + $0x8] sm:$0xff]
                %219 = vst [vmem:[%s215 + $0x8] sm:$0xff] %v218
                %v220 = vld [vmem:[%s214 + $0x10] sm:$0xff]
                %221 = vst [vmem:[%s215 + $0x10] sm:$0xff] %v220
                %v222 = vld [vmem:[%s214 + $0x18] sm:$0xff]
                %223 = vst [vmem:[%s215 + $0x18] sm:$0xff] %v222
                %v224 = vld [vmem:[%s214 + $0x20] sm:$0xff]
                %225 = vst [vmem:[%s215 + $0x20] sm:$0xff] %v224
                %v226 = vld [vmem:[%s214 + $0x28] sm:$0xff]
                %227 = vst [vmem:[%s215 + $0x28] sm:$0xff] %v226
                %v228 = vld [vmem:[%s214 + $0x30] sm:$0xff]
                %229 = vst [vmem:[%s215 + $0x30] sm:$0xff] %v228
                %v230 = vld [vmem:[%s214 + $0x38] sm:$0xff]
                %231 = vst [vmem:[%s215 + $0x38] sm:$0xff] %v230
                %v232 = vld [vmem:[%s214 + $0x40] sm:$0xff]
                %233 = vst [vmem:[%s215 + $0x40] sm:$0xff] %v232
                %v234 = vld [vmem:[%s214 + $0x48] sm:$0xff]
                %235 = vst [vmem:[%s215 + $0x48] sm:$0xff] %v234
                %v236 = vld [vmem:[%s214 + $0x50] sm:$0xff]
                %237 = vst [vmem:[%s215 + $0x50] sm:$0xff] %v236
                %v238 = vld [vmem:[%s214 + $0x58] sm:$0xff]
                %239 = vst [vmem:[%s215 + $0x58] sm:$0xff] %v238
                %v240 = vld [vmem:[%s214 + $0x60] sm:$0xff]
                %241 = vst [vmem:[%s215 + $0x60] sm:$0xff] %v240
                %v242 = vld [vmem:[%s214 + $0x68] sm:$0xff]
                %243 = vst [vmem:[%s215 + $0x68] sm:$0xff] %v242
                %v244 = vld [vmem:[%s214 + $0x70] sm:$0xff]
                %245 = vst [vmem:[%s215 + $0x70] sm:$0xff] %v244
                %v246 = vld [vmem:[%s214 + $0x78] sm:$0xff]
                %247 = vst [vmem:[%s215 + $0x78] sm:$0xff] %v246
                %v248 = vld [vmem:[%s214 + $0x100] sm:$0xff]
                %249 = vst [vmem:[%s215 + $0x80] sm:$0xff] %v248
                %v250 = vld [vmem:[%s214 + $0x108] sm:$0xff]
                %251 = vst [vmem:[%s215 + $0x88] sm:$0xff] %v250
                %v252 = vld [vmem:[%s214 + $0x110] sm:$0xff]
                %253 = vst [vmem:[%s215 + $0x90] sm:$0xff] %v252
                %v254 = vld [vmem:[%s214 + $0x118] sm:$0xff]
                %255 = vst [vmem:[%s215 + $0x98] sm:$0xff] %v254
                %v256 = vld [vmem:[%s214 + $0x120] sm:$0xff]
                %257 = vst [vmem:[%s215 + $0xa0] sm:$0xff] %v256
                %v258 = vld [vmem:[%s214 + $0x128] sm:$0xff]
                %259 = vst [vmem:[%s215 + $0xa8] sm:$0xff] %v258
                %v260 = vld [vmem:[%s214 + $0x130] sm:$0xff]
                %261 = vst [vmem:[%s215 + $0xb0] sm:$0xff] %v260
                %v262 = vld [vmem:[%s214 + $0x138] sm:$0xff]
                %263 = vst [vmem:[%s215 + $0xb8] sm:$0xff] %v262
                %v264 = vld [vmem:[%s214 + $0x140] sm:$0xff]
                %265 = vst [vmem:[%s215 + $0xc0] sm:$0xff] %v264
                %v266 = vld [vmem:[%s214 + $0x148] sm:$0xff]
                %267 = vst [vmem:[%s215 + $0xc8] sm:$0xff] %v266
                %v268 = vld [vmem:[%s214 + $0x150] sm:$0xff]
                %269 = vst [vmem:[%s215 + $0xd0] sm:$0xff] %v268
                %v270 = vld [vmem:[%s214 + $0x158] sm:$0xff]
                %271 = vst [vmem:[%s215 + $0xd8] sm:$0xff] %v270
                %v272 = vld [vmem:[%s214 + $0x160] sm:$0xff]
                %273 = vst [vmem:[%s215 + $0xe0] sm:$0xff] %v272
                %v274 = vld [vmem:[%s214 + $0x168] sm:$0xff]
                %275 = vst [vmem:[%s215 + $0xe8] sm:$0xff] %v274
                %v276 = vld [vmem:[%s214 + $0x170] sm:$0xff]
                %277 = vst [vmem:[%s215 + $0xf0] sm:$0xff] %v276
                %v278 = vld [vmem:[%s214 + $0x178] sm:$0xff]
                %279 = vst [vmem:[%s215 + $0xf8] sm:$0xff] %v278
              $region45: #{_lambda_.3} parent=39 // loop_footer
                %s213 = sadd.s32 1, %s209
              $region46: #{_lambda_.3} parent=39 // loop_footer_branch
                %208 = sbr.rel target = $region42
              $region47: #{_lambda_.3} parent=39 // loop_exit
                _
            $region40: #{_lambda_.3} parent=31 // pred_fallthru
              _
          $region32: #{_lambda_.3} parent=27 // pred_fallthru
            _
          %356 = vnop
        $region28: #{_lambda_.3} parent=23 // pred_fallthru
          _
        // Predicated region
        $region63: #{_lambda_.3} parent=23 // pred_check
          %p357 = pneg %p122
        $region64: #{_lambda_.3} parent=23 // pred_check_branch
          %359 = sbr.rel (%p357) target = $region66
        $region65: #{_lambda_.3} parent=23 // pred_region
          %s360 = smul.u32 4, %s17
          %s361 = smul.u32 2, %s18
          %p362 = scmp.lt.s32.totalorder %s360, 7
          %s363 = scalar_select %p362, %s360, 7
          %p364 = scmp.lt.s32.totalorder %s361, 1
          %s365 = scalar_select %p364, %s361, 1
          %s366 = smul.addr %s363, 2
          %s367 = sadd.s32 %s365, %s366
          %s368 = smul.addr %s367, 8
          %s369 = scalar_lea.vmem %s3, %s368
          %s370 = smul.u32 4, %s17
          %s371 = smul.u32 2, %s18
        $region66: #{_lambda_.3} parent=23 // pred_fallthru
          _
      $region24: #{_lambda_.3} parent=5 // pred_fallthru
        _
      %p372 = scmp.le.s32.totalorder 1, %s10
      %p373 = scmp.lt.s32.totalorder %s10, 3
      %p374 = pnand %p372, %p373
      %p375 = pneg %p374
      // Predicated region
      $region67: #{_lambda_.3} parent=5 // pred_check
        _
      $region68: #{_lambda_.3} parent=5 // pred_check_branch
        %377 = sbr.rel (%p374) target = $region70
      $region69: #{_lambda_.3} parent=5 // pred_region
        %s378 = ssub.s32 %s10, 1
        %s379 = sand.u32 %s35, 1
        %s380 = sand.u32 %s35, 1
        %s381 = smul.addr %s380, 256
        %s382 = scalar_lea.vmem [#allocation3], %s381
        // Predicated region
        $region71: #{_lambda_.3} parent=69 // pred_check
          %p383 = pneg %p48
        $region72: #{_lambda_.3} parent=69 // pred_check_branch
          %385 = sbr.rel (%p383) target = $region74
        $region73: #{_lambda_.3} parent=69 // pred_region
          _
        $region74: #{_lambda_.3} parent=69 // pred_fallthru
          _
        %s386 = sand.u32 %s35, 1
        %s387 = sand.u32 %s35, 1
        %s388 = smul.addr %s387, 256
        %s389 = scalar_lea.vmem [#allocation3], %s388
        %p390 = pneg %p48
        %p391 = pneg %p45
        %s392 = smul.u32 2, %s20
        %p393 = scmp.lt.s32.totalorder %s392, 1
        %s394 = scalar_select %p393, %s392, 1
        %s395 = smul.addr %s394, 4
        %s396 = scalar_lea.vmem %s1, %s395
        %p397 = pneg %p74
        %p398 = pneg %p71
        %s399 = smul.u32 32, %s20
        %p400 = scmp.lt.s32.totalorder %s399, 31
        %s401 = scalar_select %p400, %s399, 31
        %s402 = smul.addr %s401, 8
        %s403 = scalar_lea.vmem %s2, %s402
        %p404 = pneg %p100
        %p405 = pneg %p97
        %s406 = smul.u32 4, %s19
        %s407 = smul.u32 2, %s20
        %p408 = scmp.lt.s32.totalorder %s406, 7
        %s409 = scalar_select %p408, %s406, 7
        %p410 = scmp.lt.s32.totalorder %s407, 1
        %s411 = scalar_select %p410, %s407, 1
        %s412 = smul.addr %s409, 2
        %s413 = sadd.s32 %s411, %s412
        %s414 = smul.addr %s413, 8
        %s415 = scalar_lea.vmem %s3, %s414
        %p416 = pneg %p128
        %p417 = pneg %p125
        %p418 = pneg %p154
        %p419 = pneg %p151
        %s420 = smul.u32 16, %s19
        %p421 = scmp.lt.s32.totalorder %s420, 31
        %s422 = scalar_select %p421, %s420, 31
        %s423 = smul.addr %s422, 8
        %s424 = scalar_lea.vmem %s4, %s423
        %s425 = smul.u32 16, %s19
        %s426 = smul.u32 2, %s20
        %p427 = scmp.lt.s32.totalorder %s426, 1
        %s428 = scalar_select %p427, %s426, 1
        %s429 = smul.addr %s428, 4
        %s430 = scalar_lea.vmem %s1, %s429
        %s431 = smul.u32 2, %s20
        %s432 = smul.u32 32, %s20
        %p433 = scmp.lt.s32.totalorder %s432, 31
        %s434 = scalar_select %p433, %s432, 31
        %s435 = smul.addr %s434, 8
        %s436 = scalar_lea.vmem %s2, %s435
        %s437 = smul.u32 32, %s20
        %s438 = smul.u32 4, %s19
        %s439 = smul.u32 2, %s20
        %p440 = scmp.lt.s32.totalorder %s438, 7
        %s441 = scalar_select %p440, %s438, 7
        %p442 = scmp.lt.s32.totalorder %s439, 1
        %s443 = scalar_select %p442, %s439, 1
        %s444 = smul.addr %s441, 2
        %s445 = sadd.s32 %s443, %s444
        %s446 = smul.addr %s445, 8
        %s447 = scalar_lea.vmem %s3, %s446
        %s448 = smul.u32 4, %s19
        %s449 = smul.u32 2, %s20
        %s450 = smul.u32 16, %s19
        %p451 = scmp.lt.s32.totalorder %s450, 31
        %s452 = scalar_select %p451, %s450, 31
        %s453 = smul.addr %s452, 8
        %s454 = scalar_lea.vmem %s4, %s453
        %s455 = smul.u32 16, %s19
        %p456 = scmp.eq.s32.totalorder %s20, 0
        // Predicated region
        $region75: #{_lambda_.3} parent=69 // pred_check
          %p457 = pneg %p456
        $region76: #{_lambda_.3} parent=69 // pred_check_branch
          %459 = sbr.rel (%p457) target = $region78
        $region77: #{_lambda_.3} parent=69 // pred_region
          %vm460 = vcmask 138240
          %461 = vst.msk [vmem:[#allocation2] sm:$0xff] %vm460, 0.0
          %462 = vst.msk [vmem:[#allocation2 + $0x8] sm:$0xff] %vm460, 0.0
          %463 = vst.msk [vmem:[#allocation2 + $0x10] sm:$0xff] %vm460, 0.0
          %464 = vst.msk [vmem:[#allocation2 + $0x18] sm:$0xff] %vm460, 0.0
          %465 = vst.msk [vmem:[#allocation2 + $0x20] sm:$0xff] %vm460, 0.0
          %466 = vst.msk [vmem:[#allocation2 + $0x28] sm:$0xff] %vm460, 0.0
          %467 = vst.msk [vmem:[#allocation2 + $0x30] sm:$0xff] %vm460, 0.0
          %468 = vst.msk [vmem:[#allocation2 + $0x38] sm:$0xff] %vm460, 0.0
          %469 = vst.msk [vmem:[#allocation2 + $0x40] sm:$0xff] %vm460, 0.0
          %470 = vst.msk [vmem:[#allocation2 + $0x48] sm:$0xff] %vm460, 0.0
          %471 = vst.msk [vmem:[#allocation2 + $0x50] sm:$0xff] %vm460, 0.0
          %472 = vst.msk [vmem:[#allocation2 + $0x58] sm:$0xff] %vm460, 0.0
          %473 = vst.msk [vmem:[#allocation2 + $0x60] sm:$0xff] %vm460, 0.0
          %474 = vst.msk [vmem:[#allocation2 + $0x68] sm:$0xff] %vm460, 0.0
          %475 = vst.msk [vmem:[#allocation2 + $0x70] sm:$0xff] %vm460, 0.0
          %476 = vst.msk [vmem:[#allocation2 + $0x78] sm:$0xff] %vm460, 0.0
          %477 = vst.msk [vmem:[#allocation2 + $0x80] sm:$0xff] %vm460, 0.0
          %478 = vst.msk [vmem:[#allocation2 + $0x88] sm:$0xff] %vm460, 0.0
          %479 = vst.msk [vmem:[#allocation2 + $0x90] sm:$0xff] %vm460, 0.0
          %480 = vst.msk [vmem:[#allocation2 + $0x98] sm:$0xff] %vm460, 0.0
          %481 = vst.msk [vmem:[#allocation2 + $0xa0] sm:$0xff] %vm460, 0.0
          %482 = vst.msk [vmem:[#allocation2 + $0xa8] sm:$0xff] %vm460, 0.0
          %483 = vst.msk [vmem:[#allocation2 + $0xb0] sm:$0xff] %vm460, 0.0
          %484 = vst.msk [vmem:[#allocation2 + $0xb8] sm:$0xff] %vm460, 0.0
          %485 = vst.msk [vmem:[#allocation2 + $0xc0] sm:$0xff] %vm460, 0.0
          %486 = vst.msk [vmem:[#allocation2 + $0xc8] sm:$0xff] %vm460, 0.0
          %487 = vst.msk [vmem:[#allocation2 + $0xd0] sm:$0xff] %vm460, 0.0
          %488 = vst.msk [vmem:[#allocation2 + $0xd8] sm:$0xff] %vm460, 0.0
          %489 = vst.msk [vmem:[#allocation2 + $0xe0] sm:$0xff] %vm460, 0.0
          %490 = vst.msk [vmem:[#allocation2 + $0xe8] sm:$0xff] %vm460, 0.0
          %491 = vst.msk [vmem:[#allocation2 + $0xf0] sm:$0xff] %vm460, 0.0
          %492 = vst.msk [vmem:[#allocation2 + $0xf8] sm:$0xff] %vm460, 0.0
          %493 = vst.msk [vmem:[#allocation2 + $0x100] sm:$0xff] %vm460, 0.0
          %494 = vst.msk [vmem:[#allocation2 + $0x108] sm:$0xff] %vm460, 0.0
          %495 = vst.msk [vmem:[#allocation2 + $0x110] sm:$0xff] %vm460, 0.0
          %496 = vst.msk [vmem:[#allocation2 + $0x118] sm:$0xff] %vm460, 0.0
          %497 = vst.msk [vmem:[#allocation2 + $0x120] sm:$0xff] %vm460, 0.0
          %498 = vst.msk [vmem:[#allocation2 + $0x128] sm:$0xff] %vm460, 0.0
          %499 = vst.msk [vmem:[#allocation2 + $0x130] sm:$0xff] %vm460, 0.0
          %500 = vst.msk [vmem:[#allocation2 + $0x138] sm:$0xff] %vm460, 0.0
          %501 = vst.msk [vmem:[#allocation2 + $0x140] sm:$0xff] %vm460, 0.0
          %502 = vst.msk [vmem:[#allocation2 + $0x148] sm:$0xff] %vm460, 0.0
          %503 = vst.msk [vmem:[#allocation2 + $0x150] sm:$0xff] %vm460, 0.0
          %504 = vst.msk [vmem:[#allocation2 + $0x158] sm:$0xff] %vm460, 0.0
          %505 = vst.msk [vmem:[#allocation2 + $0x160] sm:$0xff] %vm460, 0.0
          %506 = vst.msk [vmem:[#allocation2 + $0x168] sm:$0xff] %vm460, 0.0
          %507 = vst.msk [vmem:[#allocation2 + $0x170] sm:$0xff] %vm460, 0.0
          %508 = vst.msk [vmem:[#allocation2 + $0x178] sm:$0xff] %vm460, 0.0
          %509 = vst.msk [vmem:[#allocation2 + $0x180] sm:$0xff] %vm460, 0.0
          %510 = vst.msk [vmem:[#allocation2 + $0x188] sm:$0xff] %vm460, 0.0
          %511 = vst.msk [vmem:[#allocation2 + $0x190] sm:$0xff] %vm460, 0.0
          %512 = vst.msk [vmem:[#allocation2 + $0x198] sm:$0xff] %vm460, 0.0
          %513 = vst.msk [vmem:[#allocation2 + $0x1a0] sm:$0xff] %vm460, 0.0
          %514 = vst.msk [vmem:[#allocation2 + $0x1a8] sm:$0xff] %vm460, 0.0
          %515 = vst.msk [vmem:[#allocation2 + $0x1b0] sm:$0xff] %vm460, 0.0
          %516 = vst.msk [vmem:[#allocation2 + $0x1b8] sm:$0xff] %vm460, 0.0
          %517 = vst.msk [vmem:[#allocation2 + $0x1c0] sm:$0xff] %vm460, 0.0
          %518 = vst.msk [vmem:[#allocation2 + $0x1c8] sm:$0xff] %vm460, 0.0
          %519 = vst.msk [vmem:[#allocation2 + $0x1d0] sm:$0xff] %vm460, 0.0
          %520 = vst.msk [vmem:[#allocation2 + $0x1d8] sm:$0xff] %vm460, 0.0
          %521 = vst.msk [vmem:[#allocation2 + $0x1e0] sm:$0xff] %vm460, 0.0
          %522 = vst.msk [vmem:[#allocation2 + $0x1e8] sm:$0xff] %vm460, 0.0
          %523 = vst.msk [vmem:[#allocation2 + $0x1f0] sm:$0xff] %vm460, 0.0
          %524 = vst.msk [vmem:[#allocation2 + $0x1f8] sm:$0xff] %vm460, 0.0
        $region78: #{_lambda_.3} parent=69 // pred_fallthru
          _
        %v525 = vld [vmem:[%s447] sm:$0xff]
        %v526 = vld [vmem:[%s447 + $0x8] sm:$0xff]
        %v527 = vld [vmem:[%s447 + $0x10] sm:$0xff]
        %v528 = vld [vmem:[%s447 + $0x18] sm:$0xff]
        %v529 = vld [vmem:[%s447 + $0x20] sm:$0xff]
        %v530 = vld [vmem:[%s447 + $0x28] sm:$0xff]
        %v531 = vld [vmem:[%s447 + $0x30] sm:$0xff]
        %v532 = vld [vmem:[%s447 + $0x38] sm:$0xff]
        %v533 = vunpack.c.0.s8 %v525
        %v534 = vunpack.c.0.s8 %v526
        %v535 = vunpack.c.1.s8 %v525
        %v536 = vunpack.c.1.s8 %v526
        %v537 = vunpack.c.2.s8 %v525
        %v538 = vunpack.c.2.s8 %v526
        %v539 = vunpack.c.3.s8 %v525
        %v540 = vunpack.c.3.s8 %v526
        %v541 = vunpack.c.0.s8 %v527
        %v542 = vunpack.c.0.s8 %v528
        %v543 = vunpack.c.1.s8 %v527
        %v544 = vunpack.c.1.s8 %v528
        %v545 = vunpack.c.2.s8 %v527
        %v546 = vunpack.c.2.s8 %v528
        %v547 = vunpack.c.3.s8 %v527
        %v548 = vunpack.c.3.s8 %v528
        %v549 = vunpack.c.0.s8 %v529
        %v550 = vunpack.c.0.s8 %v530
        %v551 = vunpack.c.1.s8 %v529
        %v552 = vunpack.c.1.s8 %v530
        %v553 = vunpack.c.2.s8 %v529
        %v554 = vunpack.c.2.s8 %v530
        %v555 = vunpack.c.3.s8 %v529
        %v556 = vunpack.c.3.s8 %v530
        %v557 = vunpack.c.0.s8 %v531
        %v558 = vunpack.c.0.s8 %v532
        %v559 = vunpack.c.1.s8 %v531
        %v560 = vunpack.c.1.s8 %v532
        %v561 = vunpack.c.2.s8 %v531
        %v562 = vunpack.c.2.s8 %v532
        %v563 = vunpack.c.3.s8 %v531
        %v564 = vunpack.c.3.s8 %v532
        %v565 = vcvt.s32.f32 %v533
        %v566 = vcvt.s32.f32 %v534
        %v567 = vcvt.s32.f32 %v535
        %v568 = vcvt.s32.f32 %v536
        %v569 = vcvt.s32.f32 %v537
        %v570 = vcvt.s32.f32 %v538
        %v571 = vcvt.s32.f32 %v539
        %v572 = vcvt.s32.f32 %v540
        %v573 = vcvt.s32.f32 %v541
        %v574 = vcvt.s32.f32 %v542
        %v575 = vcvt.s32.f32 %v543
        %v576 = vcvt.s32.f32 %v544
        %v577 = vcvt.s32.f32 %v545
        %v578 = vcvt.s32.f32 %v546
        %v579 = vcvt.s32.f32 %v547
        %v580 = vcvt.s32.f32 %v548
        %v581 = vcvt.s32.f32 %v549
        %v582 = vcvt.s32.f32 %v550
        %v583 = vcvt.s32.f32 %v551
        %v584 = vcvt.s32.f32 %v552
        %v585 = vcvt.s32.f32 %v553
        %v586 = vcvt.s32.f32 %v554
        %v587 = vcvt.s32.f32 %v555
        %v588 = vcvt.s32.f32 %v556
        %v589 = vcvt.s32.f32 %v557
        %v590 = vcvt.s32.f32 %v558
        %v591 = vcvt.s32.f32 %v559
        %v592 = vcvt.s32.f32 %v560
        %v593 = vcvt.s32.f32 %v561
        %v594 = vcvt.s32.f32 %v562
        %v595 = vcvt.s32.f32 %v563
        %v596 = vcvt.s32.f32 %v564
        %v597 = vld [vmem:[%s382] sm:$0xff]
        %v598 = vld [vmem:[%s382 + $0x8] sm:$0xff]
        %v599 = vld [vmem:[%s382 + $0x10] sm:$0xff]
        %v600 = vld [vmem:[%s382 + $0x18] sm:$0xff]
        %v601 = vld [vmem:[%s382 + $0x20] sm:$0xff]
        %v602 = vld [vmem:[%s382 + $0x28] sm:$0xff]
        %v603 = vld [vmem:[%s382 + $0x30] sm:$0xff]
        %v604 = vld [vmem:[%s382 + $0x38] sm:$0xff]
        %v605 = vld [vmem:[%s382 + $0x40] sm:$0xff]
        %v606 = vld [vmem:[%s382 + $0x48] sm:$0xff]
        %v607 = vld [vmem:[%s382 + $0x50] sm:$0xff]
        %v608 = vld [vmem:[%s382 + $0x58] sm:$0xff]
        %v609 = vld [vmem:[%s382 + $0x60] sm:$0xff]
        %v610 = vld [vmem:[%s382 + $0x68] sm:$0xff]
        %v611 = vld [vmem:[%s382 + $0x70] sm:$0xff]
        %v612 = vld [vmem:[%s382 + $0x78] sm:$0xff]
        %v613 = vld [vmem:[%s382 + $0x80] sm:$0xff]
        %v614 = vld [vmem:[%s382 + $0x88] sm:$0xff]
        %v615 = vld [vmem:[%s382 + $0x90] sm:$0xff]
        %v616 = vld [vmem:[%s382 + $0x98] sm:$0xff]
        %v617 = vld [vmem:[%s382 + $0xa0] sm:$0xff]
        %v618 = vld [vmem:[%s382 + $0xa8] sm:$0xff]
        %v619 = vld [vmem:[%s382 + $0xb0] sm:$0xff]
        %v620 = vld [vmem:[%s382 + $0xb8] sm:$0xff]
        %v621 = vld [vmem:[%s382 + $0xc0] sm:$0xff]
        %v622 = vld [vmem:[%s382 + $0xc8] sm:$0xff]
        %v623 = vld [vmem:[%s382 + $0xd0] sm:$0xff]
        %v624 = vld [vmem:[%s382 + $0xd8] sm:$0xff]
        %v625 = vld [vmem:[%s382 + $0xe0] sm:$0xff]
        %v626 = vld [vmem:[%s382 + $0xe8] sm:$0xff]
        %v627 = vld [vmem:[%s382 + $0xf0] sm:$0xff]
        %v628 = vld [vmem:[%s382 + $0xf8] sm:$0xff]
        %v629 = vld [vmem:[%s430] sm:$0xff]
        %v630 = vld [vmem:[%s430 + $0x8] sm:$0xff]
        %632 = vset.pattern.permute.xlu0 0
        %633 = vperm.xlu0 %632, %v597
        %v634 = vpop.permute.xlu0 %633
        %637 = vset.pattern.permute.xlu0 0
        %638 = vperm.xlu0 %637, %v598
        %v639 = vpop.permute.xlu0 %638
        %642 = vset.pattern.permute.xlu0 0
        %643 = vperm.xlu0 %642, %v599
        %v644 = vpop.permute.xlu0 %643
        %647 = vset.pattern.permute.xlu0 0
        %648 = vperm.xlu0 %647, %v600
        %v649 = vpop.permute.xlu0 %648
        %652 = vset.pattern.permute.xlu0 0
        %653 = vperm.xlu0 %652, %v601
        %v654 = vpop.permute.xlu0 %653
        %657 = vset.pattern.permute.xlu0 0
        %658 = vperm.xlu0 %657, %v602
        %v659 = vpop.permute.xlu0 %658
        %662 = vset.pattern.permute.xlu0 0
        %663 = vperm.xlu0 %662, %v603
        %v664 = vpop.permute.xlu0 %663
        %667 = vset.pattern.permute.xlu0 0
        %668 = vperm.xlu0 %667, %v604
        %v669 = vpop.permute.xlu0 %668
        %672 = vset.pattern.permute.xlu0 0
        %673 = vperm.xlu0 %672, %v605
        %v674 = vpop.permute.xlu0 %673
        %677 = vset.pattern.permute.xlu0 0
        %678 = vperm.xlu0 %677, %v606
        %v679 = vpop.permute.xlu0 %678
        %682 = vset.pattern.permute.xlu0 0
        %683 = vperm.xlu0 %682, %v607
        %v684 = vpop.permute.xlu0 %683
        %687 = vset.pattern.permute.xlu0 0
        %688 = vperm.xlu0 %687, %v608
        %v689 = vpop.permute.xlu0 %688
        %692 = vset.pattern.permute.xlu0 0
        %693 = vperm.xlu0 %692, %v609
        %v694 = vpop.permute.xlu0 %693
        %697 = vset.pattern.permute.xlu0 0
        %698 = vperm.xlu0 %697, %v610
        %v699 = vpop.permute.xlu0 %698
        %702 = vset.pattern.permute.xlu0 0
        %703 = vperm.xlu0 %702, %v611
        %v704 = vpop.permute.xlu0 %703
        %707 = vset.pattern.permute.xlu0 0
        %708 = vperm.xlu0 %707, %v612
        %v709 = vpop.permute.xlu0 %708
        %v712 = vlaneseq
        %v713 = vshrl.u32 %v712, 7
        %v714 = vsub.s32 0, %v713
        %v715 = vrot.slane %v629, %v714
        %v716 = vlaneseq
        %v717 = vshrl.u32 %v716, 7
        %v718 = vsub.s32 4, %v717
        %v719 = vrot.slane %v629, %v718
        %v722 = vlaneseq
        %v723 = vshrl.u32 %v722, 7
        %v724 = vsub.s32 0, %v723
        %v725 = vrot.slane %v715, %v724
        %v726 = vlaneseq
        %v727 = vshrl.u32 %v726, 7
        %v728 = vsub.s32 0, %v727
        %v729 = vrot.slane %v719, %v728
        %v730 = vmul.f32 %v634, %v725
        %v731 = vmul.f32 %v634, %v729
        %v732 = vmul.f32 %v639, %v725
        %v733 = vmul.f32 %v639, %v729
        %v734 = vmul.f32 %v644, %v725
        %v735 = vmul.f32 %v644, %v729
        %v736 = vmul.f32 %v649, %v725
        %v737 = vmul.f32 %v649, %v729
        %v738 = vmul.f32 %v654, %v725
        %v739 = vmul.f32 %v654, %v729
        %v740 = vmul.f32 %v659, %v725
        %v741 = vmul.f32 %v659, %v729
        %v742 = vmul.f32 %v664, %v725
        %v743 = vmul.f32 %v664, %v729
        %v744 = vmul.f32 %v669, %v725
        %v745 = vmul.f32 %v669, %v729
        %v746 = vmul.f32 %v674, %v725
        %v747 = vmul.f32 %v674, %v729
        %v748 = vmul.f32 %v679, %v725
        %v749 = vmul.f32 %v679, %v729
        %v750 = vmul.f32 %v684, %v725
        %v751 = vmul.f32 %v684, %v729
        %v752 = vmul.f32 %v689, %v725
        %v753 = vmul.f32 %v689, %v729
        %v754 = vmul.f32 %v694, %v725
        %v755 = vmul.f32 %v694, %v729
        %v756 = vmul.f32 %v699, %v725
        %v757 = vmul.f32 %v699, %v729
        %v758 = vmul.f32 %v704, %v725
        %v759 = vmul.f32 %v704, %v729
        %v760 = vmul.f32 %v709, %v725
        %v761 = vmul.f32 %v709, %v729
        %763 = vset.pattern.permute.xlu0 0
        %764 = vperm.xlu0 %763, %v613
        %v765 = vpop.permute.xlu0 %764
        %768 = vset.pattern.permute.xlu0 0
        %769 = vperm.xlu0 %768, %v614
        %v770 = vpop.permute.xlu0 %769
        %773 = vset.pattern.permute.xlu0 0
        %774 = vperm.xlu0 %773, %v615
        %v775 = vpop.permute.xlu0 %774
        %778 = vset.pattern.permute.xlu0 0
        %779 = vperm.xlu0 %778, %v616
        %v780 = vpop.permute.xlu0 %779
        %783 = vset.pattern.permute.xlu0 0
        %784 = vperm.xlu0 %783, %v617
        %v785 = vpop.permute.xlu0 %784
        %788 = vset.pattern.permute.xlu0 0
        %789 = vperm.xlu0 %788, %v618
        %v790 = vpop.permute.xlu0 %789
        %793 = vset.pattern.permute.xlu0 0
        %794 = vperm.xlu0 %793, %v619
        %v795 = vpop.permute.xlu0 %794
        %798 = vset.pattern.permute.xlu0 0
        %799 = vperm.xlu0 %798, %v620
        %v800 = vpop.permute.xlu0 %799
        %803 = vset.pattern.permute.xlu0 0
        %804 = vperm.xlu0 %803, %v621
        %v805 = vpop.permute.xlu0 %804
        %808 = vset.pattern.permute.xlu0 0
        %809 = vperm.xlu0 %808, %v622
        %v810 = vpop.permute.xlu0 %809
        %813 = vset.pattern.permute.xlu0 0
        %814 = vperm.xlu0 %813, %v623
        %v815 = vpop.permute.xlu0 %814
        %818 = vset.pattern.permute.xlu0 0
        %819 = vperm.xlu0 %818, %v624
        %v820 = vpop.permute.xlu0 %819
        %823 = vset.pattern.permute.xlu0 0
        %824 = vperm.xlu0 %823, %v625
        %v825 = vpop.permute.xlu0 %824
        %828 = vset.pattern.permute.xlu0 0
        %829 = vperm.xlu0 %828, %v626
        %v830 = vpop.permute.xlu0 %829
        %833 = vset.pattern.permute.xlu0 0
        %834 = vperm.xlu0 %833, %v627
        %v835 = vpop.permute.xlu0 %834
        %838 = vset.pattern.permute.xlu0 0
        %839 = vperm.xlu0 %838, %v628
        %v840 = vpop.permute.xlu0 %839
        %v843 = vlaneseq
        %v844 = vshrl.u32 %v843, 7
        %v845 = vsub.s32 0, %v844
        %v846 = vrot.slane %v630, %v845
        %v847 = vlaneseq
        %v848 = vshrl.u32 %v847, 7
        %v849 = vsub.s32 4, %v848
        %v850 = vrot.slane %v630, %v849
        %v853 = vlaneseq
        %v854 = vshrl.u32 %v853, 7
        %v855 = vsub.s32 0, %v854
        %v856 = vrot.slane %v846, %v855
        %v857 = vlaneseq
        %v858 = vshrl.u32 %v857, 7
        %v859 = vsub.s32 0, %v858
        %v860 = vrot.slane %v850, %v859
        %v861 = vmul.f32 %v765, %v856
        %v862 = vmul.f32 %v765, %v860
        %v863 = vmul.f32 %v770, %v856
        %v864 = vmul.f32 %v770, %v860
        %v865 = vmul.f32 %v775, %v856
        %v866 = vmul.f32 %v775, %v860
        %v867 = vmul.f32 %v780, %v856
        %v868 = vmul.f32 %v780, %v860
        %v869 = vmul.f32 %v785, %v856
        %v870 = vmul.f32 %v785, %v860
        %v871 = vmul.f32 %v790, %v856
        %v872 = vmul.f32 %v790, %v860
        %v873 = vmul.f32 %v795, %v856
        %v874 = vmul.f32 %v795, %v860
        %v875 = vmul.f32 %v800, %v856
        %v876 = vmul.f32 %v800, %v860
        %v877 = vmul.f32 %v805, %v856
        %v878 = vmul.f32 %v805, %v860
        %v879 = vmul.f32 %v810, %v856
        %v880 = vmul.f32 %v810, %v860
        %v881 = vmul.f32 %v815, %v856
        %v882 = vmul.f32 %v815, %v860
        %v883 = vmul.f32 %v820, %v856
        %v884 = vmul.f32 %v820, %v860
        %v885 = vmul.f32 %v825, %v856
        %v886 = vmul.f32 %v825, %v860
        %v887 = vmul.f32 %v830, %v856
        %v888 = vmul.f32 %v830, %v860
        %v889 = vmul.f32 %v835, %v856
        %v890 = vmul.f32 %v835, %v860
        %v891 = vmul.f32 %v840, %v856
        %v892 = vmul.f32 %v840, %v860
        %v893 = vmin.f32 %v730, %v861
        %v894 = vmin.f32 %v731, %v862
        %v895 = vmin.f32 %v732, %v863
        %v896 = vmin.f32 %v733, %v864
        %v897 = vmin.f32 %v734, %v865
        %v898 = vmin.f32 %v735, %v866
        %v899 = vmin.f32 %v736, %v867
        %v900 = vmin.f32 %v737, %v868
        %v901 = vmin.f32 %v738, %v869
        %v902 = vmin.f32 %v739, %v870
        %v903 = vmin.f32 %v740, %v871
        %v904 = vmin.f32 %v741, %v872
        %v905 = vmin.f32 %v742, %v873
        %v906 = vmin.f32 %v743, %v874
        %v907 = vmin.f32 %v744, %v875
        %v908 = vmin.f32 %v745, %v876
        %v909 = vmin.f32 %v746, %v877
        %v910 = vmin.f32 %v747, %v878
        %v911 = vmin.f32 %v748, %v879
        %v912 = vmin.f32 %v749, %v880
        %v913 = vmin.f32 %v750, %v881
        %v914 = vmin.f32 %v751, %v882
        %v915 = vmin.f32 %v752, %v883
        %v916 = vmin.f32 %v753, %v884
        %v917 = vmin.f32 %v754, %v885
        %v918 = vmin.f32 %v755, %v886
        %v919 = vmin.f32 %v756, %v887
        %v920 = vmin.f32 %v757, %v888
        %v921 = vmin.f32 %v758, %v889
        %v922 = vmin.f32 %v759, %v890
        %v923 = vmin.f32 %v760, %v891
        %v924 = vmin.f32 %v761, %v892
        %v925 = vmul.f32 %v893, %v565
        %v926 = vmul.f32 %v894, %v566
        %v927 = vmul.f32 %v895, %v567
        %v928 = vmul.f32 %v896, %v568
        %v929 = vmul.f32 %v897, %v569
        %v930 = vmul.f32 %v898, %v570
        %v931 = vmul.f32 %v899, %v571
        %v932 = vmul.f32 %v900, %v572
        %v933 = vmul.f32 %v901, %v573
        %v934 = vmul.f32 %v902, %v574
        %v935 = vmul.f32 %v903, %v575
        %v936 = vmul.f32 %v904, %v576
        %v937 = vmul.f32 %v905, %v577
        %v938 = vmul.f32 %v906, %v578
        %v939 = vmul.f32 %v907, %v579
        %v940 = vmul.f32 %v908, %v580
        %v941 = vmul.f32 %v909, %v581
        %v942 = vmul.f32 %v910, %v582
        %v943 = vmul.f32 %v911, %v583
        %v944 = vmul.f32 %v912, %v584
        %v945 = vmul.f32 %v913, %v585
        %v946 = vmul.f32 %v914, %v586
        %v947 = vmul.f32 %v915, %v587
        %v948 = vmul.f32 %v916, %v588
        %v949 = vmul.f32 %v917, %v589
        %v950 = vmul.f32 %v918, %v590
        %v951 = vmul.f32 %v919, %v591
        %v952 = vmul.f32 %v920, %v592
        %v953 = vmul.f32 %v921, %v593
        %v954 = vmul.f32 %v922, %v594
        %v955 = vmul.f32 %v923, %v595
        %v956 = vmul.f32 %v924, %v596
        %v957 = vld [vmem:[#allocation2] sm:$0xff]
        %v958 = vld [vmem:[#allocation2 + $0x8] sm:$0xff]
        %v959 = vld [vmem:[#allocation2 + $0x10] sm:$0xff]
        %v960 = vld [vmem:[#allocation2 + $0x18] sm:$0xff]
        %v961 = vld [vmem:[#allocation2 + $0x20] sm:$0xff]
        %v962 = vld [vmem:[#allocation2 + $0x28] sm:$0xff]
        %v963 = vld [vmem:[#allocation2 + $0x30] sm:$0xff]
        %v964 = vld [vmem:[#allocation2 + $0x38] sm:$0xff]
        %v965 = vld [vmem:[#allocation2 + $0x40] sm:$0xff]
        %v966 = vld [vmem:[#allocation2 + $0x48] sm:$0xff]
        %v967 = vld [vmem:[#allocation2 + $0x50] sm:$0xff]
        %v968 = vld [vmem:[#allocation2 + $0x58] sm:$0xff]
        %v969 = vld [vmem:[#allocation2 + $0x60] sm:$0xff]
        %v970 = vld [vmem:[#allocation2 + $0x68] sm:$0xff]
        %v971 = vld [vmem:[#allocation2 + $0x70] sm:$0xff]
        %v972 = vld [vmem:[#allocation2 + $0x78] sm:$0xff]
        %v973 = vld [vmem:[%s436] sm:$0xff]
        %v974 = vld [vmem:[%s436 + $0x8] sm:$0xff]
        %v975 = vld [vmem:[%s436 + $0x10] sm:$0xff]
        %v976 = vld [vmem:[%s436 + $0x18] sm:$0xff]
        %v977 = vld [vmem:[%s436 + $0x20] sm:$0xff]
        %v978 = vld [vmem:[%s436 + $0x28] sm:$0xff]
        %v979 = vld [vmem:[%s436 + $0x30] sm:$0xff]
        %v980 = vld [vmem:[%s436 + $0x38] sm:$0xff]
        %v981 = vld [vmem:[%s436 + $0x40] sm:$0xff]
        %v982 = vld [vmem:[%s436 + $0x48] sm:$0xff]
        %v983 = vld [vmem:[%s436 + $0x50] sm:$0xff]
        %v984 = vld [vmem:[%s436 + $0x58] sm:$0xff]
        %v985 = vld [vmem:[%s436 + $0x60] sm:$0xff]
        %v986 = vld [vmem:[%s436 + $0x68] sm:$0xff]
        %v987 = vld [vmem:[%s436 + $0x70] sm:$0xff]
        %v988 = vld [vmem:[%s436 + $0x78] sm:$0xff]
        %v989 = vld [vmem:[%s436 + $0x80] sm:$0xff]
        %v990 = vld [vmem:[%s436 + $0x88] sm:$0xff]
        %v991 = vld [vmem:[%s436 + $0x90] sm:$0xff]
        %v992 = vld [vmem:[%s436 + $0x98] sm:$0xff]
        %v993 = vld [vmem:[%s436 + $0xa0] sm:$0xff]
        %v994 = vld [vmem:[%s436 + $0xa8] sm:$0xff]
        %v995 = vld [vmem:[%s436 + $0xb0] sm:$0xff]
        %v996 = vld [vmem:[%s436 + $0xb8] sm:$0xff]
        %v997 = vld [vmem:[%s436 + $0xc0] sm:$0xff]
        %v998 = vld [vmem:[%s436 + $0xc8] sm:$0xff]
        %v999 = vld [vmem:[%s436 + $0xd0] sm:$0xff]
        %v1000 = vld [vmem:[%s436 + $0xd8] sm:$0xff]
        %v1001 = vld [vmem:[%s436 + $0xe0] sm:$0xff]
        %v1002 = vld [vmem:[%s436 + $0xe8] sm:$0xff]
        %v1003 = vld [vmem:[%s436 + $0xf0] sm:$0xff]
        %v1004 = vld [vmem:[%s436 + $0xf8] sm:$0xff]
        %1005 = vmatprep.subr.mxu0 0.0
        %1006 = vmatpush1.msra.mxu0 %v973
        %1007 = vmatprep.subr.mxu0 0.0
        %1008 = vmatpush1.msra.mxu0 %v974
        %1009 = vmatprep.subr.mxu0 0.0
        %1010 = vmatpush1.msra.mxu0 %v975
        %1011 = vmatprep.subr.mxu0 0.0
        %1012 = vmatpush1.msra.mxu0 %v976
        %1013 = vmatprep.subr.mxu0 0.0
        %1014 = vmatpush1.msra.mxu0 %v977
        %1015 = vmatprep.subr.mxu0 0.0
        %1016 = vmatpush1.msra.mxu0 %v978
        %1017 = vmatprep.subr.mxu0 0.0
        %1018 = vmatpush1.msra.mxu0 %v979
        %1019 = vmatprep.subr.mxu0 0.0
        %1020 = vmatpush1.msra.mxu0 %v980
        %1021 = vmatprep.subr.mxu0 0.0
        %1022 = vmatpush1.msra.mxu0 %v981
        %1023 = vmatprep.subr.mxu0 0.0
        %1024 = vmatpush1.msra.mxu0 %v982
        %1025 = vmatprep.subr.mxu0 0.0
        %1026 = vmatpush1.msra.mxu0 %v983
        %1027 = vmatprep.subr.mxu0 0.0
        %1028 = vmatpush1.msra.mxu0 %v984
        %1029 = vmatprep.subr.mxu0 0.0
        %1030 = vmatpush1.msra.mxu0 %v985
        %1031 = vmatprep.subr.mxu0 0.0
        %1032 = vmatpush1.msra.mxu0 %v986
        %1033 = vmatprep.subr.mxu0 0.0
        %1034 = vmatpush1.msra.mxu0 %v987
        %1035 = vmatprep.subr.mxu0 0.0
        %1036 = vmatpush1.msra.mxu0 %v988
        %1037 = vmatprep.subr.mxu0 0.0
        %1038 = vmatpush1.msra.mxu0 %v989
        %1039 = vmatprep.subr.mxu0 0.0
        %1040 = vmatpush1.msra.mxu0 %v990
        %1041 = vmatprep.subr.mxu0 0.0
        %1042 = vmatpush1.msra.mxu0 %v991
        %1043 = vmatprep.subr.mxu0 0.0
        %1044 = vmatpush1.msra.mxu0 %v992
        %1045 = vmatprep.subr.mxu0 0.0
        %1046 = vmatpush1.msra.mxu0 %v993
        %1047 = vmatprep.subr.mxu0 0.0
        %1048 = vmatpush1.msra.mxu0 %v994
        %1049 = vmatprep.subr.mxu0 0.0
        %1050 = vmatpush1.msra.mxu0 %v995
        %1051 = vmatprep.subr.mxu0 0.0
        %1052 = vmatpush1.msra.mxu0 %v996
        %1053 = vmatprep.subr.mxu0 0.0
        %1054 = vmatpush1.msra.mxu0 %v997
        %1055 = vmatprep.subr.mxu0 0.0
        %1056 = vmatpush1.msra.mxu0 %v998
        %1057 = vmatprep.subr.mxu0 0.0
        %1058 = vmatpush1.msra.mxu0 %v999
        %1059 = vmatprep.subr.mxu0 0.0
        %1060 = vmatpush1.msra.mxu0 %v1000
        %1061 = vmatprep.subr.mxu0 0.0
        %1062 = vmatpush1.msra.mxu0 %v1001
        %1063 = vmatprep.subr.mxu0 0.0
        %1064 = vmatpush1.msra.mxu0 %v1002
        %1065 = vmatprep.subr.mxu0 0.0
        %1066 = vmatpush1.msra.mxu0 %v1003
        %1067 = vmatprep.subr.mxu0 0.0
        %1068 = vmatpush1.msra.mxu0 %v1004
        %1069 = vmatprep.mubr.f32.mxu0 %v926
        %1070 = vmatmul.mubr.f32.gmra.mrb[0].mxu0 %v925
        %v1071 = vpop.f32.mrb[0].mxu0
        %v1072 = vadd.f32 0.0, %v1071
        %v1073 = vpop.f32.mrb[0].mxu0
        %1074 = vmatprep.mubr.f32.mxu0 %v928
        %1075 = vmatmul.mubr.f32.gmra.mrb[0].mxu0 %v927
        %v1076 = vpop.f32.mrb[0].mxu0
        %v1077 = vadd.f32 0.0, %v1076
        %v1078 = vpop.f32.mrb[0].mxu0
        %1079 = vmatprep.mubr.f32.mxu0 %v930
        %1080 = vmatmul.mubr.f32.gmra.mrb[0].mxu0 %v929
        %v1081 = vpop.f32.mrb[0].mxu0
        %v1082 = vadd.f32 0.0, %v1081
        %v1083 = vpop.f32.mrb[0].mxu0
        %1084 = vmatprep.mubr.f32.mxu0 %v932
        %1085 = vmatmul.mubr.f32.gmra.mrb[0].mxu0 %v931
        %v1086 = vpop.f32.mrb[0].mxu0
        %v1087 = vadd.f32 0.0, %v1086
        %v1088 = vpop.f32.mrb[0].mxu0
        %1089 = vmatprep.mubr.f32.mxu0 %v934
        %1090 = vmatmul.mubr.f32.gmra.mrb[0].mxu0 %v933
        %v1091 = vpop.f32.mrb[0].mxu0
        %v1092 = vadd.f32 0.0, %v1091
        %v1093 = vpop.f32.mrb[0].mxu0
        %1094 = vmatprep.mubr.f32.mxu0 %v936
        %1095 = vmatmul.mubr.f32.gmra.mrb[0].mxu0 %v935
        %v1096 = vpop.f32.mrb[0].mxu0
        %v1097 = vadd.f32 0.0, %v1096
        %v1098 = vpop.f32.mrb[0].mxu0
        %1099 = vmatprep.mubr.f32.mxu0 %v938
        %1100 = vmatmul.mubr.f32.gmra.mrb[0].mxu0 %v937
        %v1101 = vpop.f32.mrb[0].mxu0
        %v1102 = vadd.f32 0.0, %v1101
        %v1103 = vpop.f32.mrb[0].mxu0
        %1104 = vmatprep.mubr.f32.mxu0 %v940
        %1105 = vmatmul.mubr.f32.gmra.mrb[0].mxu0 %v939
        %v1106 = vpop.f32.mrb[0].mxu0
        %v1107 = vadd.f32 0.0, %v1106
        %v1108 = vpop.f32.mrb[0].mxu0
        %1109 = vmatprep.mubr.f32.mxu0 %v942
        %1110 = vmatmul.mubr.f32.gmra.mrb[0].mxu0 %v941
        %v1111 = vpop.f32.mrb[0].mxu0
        %v1112 = vadd.f32 0.0, %v1111
        %v1113 = vpop.f32.mrb[0].mxu0
        %1114 = vmatprep.mubr.f32.mxu0 %v944
        %1115 = vmatmul.mubr.f32.gmra.mrb[0].mxu0 %v943
        %v1116 = vpop.f32.mrb[0].mxu0
        %v1117 = vadd.f32 0.0, %v1116
        %v1118 = vpop.f32.mrb[0].mxu0
        %1119 = vmatprep.mubr.f32.mxu0 %v946
        %1120 = vmatmul.mubr.f32.gmra.mrb[0].mxu0 %v945
        %v1121 = vpop.f32.mrb[0].mxu0
        %v1122 = vadd.f32 0.0, %v1121
        %v1123 = vpop.f32.mrb[0].mxu0
        %1124 = vmatprep.mubr.f32.mxu0 %v948
        %1125 = vmatmul.mubr.f32.gmra.mrb[0].mxu0 %v947
        %v1126 = vpop.f32.mrb[0].mxu0
        %v1127 = vadd.f32 0.0, %v1126
        %v1128 = vpop.f32.mrb[0].mxu0
        %1129 = vmatprep.mubr.f32.mxu0 %v950
        %1130 = vmatmul.mubr.f32.gmra.mrb[0].mxu0 %v949
        %v1131 = vpop.f32.mrb[0].mxu0
        %v1132 = vadd.f32 0.0, %v1131
        %v1133 = vpop.f32.mrb[0].mxu0
        %1134 = vmatprep.mubr.f32.mxu0 %v952
        %1135 = vmatmul.mubr.f32.gmra.mrb[0].mxu0 %v951
        %v1136 = vpop.f32.mrb[0].mxu0
        %v1137 = vadd.f32 0.0, %v1136
        %v1138 = vpop.f32.mrb[0].mxu0
        %1139 = vmatprep.mubr.f32.mxu0 %v954
        %1140 = vmatmul.mubr.f32.gmra.mrb[0].mxu0 %v953
        %v1141 = vpop.f32.mrb[0].mxu0
        %v1142 = vadd.f32 0.0, %v1141
        %v1143 = vpop.f32.mrb[0].mxu0
        %1144 = vmatprep.mubr.f32.mxu0 %v956
        %1145 = vmatmul.mubr.f32.gmra.mrb[0].mxu0 %v955
        %v1146 = vpop.f32.mrb[0].mxu0
        %v1147 = vadd.f32 0.0, %v1146
        %v1148 = vpop.f32.mrb[0].mxu0
        %1149 = vdwg.mxu0
        %v1150 = vadd.f32 %v957, %v1072
        %v1151 = vadd.f32 %v958, %v1077
        %v1152 = vadd.f32 %v959, %v1082
        %v1153 = vadd.f32 %v960, %v1087
        %v1154 = vadd.f32 %v961, %v1092
        %v1155 = vadd.f32 %v962, %v1097
        %v1156 = vadd.f32 %v963, %v1102
        %v1157 = vadd.f32 %v964, %v1107
        %v1158 = vadd.f32 %v965, %v1112
        %v1159 = vadd.f32 %v966, %v1117
        %v1160 = vadd.f32 %v967, %v1122
        %v1161 = vadd.f32 %v968, %v1127
        %v1162 = vadd.f32 %v969, %v1132
        %v1163 = vadd.f32 %v970, %v1137
        %v1164 = vadd.f32 %v971, %v1142
        %v1165 = vadd.f32 %v972, %v1147
        %vm1166 = vcmask 138240
        %1167 = vst.msk [vmem:[#allocation2] sm:$0xff] %vm1166, %v1150
        %1168 = vst.msk [vmem:[#allocation2 + $0x8] sm:$0xff] %vm1166, %v1151
        %1169 = vst.msk [vmem:[#allocation2 + $0x10] sm:$0xff] %vm1166, %v1152
        %1170 = vst.msk [vmem:[#allocation2 + $0x18] sm:$0xff] %vm1166, %v1153
        %1171 = vst.msk [vmem:[#allocation2 + $0x20] sm:$0xff] %vm1166, %v1154
        %1172 = vst.msk [vmem:[#allocation2 + $0x28] sm:$0xff] %vm1166, %v1155
        %1173 = vst.msk [vmem:[#allocation2 + $0x30] sm:$0xff] %vm1166, %v1156
        %1174 = vst.msk [vmem:[#allocation2 + $0x38] sm:$0xff] %vm1166, %v1157
        %1175 = vst.msk [vmem:[#allocation2 + $0x40] sm:$0xff] %vm1166, %v1158
        %1176 = vst.msk [vmem:[#allocation2 + $0x48] sm:$0xff] %vm1166, %v1159
        %1177 = vst.msk [vmem:[#allocation2 + $0x50] sm:$0xff] %vm1166, %v1160
        %1178 = vst.msk [vmem:[#allocation2 + $0x58] sm:$0xff] %vm1166, %v1161
        %1179 = vst.msk [vmem:[#allocation2 + $0x60] sm:$0xff] %vm1166, %v1162
        %1180 = vst.msk [vmem:[#allocation2 + $0x68] sm:$0xff] %vm1166, %v1163
        %1181 = vst.msk [vmem:[#allocation2 + $0x70] sm:$0xff] %vm1166, %v1164
        %1182 = vst.msk [vmem:[#allocation2 + $0x78] sm:$0xff] %vm1166, %v1165
        %1183 = vset.pattern.permute.xlu0 1
        %1184 = vperm.xlu0 %1183, %v597
        %v1185 = vpop.permute.xlu0 %1184
        %1187 = vset.pattern.permute.xlu0 1
        %1188 = vperm.xlu0 %1187, %v598
        %v1189 = vpop.permute.xlu0 %1188
        %1191 = vset.pattern.permute.xlu0 1
        %1192 = vperm.xlu0 %1191, %v599
        %v1193 = vpop.permute.xlu0 %1192
        %1195 = vset.pattern.permute.xlu0 1
        %1196 = vperm.xlu0 %1195, %v600
        %v1197 = vpop.permute.xlu0 %1196
        %1199 = vset.pattern.permute.xlu0 1
        %1200 = vperm.xlu0 %1199, %v601
        %v1201 = vpop.permute.xlu0 %1200
        %1203 = vset.pattern.permute.xlu0 1
        %1204 = vperm.xlu0 %1203, %v602
        %v1205 = vpop.permute.xlu0 %1204
        %1207 = vset.pattern.permute.xlu0 1
        %1208 = vperm.xlu0 %1207, %v603
        %v1209 = vpop.permute.xlu0 %1208
        %1211 = vset.pattern.permute.xlu0 1
        %1212 = vperm.xlu0 %1211, %v604
        %v1213 = vpop.permute.xlu0 %1212
        %1215 = vset.pattern.permute.xlu0 1
        %1216 = vperm.xlu0 %1215, %v605
        %v1217 = vpop.permute.xlu0 %1216
        %1219 = vset.pattern.permute.xlu0 1
        %1220 = vperm.xlu0 %1219, %v606
        %v1221 = vpop.permute.xlu0 %1220
        %1223 = vset.pattern.permute.xlu0 1
        %1224 = vperm.xlu0 %1223, %v607
        %v1225 = vpop.permute.xlu0 %1224
        %1227 = vset.pattern.permute.xlu0 1
        %1228 = vperm.xlu0 %1227, %v608
        %v1229 = vpop.permute.xlu0 %1228
        %1231 = vset.pattern.permute.xlu0 1
        %1232 = vperm.xlu0 %1231, %v609
        %v1233 = vpop.permute.xlu0 %1232
        %1235 = vset.pattern.permute.xlu0 1
        %1236 = vperm.xlu0 %1235, %v610
        %v1237 = vpop.permute.xlu0 %1236
        %1239 = vset.pattern.permute.xlu0 1
        %1240 = vperm.xlu0 %1239, %v611
        %v1241 = vpop.permute.xlu0 %1240
        %1243 = vset.pattern.permute.xlu0 1
        %1244 = vperm.xlu0 %1243, %v612
        %v1245 = vpop.permute.xlu0 %1244
        %v1247 = vlaneseq
        %v1248 = vshrl.u32 %v1247, 7
        %v1249 = vsub.s32 1, %v1248
        %v1250 = vrot.slane %v629, %v1249
        %v1251 = vlaneseq
        %v1252 = vshrl.u32 %v1251, 7
        %v1253 = vsub.s32 5, %v1252
        %v1254 = vrot.slane %v629, %v1253
        %v1257 = vlaneseq
        %v1258 = vshrl.u32 %v1257, 7
        %v1259 = vsub.s32 1, %v1258
        %v1260 = vrot.slane %v1250, %v1259
        %v1261 = vlaneseq
        %v1262 = vshrl.u32 %v1261, 7
        %v1263 = vsub.s32 1, %v1262
        %v1264 = vrot.slane %v1254, %v1263
        %v1265 = vmul.f32 %v1185, %v1260
        %v1266 = vmul.f32 %v1185, %v1264
        %v1267 = vmul.f32 %v1189, %v1260
        %v1268 = vmul.f32 %v1189, %v1264
        %v1269 = vmul.f32 %v1193, %v1260
        %v1270 = vmul.f32 %v1193, %v1264
        %v1271 = vmul.f32 %v1197, %v1260
        %v1272 = vmul.f32 %v1197, %v1264
        %v1273 = vmul.f32 %v1201, %v1260
        %v1274 = vmul.f32 %v1201, %v1264
        %v1275 = vmul.f32 %v1205, %v1260
        %v1276 = vmul.f32 %v1205, %v1264
        %v1277 = vmul.f32 %v1209, %v1260
        %v1278 = vmul.f32 %v1209, %v1264
        %v1279 = vmul.f32 %v1213, %v1260
        %v1280 = vmul.f32 %v1213, %v1264
        %v1281 = vmul.f32 %v1217, %v1260
        %v1282 = vmul.f32 %v1217, %v1264
        %v1283 = vmul.f32 %v1221, %v1260
        %v1284 = vmul.f32 %v1221, %v1264
        %v1285 = vmul.f32 %v1225, %v1260
        %v1286 = vmul.f32 %v1225, %v1264
        %v1287 = vmul.f32 %v1229, %v1260
        %v1288 = vmul.f32 %v1229, %v1264
        %v1289 = vmul.f32 %v1233, %v1260
        %v1290 = vmul.f32 %v1233, %v1264
        %v1291 = vmul.f32 %v1237, %v1260
        %v1292 = vmul.f32 %v1237, %v1264
        %v1293 = vmul.f32 %v1241, %v1260
        %v1294 = vmul.f32 %v1241, %v1264
        %v1295 = vmul.f32 %v1245, %v1260
        %v1296 = vmul.f32 %v1245, %v1264
        %1297 = vset.pattern.permute.xlu0 1
        %1298 = vperm.xlu0 %1297, %v613
        %v1299 = vpop.permute.xlu0 %1298
        %1301 = vset.pattern.permute.xlu0 1
        %1302 = vperm.xlu0 %1301, %v614
        %v1303 = vpop.permute.xlu0 %1302
        %1305 = vset.pattern.permute.xlu0 1
        %1306 = vperm.xlu0 %1305, %v615
        %v1307 = vpop.permute.xlu0 %1306
        %1309 = vset.pattern.permute.xlu0 1
        %1310 = vperm.xlu0 %1309, %v616
        %v1311 = vpop.permute.xlu0 %1310
        %1313 = vset.pattern.permute.xlu0 1
        %1314 = vperm.xlu0 %1313, %v617
        %v1315 = vpop.permute.xlu0 %1314
        %1317 = vset.pattern.permute.xlu0 1
        %1318 = vperm.xlu0 %1317, %v618
        %v1319 = vpop.permute.xlu0 %1318
        %1321 = vset.pattern.permute.xlu0 1
        %1322 = vperm.xlu0 %1321, %v619
        %v1323 = vpop.permute.xlu0 %1322
        %1325 = vset.pattern.permute.xlu0 1
        %1326 = vperm.xlu0 %1325, %v620
        %v1327 = vpop.permute.xlu0 %1326
        %1329 = vset.pattern.permute.xlu0 1
        %1330 = vperm.xlu0 %1329, %v621
        %v1331 = vpop.permute.xlu0 %1330
        %1333 = vset.pattern.permute.xlu0 1
        %1334 = vperm.xlu0 %1333, %v622
        %v1335 = vpop.permute.xlu0 %1334
        %1337 = vset.pattern.permute.xlu0 1
        %1338 = vperm.xlu0 %1337, %v623
        %v1339 = vpop.permute.xlu0 %1338
        %1341 = vset.pattern.permute.xlu0 1
        %1342 = vperm.xlu0 %1341, %v624
        %v1343 = vpop.permute.xlu0 %1342
        %1345 = vset.pattern.permute.xlu0 1
        %1346 = vperm.xlu0 %1345, %v625
        %v1347 = vpop.permute.xlu0 %1346
        %1349 = vset.pattern.permute.xlu0 1
        %1350 = vperm.xlu0 %1349, %v626
        %v1351 = vpop.permute.xlu0 %1350
        %1353 = vset.pattern.permute.xlu0 1
        %1354 = vperm.xlu0 %1353, %v627
        %v1355 = vpop.permute.xlu0 %1354
        %1357 = vset.pattern.permute.xlu0 1
        %1358 = vperm.xlu0 %1357, %v628
        %v1359 = vpop.permute.xlu0 %1358
        %v1361 = vlaneseq
        %v1362 = vshrl.u32 %v1361, 7
        %v1363 = vsub.s32 1, %v1362
        %v1364 = vrot.slane %v630, %v1363
        %v1365 = vlaneseq
        %v1366 = vshrl.u32 %v1365, 7
        %v1367 = vsub.s32 5, %v1366
        %v1368 = vrot.slane %v630, %v1367
        %v1371 = vlaneseq
        %v1372 = vshrl.u32 %v1371, 7
        %v1373 = vsub.s32 1, %v1372
        %v1374 = vrot.slane %v1364, %v1373
        %v1375 = vlaneseq
        %v1376 = vshrl.u32 %v1375, 7
        %v1377 = vsub.s32 1, %v1376
        %v1378 = vrot.slane %v1368, %v1377
        %v1379 = vmul.f32 %v1299, %v1374
        %v1380 = vmul.f32 %v1299, %v1378
        %v1381 = vmul.f32 %v1303, %v1374
        %v1382 = vmul.f32 %v1303, %v1378
        %v1383 = vmul.f32 %v1307, %v1374
        %v1384 = vmul.f32 %v1307, %v1378
        %v1385 = vmul.f32 %v1311, %v1374
        %v1386 = vmul.f32 %v1311, %v1378
        %v1387 = vmul.f32 %v1315, %v1374
        %v1388 = vmul.f32 %v1315, %v1378
        %v1389 = vmul.f32 %v1319, %v1374
        %v1390 = vmul.f32 %v1319, %v1378
        %v1391 = vmul.f32 %v1323, %v1374
        %v1392 = vmul.f32 %v1323, %v1378
        %v1393 = vmul.f32 %v1327, %v1374
        %v1394 = vmul.f32 %v1327, %v1378
        %v1395 = vmul.f32 %v1331, %v1374
        %v1396 = vmul.f32 %v1331, %v1378
        %v1397 = vmul.f32 %v1335, %v1374
        %v1398 = vmul.f32 %v1335, %v1378
        %v1399 = vmul.f32 %v1339, %v1374
        %v1400 = vmul.f32 %v1339, %v1378
        %v1401 = vmul.f32 %v1343, %v1374
        %v1402 = vmul.f32 %v1343, %v1378
        %v1403 = vmul.f32 %v1347, %v1374
        %v1404 = vmul.f32 %v1347, %v1378
        %v1405 = vmul.f32 %v1351, %v1374
        %v1406 = vmul.f32 %v1351, %v1378
        %v1407 = vmul.f32 %v1355, %v1374
        %v1408 = vmul.f32 %v1355, %v1378
        %v1409 = vmul.f32 %v1359, %v1374
        %v1410 = vmul.f32 %v1359, %v1378
        %v1411 = vmin.f32 %v1265, %v1379
        %v1412 = vmin.f32 %v1266, %v1380
        %v1413 = vmin.f32 %v1267, %v1381
        %v1414 = vmin.f32 %v1268, %v1382
        %v1415 = vmin.f32 %v1269, %v1383
        %v1416 = vmin.f32 %v1270, %v1384
        %v1417 = vmin.f32 %v1271, %v1385
        %v1418 = vmin.f32 %v1272, %v1386
        %v1419 = vmin.f32 %v1273, %v1387
        %v1420 = vmin.f32 %v1274, %v1388
        %v1421 = vmin.f32 %v1275, %v1389
        %v1422 = vmin.f32 %v1276, %v1390
        %v1423 = vmin.f32 %v1277, %v1391
        %v1424 = vmin.f32 %v1278, %v1392
        %v1425 = vmin.f32 %v1279, %v1393
        %v1426 = vmin.f32 %v1280, %v1394
        %v1427 = vmin.f32 %v1281, %v1395
        %v1428 = vmin.f32 %v1282, %v1396
        %v1429 = vmin.f32 %v1283, %v1397
        %v1430 = vmin.f32 %v1284, %v1398
        %v1431 = vmin.f32 %v1285, %v1399
        %v1432 = vmin.f32 %v1286, %v1400
        %v1433 = vmin.f32 %v1287, %v1401
        %v1434 = vmin.f32 %v1288, %v1402
        %v1435 = vmin.f32 %v1289, %v1403
        %v1436 = vmin.f32 %v1290, %v1404
        %v1437 = vmin.f32 %v1291, %v1405
        %v1438 = vmin.f32 %v1292, %v1406
        %v1439 = vmin.f32 %v1293, %v1407
        %v1440 = vmin.f32 %v1294, %v1408
        %v1441 = vmin.f32 %v1295, %v1409
        %v1442 = vmin.f32 %v1296, %v1410
        %v1443 = vmul.f32 %v1411, %v565
        %v1444 = vmul.f32 %v1412, %v566
        %v1445 = vmul.f32 %v1413, %v567
        %v1446 = vmul.f32 %v1414, %v568
        %v1447 = vmul.f32 %v1415, %v569
        %v1448 = vmul.f32 %v1416, %v570
        %v1449 = vmul.f32 %v1417, %v571
        %v1450 = vmul.f32 %v1418, %v572
        %v1451 = vmul.f32 %v1419, %v573
        %v1452 = vmul.f32 %v1420, %v574
        %v1453 = vmul.f32 %v1421, %v575
        %v1454 = vmul.f32 %v1422, %v576
        %v1455 = vmul.f32 %v1423, %v577
        %v1456 = vmul.f32 %v1424, %v578
        %v1457 = vmul.f32 %v1425, %v579
        %v1458 = vmul.f32 %v1426, %v580
        %v1459 = vmul.f32 %v1427, %v581
        %v1460 = vmul.f32 %v1428, %v582
        %v1461 = vmul.f32 %v1429, %v583
        %v1462 = vmul.f32 %v1430, %v584
        %v1463 = vmul.f32 %v1431, %v585
        %v1464 = vmul.f32 %v1432, %v586
        %v1465 = vmul.f32 %v1433, %v587
        %v1466 = vmul.f32 %v1434, %v588
        %v1467 = vmul.f32 %v1435, %v589
        %v1468 = vmul.f32 %v1436, %v590
        %v1469 = vmul.f32 %v1437, %v591
        %v1470 = vmul.f32 %v1438, %v592
        %v1471 = vmul.f32 %v1439, %v593
        %v1472 = vmul.f32 %v1440, %v594
        %v1473 = vmul.f32 %v1441, %v595
        %v1474 = vmul.f32 %v1442, %v596
        %s1475 = scalar_lea.vmem [#allocation2], 128
        %v1476 = vld [vmem:[%s1475] sm:$0xff]
        %v1477 = vld [vmem:[%s1475 + $0x8] sm:$0xff]
        %v1478 = vld [vmem:[%s1475 + $0x10] sm:$0xff]
        %v1479 = vld [vmem:[%s1475 + $0x18] sm:$0xff]
        %v1480 = vld [vmem:[%s1475 + $0x20] sm:$0xff]
        %v1481 = vld [vmem:[%s1475 + $0x28] sm:$0xff]
        %v1482 = vld [vmem:[%s1475 + $0x30] sm:$0xff]
        %v1483 = vld [vmem:[%s1475 + $0x38] sm:$0xff]
        %v1484 = vld [vmem:[%s1475 + $0x40] sm:$0xff]
        %v1485 = vld [vmem:[%s1475 + $0x48] sm:$0xff]
        %v1486 = vld [vmem:[%s1475 + $0x50] sm:$0xff]
        %v1487 = vld [vmem:[%s1475 + $0x58] sm:$0xff]
        %v1488 = vld [vmem:[%s1475 + $0x60] sm:$0xff]
        %v1489 = vld [vmem:[%s1475 + $0x68] sm:$0xff]
        %v1490 = vld [vmem:[%s1475 + $0x70] sm:$0xff]
        %v1491 = vld [vmem:[%s1475 + $0x78] sm:$0xff]
        %s1492 = scalar_lea.vmem %s436, 256
        %v1493 = vld [vmem:[%s1492] sm:$0xff]
        %v1494 = vld [vmem:[%s1492 + $0x8] sm:$0xff]
        %v1495 = vld [vmem:[%s1492 + $0x10] sm:$0xff]
        %v1496 = vld [vmem:[%s1492 + $0x18] sm:$0xff]
        %v1497 = vld [vmem:[%s1492 + $0x20] sm:$0xff]
        %v1498 = vld [vmem:[%s1492 + $0x28] sm:$0xff]
        %v1499 = vld [vmem:[%s1492 + $0x30] sm:$0xff]
        %v1500 = vld [vmem:[%s1492 + $0x38] sm:$0xff]
        %v1501 = vld [vmem:[%s1492 + $0x40] sm:$0xff]
        %v1502 = vld [vmem:[%s1492 + $0x48] sm:$0xff]
        %v1503 = vld [vmem:[%s1492 + $0x50] sm:$0xff]
        %v1504 = vld [vmem:[%s1492 + $0x58] sm:$0xff]
        %v1505 = vld [vmem:[%s1492 + $0x60] sm:$0xff]
        %v1506 = vld [vmem:[%s1492 + $0x68] sm:$0xff]
        %v1507 = vld [vmem:[%s1492 + $0x70] sm:$0xff]
        %v1508 = vld [vmem:[%s1492 + $0x78] sm:$0xff]
        %v1509 = vld [vmem:[%s1492 + $0x80] sm:$0xff]
        %v1510 = vld [vmem:[%s1492 + $0x88] sm:$0xff]
        %v1511 = vld [vmem:[%s1492 + $0x90] sm:$0xff]
        %v1512 = vld [vmem:[%s1492 + $0x98] sm:$0xff]
        %v1513 = vld [vmem:[%s1492 + $0xa0] sm:$0xff]
        %v1514 = vld [vmem:[%s1492 + $0xa8] sm:$0xff]
        %v1515 = vld [vmem:[%s1492 + $0xb0] sm:$0xff]
        %v1516 = vld [vmem:[%s1492 + $0xb8] sm:$0xff]
        %v1517 = vld [vmem:[%s1492 + $0xc0] sm:$0xff]
        %v1518 = vld [vmem:[%s1492 + $0xc8] sm:$0xff]
        %v1519 = vld [vmem:[%s1492 + $0xd0] sm:$0xff]
        %v1520 = vld [vmem:[%s1492 + $0xd8] sm:$0xff]
        %v1521 = vld [vmem:[%s1492 + $0xe0] sm:$0xff]
        %v1522 = vld [vmem:[%s1492 + $0xe8] sm:$0xff]
        %v1523 = vld [vmem:[%s1492 + $0xf0] sm:$0xff]
        %v1524 = vld [vmem:[%s1492 + $0xf8] sm:$0xff]
        %1525 = vmatprep.subr.mxu0 0.0
        %1526 = vmatpush1.msra.mxu0 %v1493
        %1527 = vmatprep.subr.mxu0 0.0
        %1528 = vmatpush1.msra.mxu0 %v1494
        %1529 = vmatprep.subr.mxu0 0.0
        %1530 = vmatpush1.msra.mxu0 %v1495
        %1531 = vmatprep.subr.mxu0 0.0
        %1532 = vmatpush1.msra.mxu0 %v1496
        %1533 = vmatprep.subr.mxu0 0.0
        %1534 = vmatpush1.msra.mxu0 %v1497
        %1535 = vmatprep.subr.mxu0 0.0
        %1536 = vmatpush1.msra.mxu0 %v1498
        %1537 = vmatprep.subr.mxu0 0.0
        %1538 = vmatpush1.msra.mxu0 %v1499
        %1539 = vmatprep.subr.mxu0 0.0
        %1540 = vmatpush1.msra.mxu0 %v1500
        %1541 = vmatprep.subr.mxu0 0.0
        %1542 = vmatpush1.msra.mxu0 %v1501
        %1543 = vmatprep.subr.mxu0 0.0
        %1544 = vmatpush1.msra.mxu0 %v1502
        %1545 = vmatprep.subr.mxu0 0.0
        %1546 = vmatpush1.msra.mxu0 %v1503
        %1547 = vmatprep.subr.mxu0 0.0
        %1548 = vmatpush1.msra.mxu0 %v1504
        %1549 = vmatprep.subr.mxu0 0.0
        %1550 = vmatpush1.msra.mxu0 %v1505
        %1551 = vmatprep.subr.mxu0 0.0
        %1552 = vmatpush1.msra.mxu0 %v1506
        %1553 = vmatprep.subr.mxu0 0.0
        %1554 = vmatpush1.msra.mxu0 %v1507
        %1555 = vmatprep.subr.mxu0 0.0
        %1556 = vmatpush1.msra.mxu0 %v1508
        %1557 = vmatprep.subr.mxu0 0.0
        %1558 = vmatpush1.msra.mxu0 %v1509
        %1559 = vmatprep.subr.mxu0 0.0
        %1560 = vmatpush1.msra.mxu0 %v1510
        %1561 = vmatprep.subr.mxu0 0.0
        %1562 = vmatpush1.msra.mxu0 %v1511
        %1563 = vmatprep.subr.mxu0 0.0
        %1564 = vmatpush1.msra.mxu0 %v1512
        %1565 = vmatprep.subr.mxu0 0.0
        %1566 = vmatpush1.msra.mxu0 %v1513
        %1567 = vmatprep.subr.mxu0 0.0
        %1568 = vmatpush1.msra.mxu0 %v1514
        %1569 = vmatprep.subr.mxu0 0.0
        %1570 = vmatpush1.msra.mxu0 %v1515
        %1571 = vmatprep.subr.mxu0 0.0
        %1572 = vmatpush1.msra.mxu0 %v1516
        %1573 = vmatprep.subr.mxu0 0.0
        %1574 = vmatpush1.msra.mxu0 %v1517
        %1575 = vmatprep.subr.mxu0 0.0
        %1576 = vmatpush1.msra.mxu0 %v1518
        %1577 = vmatprep.subr.mxu0 0.0
        %1578 = vmatpush1.msra.mxu0 %v1519
        %1579 = vmatprep.subr.mxu0 0.0
        %1580 = vmatpush1.msra.mxu0 %v1520
        %1581 = vmatprep.subr.mxu0 0.0
        %1582 = vmatpush1.msra.mxu0 %v1521
        %1583 = vmatprep.subr.mxu0 0.0
        %1584 = vmatpush1.msra.mxu0 %v1522
        %1585 = vmatprep.subr.mxu0 0.0
        %1586 = vmatpush1.msra.mxu0 %v1523
        %1587 = vmatprep.subr.mxu0 0.0
        %1588 = vmatpush1.msra.mxu0 %v1524
        %1589 = vmatprep.mubr.f32.mxu0 %v1444
        %1590 = vmatmul.mubr.f32.gmra.mrb[0].mxu0 %v1443
        %v1591 = vpop.f32.mrb[0].mxu0
        %v1592 = vadd.f32 0.0, %v1591
        %v1593 = vpop.f32.mrb[0].mxu0
        %1594 = vmatprep.mubr.f32.mxu0 %v1446
        %1595 = vmatmul.mubr.f32.gmra.mrb[0].mxu0 %v1445
        %v1596 = vpop.f32.mrb[0].mxu0
        %v1597 = vadd.f32 0.0, %v1596
        %v1598 = vpop.f32.mrb[0].mxu0
        %1599 = vmatprep.mubr.f32.mxu0 %v1448
        %1600 = vmatmul.mubr.f32.gmra.mrb[0].mxu0 %v1447
        %v1601 = vpop.f32.mrb[0].mxu0
        %v1602 = vadd.f32 0.0, %v1601
        %v1603 = vpop.f32.mrb[0].mxu0
        %1604 = vmatprep.mubr.f32.mxu0 %v1450
        %1605 = vmatmul.mubr.f32.gmra.mrb[0].mxu0 %v1449
        %v1606 = vpop.f32.mrb[0].mxu0
        %v1607 = vadd.f32 0.0, %v1606
        %v1608 = vpop.f32.mrb[0].mxu0
        %1609 = vmatprep.mubr.f32.mxu0 %v1452
        %1610 = vmatmul.mubr.f32.gmra.mrb[0].mxu0 %v1451
        %v1611 = vpop.f32.mrb[0].mxu0
        %v1612 = vadd.f32 0.0, %v1611
        %v1613 = vpop.f32.mrb[0].mxu0
        %1614 = vmatprep.mubr.f32.mxu0 %v1454
        %1615 = vmatmul.mubr.f32.gmra.mrb[0].mxu0 %v1453
        %v1616 = vpop.f32.mrb[0].mxu0
        %v1617 = vadd.f32 0.0, %v1616
        %v1618 = vpop.f32.mrb[0].mxu0
        %1619 = vmatprep.mubr.f32.mxu0 %v1456
        %1620 = vmatmul.mubr.f32.gmra.mrb[0].mxu0 %v1455
        %v1621 = vpop.f32.mrb[0].mxu0
        %v1622 = vadd.f32 0.0, %v1621
        %v1623 = vpop.f32.mrb[0].mxu0
        %1624 = vmatprep.mubr.f32.mxu0 %v1458
        %1625 = vmatmul.mubr.f32.gmra.mrb[0].mxu0 %v1457
        %v1626 = vpop.f32.mrb[0].mxu0
        %v1627 = vadd.f32 0.0, %v1626
        %v1628 = vpop.f32.mrb[0].mxu0
        %1629 = vmatprep.mubr.f32.mxu0 %v1460
        %1630 = vmatmul.mubr.f32.gmra.mrb[0].mxu0 %v1459
        %v1631 = vpop.f32.mrb[0].mxu0
        %v1632 = vadd.f32 0.0, %v1631
        %v1633 = vpop.f32.mrb[0].mxu0
        %1634 = vmatprep.mubr.f32.mxu0 %v1462
        %1635 = vmatmul.mubr.f32.gmra.mrb[0].mxu0 %v1461
        %v1636 = vpop.f32.mrb[0].mxu0
        %v1637 = vadd.f32 0.0, %v1636
        %v1638 = vpop.f32.mrb[0].mxu0
        %1639 = vmatprep.mubr.f32.mxu0 %v1464
        %1640 = vmatmul.mubr.f32.gmra.mrb[0].mxu0 %v1463
        %v1641 = vpop.f32.mrb[0].mxu0
        %v1642 = vadd.f32 0.0, %v1641
        %v1643 = vpop.f32.mrb[0].mxu0
        %1644 = vmatprep.mubr.f32.mxu0 %v1466
        %1645 = vmatmul.mubr.f32.gmra.mrb[0].mxu0 %v1465
        %v1646 = vpop.f32.mrb[0].mxu0
        %v1647 = vadd.f32 0.0, %v1646
        %v1648 = vpop.f32.mrb[0].mxu0
        %1649 = vmatprep.mubr.f32.mxu0 %v1468
        %1650 = vmatmul.mubr.f32.gmra.mrb[0].mxu0 %v1467
        %v1651 = vpop.f32.mrb[0].mxu0
        %v1652 = vadd.f32 0.0, %v1651
        %v1653 = vpop.f32.mrb[0].mxu0
        %1654 = vmatprep.mubr.f32.mxu0 %v1470
        %1655 = vmatmul.mubr.f32.gmra.mrb[0].mxu0 %v1469
        %v1656 = vpop.f32.mrb[0].mxu0
        %v1657 = vadd.f32 0.0, %v1656
        %v1658 = vpop.f32.mrb[0].mxu0
        %1659 = vmatprep.mubr.f32.mxu0 %v1472
        %1660 = vmatmul.mubr.f32.gmra.mrb[0].mxu0 %v1471
        %v1661 = vpop.f32.mrb[0].mxu0
        %v1662 = vadd.f32 0.0, %v1661
        %v1663 = vpop.f32.mrb[0].mxu0
        %1664 = vmatprep.mubr.f32.mxu0 %v1474
        %1665 = vmatmul.mubr.f32.gmra.mrb[0].mxu0 %v1473
        %v1666 = vpop.f32.mrb[0].mxu0
        %v1667 = vadd.f32 0.0, %v1666
        %v1668 = vpop.f32.mrb[0].mxu0
        %1669 = vdwg.mxu0
        %v1670 = vadd.f32 %v1476, %v1592
        %v1671 = vadd.f32 %v1477, %v1597
        %v1672 = vadd.f32 %v1478, %v1602
        %v1673 = vadd.f32 %v1479, %v1607
        %v1674 = vadd.f32 %v1480, %v1612
        %v1675 = vadd.f32 %v1481, %v1617
        %v1676 = vadd.f32 %v1482, %v1622
        %v1677 = vadd.f32 %v1483, %v1627
        %v1678 = vadd.f32 %v1484, %v1632
        %v1679 = vadd.f32 %v1485, %v1637
        %v1680 = vadd.f32 %v1486, %v1642
        %v1681 = vadd.f32 %v1487, %v1647
        %v1682 = vadd.f32 %v1488, %v1652
        %v1683 = vadd.f32 %v1489, %v1657
        %v1684 = vadd.f32 %v1490, %v1662
        %v1685 = vadd.f32 %v1491, %v1667
        %1686 = vst.msk [vmem:[%s1475] sm:$0xff] %vm1166, %v1670
        %1687 = vst.msk [vmem:[%s1475 + $0x8] sm:$0xff] %vm1166, %v1671
        %1688 = vst.msk [vmem:[%s1475 + $0x10] sm:$0xff] %vm1166, %v1672
        %1689 = vst.msk [vmem:[%s1475 + $0x18] sm:$0xff] %vm1166, %v1673
        %1690 = vst.msk [vmem:[%s1475 + $0x20] sm:$0xff] %vm1166, %v1674
        %1691 = vst.msk [vmem:[%s1475 + $0x28] sm:$0xff] %vm1166, %v1675
        %1692 = vst.msk [vmem:[%s1475 + $0x30] sm:$0xff] %vm1166, %v1676
        %1693 = vst.msk [vmem:[%s1475 + $0x38] sm:$0xff] %vm1166, %v1677
        %1694 = vst.msk [vmem:[%s1475 + $0x40] sm:$0xff] %vm1166, %v1678
        %1695 = vst.msk [vmem:[%s1475 + $0x48] sm:$0xff] %vm1166, %v1679
        %1696 = vst.msk [vmem:[%s1475 + $0x50] sm:$0xff] %vm1166, %v1680
        %1697 = vst.msk [vmem:[%s1475 + $0x58] sm:$0xff] %vm1166, %v1681
        %1698 = vst.msk [vmem:[%s1475 + $0x60] sm:$0xff] %vm1166, %v1682
        %1699 = vst.msk [vmem:[%s1475 + $0x68] sm:$0xff] %vm1166, %v1683
        %1700 = vst.msk [vmem:[%s1475 + $0x70] sm:$0xff] %vm1166, %v1684
        %1701 = vst.msk [vmem:[%s1475 + $0x78] sm:$0xff] %vm1166, %v1685
        %1702 = vset.pattern.permute.xlu0 2
        %1703 = vperm.xlu0 %1702, %v597
        %v1704 = vpop.permute.xlu0 %1703
        %1706 = vset.pattern.permute.xlu0 2
        %1707 = vperm.xlu0 %1706, %v598
        %v1708 = vpop.permute.xlu0 %1707
        %1710 = vset.pattern.permute.xlu0 2
        %1711 = vperm.xlu0 %1710, %v599
        %v1712 = vpop.permute.xlu0 %1711
        %1714 = vset.pattern.permute.xlu0 2
        %1715 = vperm.xlu0 %1714, %v600
        %v1716 = vpop.permute.xlu0 %1715
        %1718 = vset.pattern.permute.xlu0 2
        %1719 = vperm.xlu0 %1718, %v601
        %v1720 = vpop.permute.xlu0 %1719
        %1722 = vset.pattern.permute.xlu0 2
        %1723 = vperm.xlu0 %1722, %v602
        %v1724 = vpop.permute.xlu0 %1723
        %1726 = vset.pattern.permute.xlu0 2
        %1727 = vperm.xlu0 %1726, %v603
        %v1728 = vpop.permute.xlu0 %1727
        %1730 = vset.pattern.permute.xlu0 2
        %1731 = vperm.xlu0 %1730, %v604
        %v1732 = vpop.permute.xlu0 %1731
        %1734 = vset.pattern.permute.xlu0 2
        %1735 = vperm.xlu0 %1734, %v605
        %v1736 = vpop.permute.xlu0 %1735
        %1738 = vset.pattern.permute.xlu0 2
        %1739 = vperm.xlu0 %1738, %v606
        %v1740 = vpop.permute.xlu0 %1739
        %1742 = vset.pattern.permute.xlu0 2
        %1743 = vperm.xlu0 %1742, %v607
        %v1744 = vpop.permute.xlu0 %1743
        %1746 = vset.pattern.permute.xlu0 2
        %1747 = vperm.xlu0 %1746, %v608
        %v1748 = vpop.permute.xlu0 %1747
        %1750 = vset.pattern.permute.xlu0 2
        %1751 = vperm.xlu0 %1750, %v609
        %v1752 = vpop.permute.xlu0 %1751
        %1754 = vset.pattern.permute.xlu0 2
        %1755 = vperm.xlu0 %1754, %v610
        %v1756 = vpop.permute.xlu0 %1755
        %1758 = vset.pattern.permute.xlu0 2
        %1759 = vperm.xlu0 %1758, %v611
        %v1760 = vpop.permute.xlu0 %1759
        %1762 = vset.pattern.permute.xlu0 2
        %1763 = vperm.xlu0 %1762, %v612
        %v1764 = vpop.permute.xlu0 %1763
        %v1766 = vlaneseq
        %v1767 = vshrl.u32 %v1766, 7
        %v1768 = vsub.s32 2, %v1767
        %v1769 = vrot.slane %v629, %v1768
        %v1770 = vlaneseq
        %v1771 = vshrl.u32 %v1770, 7
        %v1772 = vsub.s32 6, %v1771
        %v1773 = vrot.slane %v629, %v1772
        %v1776 = vlaneseq
        %v1777 = vshrl.u32 %v1776, 7
        %v1778 = vsub.s32 2, %v1777
        %v1779 = vrot.slane %v1769, %v1778
        %v1780 = vlaneseq
        %v1781 = vshrl.u32 %v1780, 7
        %v1782 = vsub.s32 2, %v1781
        %v1783 = vrot.slane %v1773, %v1782
        %v1784 = vmul.f32 %v1704, %v1779
        %v1785 = vmul.f32 %v1704, %v1783
        %v1786 = vmul.f32 %v1708, %v1779
        %v1787 = vmul.f32 %v1708, %v1783
        %v1788 = vmul.f32 %v1712, %v1779
        %v1789 = vmul.f32 %v1712, %v1783
        %v1790 = vmul.f32 %v1716, %v1779
        %v1791 = vmul.f32 %v1716, %v1783
        %v1792 = vmul.f32 %v1720, %v1779
        %v1793 = vmul.f32 %v1720, %v1783
        %v1794 = vmul.f32 %v1724, %v1779
        %v1795 = vmul.f32 %v1724, %v1783
        %v1796 = vmul.f32 %v1728, %v1779
        %v1797 = vmul.f32 %v1728, %v1783
        %v1798 = vmul.f32 %v1732, %v1779
        %v1799 = vmul.f32 %v1732, %v1783
        %v1800 = vmul.f32 %v1736, %v1779
        %v1801 = vmul.f32 %v1736, %v1783
        %v1802 = vmul.f32 %v1740, %v1779
        %v1803 = vmul.f32 %v1740, %v1783
        %v1804 = vmul.f32 %v1744, %v1779
        %v1805 = vmul.f32 %v1744, %v1783
        %v1806 = vmul.f32 %v1748, %v1779
        %v1807 = vmul.f32 %v1748, %v1783
        %v1808 = vmul.f32 %v1752, %v1779
        %v1809 = vmul.f32 %v1752, %v1783
        %v1810 = vmul.f32 %v1756, %v1779
        %v1811 = vmul.f32 %v1756, %v1783
        %v1812 = vmul.f32 %v1760, %v1779
        %v1813 = vmul.f32 %v1760, %v1783
        %v1814 = vmul.f32 %v1764, %v1779
        %v1815 = vmul.f32 %v1764, %v1783
        %1816 = vset.pattern.permute.xlu0 2
        %1817 = vperm.xlu0 %1816, %v613
        %v1818 = vpop.permute.xlu0 %1817
        %1820 = vset.pattern.permute.xlu0 2
        %1821 = vperm.xlu0 %1820, %v614
        %v1822 = vpop.permute.xlu0 %1821
        %1824 = vset.pattern.permute.xlu0 2
        %1825 = vperm.xlu0 %1824, %v615
        %v1826 = vpop.permute.xlu0 %1825
        %1828 = vset.pattern.permute.xlu0 2
        %1829 = vperm.xlu0 %1828, %v616
        %v1830 = vpop.permute.xlu0 %1829
        %1832 = vset.pattern.permute.xlu0 2
        %1833 = vperm.xlu0 %1832, %v617
        %v1834 = vpop.permute.xlu0 %1833
        %1836 = vset.pattern.permute.xlu0 2
        %1837 = vperm.xlu0 %1836, %v618
        %v1838 = vpop.permute.xlu0 %1837
        %1840 = vset.pattern.permute.xlu0 2
        %1841 = vperm.xlu0 %1840, %v619
        %v1842 = vpop.permute.xlu0 %1841
        %1844 = vset.pattern.permute.xlu0 2
        %1845 = vperm.xlu0 %1844, %v620
        %v1846 = vpop.permute.xlu0 %1845
        %1848 = vset.pattern.permute.xlu0 2
        %1849 = vperm.xlu0 %1848, %v621
        %v1850 = vpop.permute.xlu0 %1849
        %1852 = vset.pattern.permute.xlu0 2
        %1853 = vperm.xlu0 %1852, %v622
        %v1854 = vpop.permute.xlu0 %1853
        %1856 = vset.pattern.permute.xlu0 2
        %1857 = vperm.xlu0 %1856, %v623
        %v1858 = vpop.permute.xlu0 %1857
        %1860 = vset.pattern.permute.xlu0 2
        %1861 = vperm.xlu0 %1860, %v624
        %v1862 = vpop.permute.xlu0 %1861
        %1864 = vset.pattern.permute.xlu0 2
        %1865 = vperm.xlu0 %1864, %v625
        %v1866 = vpop.permute.xlu0 %1865
        %1868 = vset.pattern.permute.xlu0 2
        %1869 = vperm.xlu0 %1868, %v626
        %v1870 = vpop.permute.xlu0 %1869
        %1872 = vset.pattern.permute.xlu0 2
        %1873 = vperm.xlu0 %1872, %v627
        %v1874 = vpop.permute.xlu0 %1873
        %1876 = vset.pattern.permute.xlu0 2
        %1877 = vperm.xlu0 %1876, %v628
        %v1878 = vpop.permute.xlu0 %1877
        %v1880 = vlaneseq
        %v1881 = vshrl.u32 %v1880, 7
        %v1882 = vsub.s32 2, %v1881
        %v1883 = vrot.slane %v630, %v1882
        %v1884 = vlaneseq
        %v1885 = vshrl.u32 %v1884, 7
        %v1886 = vsub.s32 6, %v1885
        %v1887 = vrot.slane %v630, %v1886
        %v1890 = vlaneseq
        %v1891 = vshrl.u32 %v1890, 7
        %v1892 = vsub.s32 2, %v1891
        %v1893 = vrot.slane %v1883, %v1892
        %v1894 = vlaneseq
        %v1895 = vshrl.u32 %v1894, 7
        %v1896 = vsub.s32 2, %v1895
        %v1897 = vrot.slane %v1887, %v1896
        %v1898 = vmul.f32 %v1818, %v1893
        %v1899 = vmul.f32 %v1818, %v1897
        %v1900 = vmul.f32 %v1822, %v1893
        %v1901 = vmul.f32 %v1822, %v1897
        %v1902 = vmul.f32 %v1826, %v1893
        %v1903 = vmul.f32 %v1826, %v1897
        %v1904 = vmul.f32 %v1830, %v1893
        %v1905 = vmul.f32 %v1830, %v1897
        %v1906 = vmul.f32 %v1834, %v1893
        %v1907 = vmul.f32 %v1834, %v1897
        %v1908 = vmul.f32 %v1838, %v1893
        %v1909 = vmul.f32 %v1838, %v1897
        %v1910 = vmul.f32 %v1842, %v1893
        %v1911 = vmul.f32 %v1842, %v1897
        %v1912 = vmul.f32 %v1846, %v1893
        %v1913 = vmul.f32 %v1846, %v1897
        %v1914 = vmul.f32 %v1850, %v1893
        %v1915 = vmul.f32 %v1850, %v1897
        %v1916 = vmul.f32 %v1854, %v1893
        %v1917 = vmul.f32 %v1854, %v1897
        %v1918 = vmul.f32 %v1858, %v1893
        %v1919 = vmul.f32 %v1858, %v1897
        %v1920 = vmul.f32 %v1862, %v1893
        %v1921 = vmul.f32 %v1862, %v1897
        %v1922 = vmul.f32 %v1866, %v1893
        %v1923 = vmul.f32 %v1866, %v1897
        %v1924 = vmul.f32 %v1870, %v1893
        %v1925 = vmul.f32 %v1870, %v1897
        %v1926 = vmul.f32 %v1874, %v1893
        %v1927 = vmul.f32 %v1874, %v1897
        %v1928 = vmul.f32 %v1878, %v1893
        %v1929 = vmul.f32 %v1878, %v1897
        %v1930 = vmin.f32 %v1784, %v1898
        %v1931 = vmin.f32 %v1785, %v1899
        %v1932 = vmin.f32 %v1786, %v1900
        %v1933 = vmin.f32 %v1787, %v1901
        %v1934 = vmin.f32 %v1788, %v1902
        %v1935 = vmin.f32 %v1789, %v1903
        %v1936 = vmin.f32 %v1790, %v1904
        %v1937 = vmin.f32 %v1791, %v1905
        %v1938 = vmin.f32 %v1792, %v1906
        %v1939 = vmin.f32 %v1793, %v1907
        %v1940 = vmin.f32 %v1794, %v1908
        %v1941 = vmin.f32 %v1795, %v1909
        %v1942 = vmin.f32 %v1796, %v1910
        %v1943 = vmin.f32 %v1797, %v1911
        %v1944 = vmin.f32 %v1798, %v1912
        %v1945 = vmin.f32 %v1799, %v1913
        %v1946 = vmin.f32 %v1800, %v1914
        %v1947 = vmin.f32 %v1801, %v1915
        %v1948 = vmin.f32 %v1802, %v1916
        %v1949 = vmin.f32 %v1803, %v1917
        %v1950 = vmin.f32 %v1804, %v1918
        %v1951 = vmin.f32 %v1805, %v1919
        %v1952 = vmin.f32 %v1806, %v1920
        %v1953 = vmin.f32 %v1807, %v1921
        %v1954 = vmin.f32 %v1808, %v1922
        %v1955 = vmin.f32 %v1809, %v1923
        %v1956 = vmin.f32 %v1810, %v1924
        %v1957 = vmin.f32 %v1811, %v1925
        %v1958 = vmin.f32 %v1812, %v1926
        %v1959 = vmin.f32 %v1813, %v1927
        %v1960 = vmin.f32 %v1814, %v1928
        %v1961 = vmin.f32 %v1815, %v1929
        %v1962 = vmul.f32 %v1930, %v565
        %v1963 = vmul.f32 %v1931, %v566
        %v1964 = vmul.f32 %v1932, %v567
        %v1965 = vmul.f32 %v1933, %v568
        %v1966 = vmul.f32 %v1934, %v569
        %v1967 = vmul.f32 %v1935, %v570
        %v1968 = vmul.f32 %v1936, %v571
        %v1969 = vmul.f32 %v1937, %v572
        %v1970 = vmul.f32 %v1938, %v573
        %v1971 = vmul.f32 %v1939, %v574
        %v1972 = vmul.f32 %v1940, %v575
        %v1973 = vmul.f32 %v1941, %v576
        %v1974 = vmul.f32 %v1942, %v577
        %v1975 = vmul.f32 %v1943, %v578
        %v1976 = vmul.f32 %v1944, %v579
        %v1977 = vmul.f32 %v1945, %v580
        %v1978 = vmul.f32 %v1946, %v581
        %v1979 = vmul.f32 %v1947, %v582
        %v1980 = vmul.f32 %v1948, %v583
        %v1981 = vmul.f32 %v1949, %v584
        %v1982 = vmul.f32 %v1950, %v585
        %v1983 = vmul.f32 %v1951, %v586
        %v1984 = vmul.f32 %v1952, %v587
        %v1985 = vmul.f32 %v1953, %v588
        %v1986 = vmul.f32 %v1954, %v589
        %v1987 = vmul.f32 %v1955, %v590
        %v1988 = vmul.f32 %v1956, %v591
        %v1989 = vmul.f32 %v1957, %v592
        %v1990 = vmul.f32 %v1958, %v593
        %v1991 = vmul.f32 %v1959, %v594
        %v1992 = vmul.f32 %v1960, %v595
        %v1993 = vmul.f32 %v1961, %v596
        %s1994 = scalar_lea.vmem [#allocation2], 256
        %v1995 = vld [vmem:[%s1994] sm:$0xff]
        %v1996 = vld [vmem:[%s1994 + $0x8] sm:$0xff]
        %v1997 = vld [vmem:[%s1994 + $0x10] sm:$0xff]
        %v1998 = vld [vmem:[%s1994 + $0x18] sm:$0xff]
        %v1999 = vld [vmem:[%s1994 + $0x20] sm:$0xff]
        %v2000 = vld [vmem:[%s1994 + $0x28] sm:$0xff]
        %v2001 = vld [vmem:[%s1994 + $0x30] sm:$0xff]
        %v2002 = vld [vmem:[%s1994 + $0x38] sm:$0xff]
        %v2003 = vld [vmem:[%s1994 + $0x40] sm:$0xff]
        %v2004 = vld [vmem:[%s1994 + $0x48] sm:$0xff]
        %v2005 = vld [vmem:[%s1994 + $0x50] sm:$0xff]
        %v2006 = vld [vmem:[%s1994 + $0x58] sm:$0xff]
        %v2007 = vld [vmem:[%s1994 + $0x60] sm:$0xff]
        %v2008 = vld [vmem:[%s1994 + $0x68] sm:$0xff]
        %v2009 = vld [vmem:[%s1994 + $0x70] sm:$0xff]
        %v2010 = vld [vmem:[%s1994 + $0x78] sm:$0xff]
        %s2011 = scalar_lea.vmem %s436, 512
        %v2012 = vld [vmem:[%s2011] sm:$0xff]
        %v2013 = vld [vmem:[%s2011 + $0x8] sm:$0xff]
        %v2014 = vld [vmem:[%s2011 + $0x10] sm:$0xff]
        %v2015 = vld [vmem:[%s2011 + $0x18] sm:$0xff]
        %v2016 = vld [vmem:[%s2011 + $0x20] sm:$0xff]
        %v2017 = vld [vmem:[%s2011 + $0x28] sm:$0xff]
        %v2018 = vld [vmem:[%s2011 + $0x30] sm:$0xff]
        %v2019 = vld [vmem:[%s2011 + $0x38] sm:$0xff]
        %v2020 = vld [vmem:[%s2011 + $0x40] sm:$0xff]
        %v2021 = vld [vmem:[%s2011 + $0x48] sm:$0xff]
        %v2022 = vld [vmem:[%s2011 + $0x50] sm:$0xff]
        %v2023 = vld [vmem:[%s2011 + $0x58] sm:$0xff]
        %v2024 = vld [vmem:[%s2011 + $0x60] sm:$0xff]
        %v2025 = vld [vmem:[%s2011 + $0x68] sm:$0xff]
        %v2026 = vld [vmem:[%s2011 + $0x70] sm:$0xff]
        %v2027 = vld [vmem:[%s2011 + $0x78] sm:$0xff]
        %v2028 = vld [vmem:[%s2011 + $0x80] sm:$0xff]
        %v2029 = vld [vmem:[%s2011 + $0x88] sm:$0xff]
        %v2030 = vld [vmem:[%s2011 + $0x90] sm:$0xff]
        %v2031 = vld [vmem:[%s2011 + $0x98] sm:$0xff]
        %v2032 = vld [vmem:[%s2011 + $0xa0] sm:$0xff]
        %v2033 = vld [vmem:[%s2011 + $0xa8] sm:$0xff]
        %v2034 = vld [vmem:[%s2011 + $0xb0] sm:$0xff]
        %v2035 = vld [vmem:[%s2011 + $0xb8] sm:$0xff]
        %v2036 = vld [vmem:[%s2011 + $0xc0] sm:$0xff]
        %v2037 = vld [vmem:[%s2011 + $0xc8] sm:$0xff]
        %v2038 = vld [vmem:[%s2011 + $0xd0] sm:$0xff]
        %v2039 = vld [vmem:[%s2011 + $0xd8] sm:$0xff]
        %v2040 = vld [vmem:[%s2011 + $0xe0] sm:$0xff]
        %v2041 = vld [vmem:[%s2011 + $0xe8] sm:$0xff]
        %v2042 = vld [vmem:[%s2011 + $0xf0] sm:$0xff]
        %v2043 = vld [vmem:[%s2011 + $0xf8] sm:$0xff]
        %2044 = vmatprep.subr.mxu0 0.0
        %2045 = vmatpush1.msra.mxu0 %v2012
        %2046 = vmatprep.subr.mxu0 0.0
        %2047 = vmatpush1.msra.mxu0 %v2013
        %2048 = vmatprep.subr.mxu0 0.0
        %2049 = vmatpush1.msra.mxu0 %v2014
        %2050 = vmatprep.subr.mxu0 0.0
        %2051 = vmatpush1.msra.mxu0 %v2015
        %2052 = vmatprep.subr.mxu0 0.0
        %2053 = vmatpush1.msra.mxu0 %v2016
        %2054 = vmatprep.subr.mxu0 0.0
        %2055 = vmatpush1.msra.mxu0 %v2017
        %2056 = vmatprep.subr.mxu0 0.0
        %2057 = vmatpush1.msra.mxu0 %v2018
        %2058 = vmatprep.subr.mxu0 0.0
        %2059 = vmatpush1.msra.mxu0 %v2019
        %2060 = vmatprep.subr.mxu0 0.0
        %2061 = vmatpush1.msra.mxu0 %v2020
        %2062 = vmatprep.subr.mxu0 0.0
        %2063 = vmatpush1.msra.mxu0 %v2021
        %2064 = vmatprep.subr.mxu0 0.0
        %2065 = vmatpush1.msra.mxu0 %v2022
        %2066 = vmatprep.subr.mxu0 0.0
        %2067 = vmatpush1.msra.mxu0 %v2023
        %2068 = vmatprep.subr.mxu0 0.0
        %2069 = vmatpush1.msra.mxu0 %v2024
        %2070 = vmatprep.subr.mxu0 0.0
        %2071 = vmatpush1.msra.mxu0 %v2025
        %2072 = vmatprep.subr.mxu0 0.0
        %2073 = vmatpush1.msra.mxu0 %v2026
        %2074 = vmatprep.subr.mxu0 0.0
        %2075 = vmatpush1.msra.mxu0 %v2027
        %2076 = vmatprep.subr.mxu0 0.0
        %2077 = vmatpush1.msra.mxu0 %v2028
        %2078 = vmatprep.subr.mxu0 0.0
        %2079 = vmatpush1.msra.mxu0 %v2029
        %2080 = vmatprep.subr.mxu0 0.0
        %2081 = vmatpush1.msra.mxu0 %v2030
        %2082 = vmatprep.subr.mxu0 0.0
        %2083 = vmatpush1.msra.mxu0 %v2031
        %2084 = vmatprep.subr.mxu0 0.0
        %2085 = vmatpush1.msra.mxu0 %v2032
        %2086 = vmatprep.subr.mxu0 0.0
        %2087 = vmatpush1.msra.mxu0 %v2033
        %2088 = vmatprep.subr.mxu0 0.0
        %2089 = vmatpush1.msra.mxu0 %v2034
        %2090 = vmatprep.subr.mxu0 0.0
        %2091 = vmatpush1.msra.mxu0 %v2035
        %2092 = vmatprep.subr.mxu0 0.0
        %2093 = vmatpush1.msra.mxu0 %v2036
        %2094 = vmatprep.subr.mxu0 0.0
        %2095 = vmatpush1.msra.mxu0 %v2037
        %2096 = vmatprep.subr.mxu0 0.0
        %2097 = vmatpush1.msra.mxu0 %v2038
        %2098 = vmatprep.subr.mxu0 0.0
        %2099 = vmatpush1.msra.mxu0 %v2039
        %2100 = vmatprep.subr.mxu0 0.0
        %2101 = vmatpush1.msra.mxu0 %v2040
        %2102 = vmatprep.subr.mxu0 0.0
        %2103 = vmatpush1.msra.mxu0 %v2041
        %2104 = vmatprep.subr.mxu0 0.0
        %2105 = vmatpush1.msra.mxu0 %v2042
        %2106 = vmatprep.subr.mxu0 0.0
        %2107 = vmatpush1.msra.mxu0 %v2043
        %2108 = vmatprep.mubr.f32.mxu0 %v1963
        %2109 = vmatmul.mubr.f32.gmra.mrb[0].mxu0 %v1962
        %v2110 = vpop.f32.mrb[0].mxu0
        %v2111 = vadd.f32 0.0, %v2110
        %v2112 = vpop.f32.mrb[0].mxu0
        %2113 = vmatprep.mubr.f32.mxu0 %v1965
        %2114 = vmatmul.mubr.f32.gmra.mrb[0].mxu0 %v1964
        %v2115 = vpop.f32.mrb[0].mxu0
        %v2116 = vadd.f32 0.0, %v2115
        %v2117 = vpop.f32.mrb[0].mxu0
        %2118 = vmatprep.mubr.f32.mxu0 %v1967
        %2119 = vmatmul.mubr.f32.gmra.mrb[0].mxu0 %v1966
        %v2120 = vpop.f32.mrb[0].mxu0
        %v2121 = vadd.f32 0.0, %v2120
        %v2122 = vpop.f32.mrb[0].mxu0
        %2123 = vmatprep.mubr.f32.mxu0 %v1969
        %2124 = vmatmul.mubr.f32.gmra.mrb[0].mxu0 %v1968
        %v2125 = vpop.f32.mrb[0].mxu0
        %v2126 = vadd.f32 0.0, %v2125
        %v2127 = vpop.f32.mrb[0].mxu0
        %2128 = vmatprep.mubr.f32.mxu0 %v1971
        %2129 = vmatmul.mubr.f32.gmra.mrb[0].mxu0 %v1970
        %v2130 = vpop.f32.mrb[0].mxu0
        %v2131 = vadd.f32 0.0, %v2130
        %v2132 = vpop.f32.mrb[0].mxu0
        %2133 = vmatprep.mubr.f32.mxu0 %v1973
        %2134 = vmatmul.mubr.f32.gmra.mrb[0].mxu0 %v1972
        %v2135 = vpop.f32.mrb[0].mxu0
        %v2136 = vadd.f32 0.0, %v2135
        %v2137 = vpop.f32.mrb[0].mxu0
        %2138 = vmatprep.mubr.f32.mxu0 %v1975
        %2139 = vmatmul.mubr.f32.gmra.mrb[0].mxu0 %v1974
        %v2140 = vpop.f32.mrb[0].mxu0
        %v2141 = vadd.f32 0.0, %v2140
        %v2142 = vpop.f32.mrb[0].mxu0
        %2143 = vmatprep.mubr.f32.mxu0 %v1977
        %2144 = vmatmul.mubr.f32.gmra.mrb[0].mxu0 %v1976
        %v2145 = vpop.f32.mrb[0].mxu0
        %v2146 = vadd.f32 0.0, %v2145
        %v2147 = vpop.f32.mrb[0].mxu0
        %2148 = vmatprep.mubr.f32.mxu0 %v1979
        %2149 = vmatmul.mubr.f32.gmra.mrb[0].mxu0 %v1978
        %v2150 = vpop.f32.mrb[0].mxu0
        %v2151 = vadd.f32 0.0, %v2150
        %v2152 = vpop.f32.mrb[0].mxu0
        %2153 = vmatprep.mubr.f32.mxu0 %v1981
        %2154 = vmatmul.mubr.f32.gmra.mrb[0].mxu0 %v1980
        %v2155 = vpop.f32.mrb[0].mxu0
        %v2156 = vadd.f32 0.0, %v2155
        %v2157 = vpop.f32.mrb[0].mxu0
        %2158 = vmatprep.mubr.f32.mxu0 %v1983
        %2159 = vmatmul.mubr.f32.gmra.mrb[0].mxu0 %v1982
        %v2160 = vpop.f32.mrb[0].mxu0
        %v2161 = vadd.f32 0.0, %v2160
        %v2162 = vpop.f32.mrb[0].mxu0
        %2163 = vmatprep.mubr.f32.mxu0 %v1985
        %2164 = vmatmul.mubr.f32.gmra.mrb[0].mxu0 %v1984
        %v2165 = vpop.f32.mrb[0].mxu0
        %v2166 = vadd.f32 0.0, %v2165
        %v2167 = vpop.f32.mrb[0].mxu0
        %2168 = vmatprep.mubr.f32.mxu0 %v1987
        %2169 = vmatmul.mubr.f32.gmra.mrb[0].mxu0 %v1986
        %v2170 = vpop.f32.mrb[0].mxu0
        %v2171 = vadd.f32 0.0, %v2170
        %v2172 = vpop.f32.mrb[0].mxu0
        %2173 = vmatprep.mubr.f32.mxu0 %v1989
        %2174 = vmatmul.mubr.f32.gmra.mrb[0].mxu0 %v1988
        %v2175 = vpop.f32.mrb[0].mxu0
        %v2176 = vadd.f32 0.0, %v2175
        %v2177 = vpop.f32.mrb[0].mxu0
        %2178 = vmatprep.mubr.f32.mxu0 %v1991
        %2179 = vmatmul.mubr.f32.gmra.mrb[0].mxu0 %v1990
        %v2180 = vpop.f32.mrb[0].mxu0
        %v2181 = vadd.f32 0.0, %v2180
        %v2182 = vpop.f32.mrb[0].mxu0
        %2183 = vmatprep.mubr.f32.mxu0 %v1993
        %2184 = vmatmul.mubr.f32.gmra.mrb[0].mxu0 %v1992
        %v2185 = vpop.f32.mrb[0].mxu0
        %v2186 = vadd.f32 0.0, %v2185
        %v2187 = vpop.f32.mrb[0].mxu0
        %2188 = vdwg.mxu0
        %v2189 = vadd.f32 %v1995, %v2111
        %v2190 = vadd.f32 %v1996, %v2116
        %v2191 = vadd.f32 %v1997, %v2121
        %v2192 = vadd.f32 %v1998, %v2126
        %v2193 = vadd.f32 %v1999, %v2131
        %v2194 = vadd.f32 %v2000, %v2136
        %v2195 = vadd.f32 %v2001, %v2141
        %v2196 = vadd.f32 %v2002, %v2146
        %v2197 = vadd.f32 %v2003, %v2151
        %v2198 = vadd.f32 %v2004, %v2156
        %v2199 = vadd.f32 %v2005, %v2161
        %v2200 = vadd.f32 %v2006, %v2166
        %v2201 = vadd.f32 %v2007, %v2171
        %v2202 = vadd.f32 %v2008, %v2176
        %v2203 = vadd.f32 %v2009, %v2181
        %v2204 = vadd.f32 %v2010, %v2186
        %2205 = vst.msk [vmem:[%s1994] sm:$0xff] %vm1166, %v2189
        %2206 = vst.msk [vmem:[%s1994 + $0x8] sm:$0xff] %vm1166, %v2190
        %2207 = vst.msk [vmem:[%s1994 + $0x10] sm:$0xff] %vm1166, %v2191
        %2208 = vst.msk [vmem:[%s1994 + $0x18] sm:$0xff] %vm1166, %v2192
        %2209 = vst.msk [vmem:[%s1994 + $0x20] sm:$0xff] %vm1166, %v2193
        %2210 = vst.msk [vmem:[%s1994 + $0x28] sm:$0xff] %vm1166, %v2194
        %2211 = vst.msk [vmem:[%s1994 + $0x30] sm:$0xff] %vm1166, %v2195
        %2212 = vst.msk [vmem:[%s1994 + $0x38] sm:$0xff] %vm1166, %v2196
        %2213 = vst.msk [vmem:[%s1994 + $0x40] sm:$0xff] %vm1166, %v2197
        %2214 = vst.msk [vmem:[%s1994 + $0x48] sm:$0xff] %vm1166, %v2198
        %2215 = vst.msk [vmem:[%s1994 + $0x50] sm:$0xff] %vm1166, %v2199
        %2216 = vst.msk [vmem:[%s1994 + $0x58] sm:$0xff] %vm1166, %v2200
        %2217 = vst.msk [vmem:[%s1994 + $0x60] sm:$0xff] %vm1166, %v2201
        %2218 = vst.msk [vmem:[%s1994 + $0x68] sm:$0xff] %vm1166, %v2202
        %2219 = vst.msk [vmem:[%s1994 + $0x70] sm:$0xff] %vm1166, %v2203
        %2220 = vst.msk [vmem:[%s1994 + $0x78] sm:$0xff] %vm1166, %v2204
        %2221 = vset.pattern.permute.xlu0 3
        %2222 = vperm.xlu0 %2221, %v597
        %v2223 = vpop.permute.xlu0 %2222
        %2225 = vset.pattern.permute.xlu0 3
        %2226 = vperm.xlu0 %2225, %v598
        %v2227 = vpop.permute.xlu0 %2226
        %2229 = vset.pattern.permute.xlu0 3
        %2230 = vperm.xlu0 %2229, %v599
        %v2231 = vpop.permute.xlu0 %2230
        %2233 = vset.pattern.permute.xlu0 3
        %2234 = vperm.xlu0 %2233, %v600
        %v2235 = vpop.permute.xlu0 %2234
        %2237 = vset.pattern.permute.xlu0 3
        %2238 = vperm.xlu0 %2237, %v601
        %v2239 = vpop.permute.xlu0 %2238
        %2241 = vset.pattern.permute.xlu0 3
        %2242 = vperm.xlu0 %2241, %v602
        %v2243 = vpop.permute.xlu0 %2242
        %2245 = vset.pattern.permute.xlu0 3
        %2246 = vperm.xlu0 %2245, %v603
        %v2247 = vpop.permute.xlu0 %2246
        %2249 = vset.pattern.permute.xlu0 3
        %2250 = vperm.xlu0 %2249, %v604
        %v2251 = vpop.permute.xlu0 %2250
        %2253 = vset.pattern.permute.xlu0 3
        %2254 = vperm.xlu0 %2253, %v605
        %v2255 = vpop.permute.xlu0 %2254
        %2257 = vset.pattern.permute.xlu0 3
        %2258 = vperm.xlu0 %2257, %v606
        %v2259 = vpop.permute.xlu0 %2258
        %2261 = vset.pattern.permute.xlu0 3
        %2262 = vperm.xlu0 %2261, %v607
        %v2263 = vpop.permute.xlu0 %2262
        %2265 = vset.pattern.permute.xlu0 3
        %2266 = vperm.xlu0 %2265, %v608
        %v2267 = vpop.permute.xlu0 %2266
        %2269 = vset.pattern.permute.xlu0 3
        %2270 = vperm.xlu0 %2269, %v609
        %v2271 = vpop.permute.xlu0 %2270
        %2273 = vset.pattern.permute.xlu0 3
        %2274 = vperm.xlu0 %2273, %v610
        %v2275 = vpop.permute.xlu0 %2274
        %2277 = vset.pattern.permute.xlu0 3
        %2278 = vperm.xlu0 %2277, %v611
        %v2279 = vpop.permute.xlu0 %2278
        %2281 = vset.pattern.permute.xlu0 3
        %2282 = vperm.xlu0 %2281, %v612
        %v2283 = vpop.permute.xlu0 %2282
        %v2285 = vlaneseq
        %v2286 = vshrl.u32 %v2285, 7
        %v2287 = vsub.s32 3, %v2286
        %v2288 = vrot.slane %v629, %v2287
        %v2289 = vlaneseq
        %v2290 = vshrl.u32 %v2289, 7
        %v2291 = vsub.s32 7, %v2290
        %v2292 = vrot.slane %v629, %v2291
        %v2295 = vlaneseq
        %v2296 = vshrl.u32 %v2295, 7
        %v2297 = vsub.s32 3, %v2296
        %v2298 = vrot.slane %v2288, %v2297
        %v2299 = vlaneseq
        %v2300 = vshrl.u32 %v2299, 7
        %v2301 = vsub.s32 3, %v2300
        %v2302 = vrot.slane %v2292, %v2301
        %v2303 = vmul.f32 %v2223, %v2298
        %v2304 = vmul.f32 %v2223, %v2302
        %v2305 = vmul.f32 %v2227, %v2298
        %v2306 = vmul.f32 %v2227, %v2302
        %v2307 = vmul.f32 %v2231, %v2298
        %v2308 = vmul.f32 %v2231, %v2302
        %v2309 = vmul.f32 %v2235, %v2298
        %v2310 = vmul.f32 %v2235, %v2302
        %v2311 = vmul.f32 %v2239, %v2298
        %v2312 = vmul.f32 %v2239, %v2302
        %v2313 = vmul.f32 %v2243, %v2298
        %v2314 = vmul.f32 %v2243, %v2302
        %v2315 = vmul.f32 %v2247, %v2298
        %v2316 = vmul.f32 %v2247, %v2302
        %v2317 = vmul.f32 %v2251, %v2298
        %v2318 = vmul.f32 %v2251, %v2302
        %v2319 = vmul.f32 %v2255, %v2298
        %v2320 = vmul.f32 %v2255, %v2302
        %v2321 = vmul.f32 %v2259, %v2298
        %v2322 = vmul.f32 %v2259, %v2302
        %v2323 = vmul.f32 %v2263, %v2298
        %v2324 = vmul.f32 %v2263, %v2302
        %v2325 = vmul.f32 %v2267, %v2298
        %v2326 = vmul.f32 %v2267, %v2302
        %v2327 = vmul.f32 %v2271, %v2298
        %v2328 = vmul.f32 %v2271, %v2302
        %v2329 = vmul.f32 %v2275, %v2298
        %v2330 = vmul.f32 %v2275, %v2302
        %v2331 = vmul.f32 %v2279, %v2298
        %v2332 = vmul.f32 %v2279, %v2302
        %v2333 = vmul.f32 %v2283, %v2298
        %v2334 = vmul.f32 %v2283, %v2302
        %2335 = vset.pattern.permute.xlu0 3
        %2336 = vperm.xlu0 %2335, %v613
        %v2337 = vpop.permute.xlu0 %2336
        %2339 = vset.pattern.permute.xlu0 3
        %2340 = vperm.xlu0 %2339, %v614
        %v2341 = vpop.permute.xlu0 %2340
        %2343 = vset.pattern.permute.xlu0 3
        %2344 = vperm.xlu0 %2343, %v615
        %v2345 = vpop.permute.xlu0 %2344
        %2347 = vset.pattern.permute.xlu0 3
        %2348 = vperm.xlu0 %2347, %v616
        %v2349 = vpop.permute.xlu0 %2348
        %2351 = vset.pattern.permute.xlu0 3
        %2352 = vperm.xlu0 %2351, %v617
        %v2353 = vpop.permute.xlu0 %2352
        %2355 = vset.pattern.permute.xlu0 3
        %2356 = vperm.xlu0 %2355, %v618
        %v2357 = vpop.permute.xlu0 %2356
        %2359 = vset.pattern.permute.xlu0 3
        %2360 = vperm.xlu0 %2359, %v619
        %v2361 = vpop.permute.xlu0 %2360
        %2363 = vset.pattern.permute.xlu0 3
        %2364 = vperm.xlu0 %2363, %v620
        %v2365 = vpop.permute.xlu0 %2364
        %2367 = vset.pattern.permute.xlu0 3
        %2368 = vperm.xlu0 %2367, %v621
        %v2369 = vpop.permute.xlu0 %2368
        %2371 = vset.pattern.permute.xlu0 3
        %2372 = vperm.xlu0 %2371, %v622
        %v2373 = vpop.permute.xlu0 %2372
        %2375 = vset.pattern.permute.xlu0 3
        %2376 = vperm.xlu0 %2375, %v623
        %v2377 = vpop.permute.xlu0 %2376
        %2379 = vset.pattern.permute.xlu0 3
        %2380 = vperm.xlu0 %2379, %v624
        %v2381 = vpop.permute.xlu0 %2380
        %2383 = vset.pattern.permute.xlu0 3
        %2384 = vperm.xlu0 %2383, %v625
        %v2385 = vpop.permute.xlu0 %2384
        %2387 = vset.pattern.permute.xlu0 3
        %2388 = vperm.xlu0 %2387, %v626
        %v2389 = vpop.permute.xlu0 %2388
        %2391 = vset.pattern.permute.xlu0 3
        %2392 = vperm.xlu0 %2391, %v627
        %v2393 = vpop.permute.xlu0 %2392
        %2395 = vset.pattern.permute.xlu0 3
        %2396 = vperm.xlu0 %2395, %v628
        %v2397 = vpop.permute.xlu0 %2396
        %v2399 = vlaneseq
        %v2400 = vshrl.u32 %v2399, 7
        %v2401 = vsub.s32 3, %v2400
        %v2402 = vrot.slane %v630, %v2401
        %v2403 = vlaneseq
        %v2404 = vshrl.u32 %v2403, 7
        %v2405 = vsub.s32 7, %v2404
        %v2406 = vrot.slane %v630, %v2405
        %v2409 = vlaneseq
        %v2410 = vshrl.u32 %v2409, 7
        %v2411 = vsub.s32 3, %v2410
        %v2412 = vrot.slane %v2402, %v2411
        %v2413 = vlaneseq
        %v2414 = vshrl.u32 %v2413, 7
        %v2415 = vsub.s32 3, %v2414
        %v2416 = vrot.slane %v2406, %v2415
        %v2417 = vmul.f32 %v2337, %v2412
        %v2418 = vmul.f32 %v2337, %v2416
        %v2419 = vmul.f32 %v2341, %v2412
        %v2420 = vmul.f32 %v2341, %v2416
        %v2421 = vmul.f32 %v2345, %v2412
        %v2422 = vmul.f32 %v2345, %v2416
        %v2423 = vmul.f32 %v2349, %v2412
        %v2424 = vmul.f32 %v2349, %v2416
        %v2425 = vmul.f32 %v2353, %v2412
        %v2426 = vmul.f32 %v2353, %v2416
        %v2427 = vmul.f32 %v2357, %v2412
        %v2428 = vmul.f32 %v2357, %v2416
        %v2429 = vmul.f32 %v2361, %v2412
        %v2430 = vmul.f32 %v2361, %v2416
        %v2431 = vmul.f32 %v2365, %v2412
        %v2432 = vmul.f32 %v2365, %v2416
        %v2433 = vmul.f32 %v2369, %v2412
        %v2434 = vmul.f32 %v2369, %v2416
        %v2435 = vmul.f32 %v2373, %v2412
        %v2436 = vmul.f32 %v2373, %v2416
        %v2437 = vmul.f32 %v2377, %v2412
        %v2438 = vmul.f32 %v2377, %v2416
        %v2439 = vmul.f32 %v2381, %v2412
        %v2440 = vmul.f32 %v2381, %v2416
        %v2441 = vmul.f32 %v2385, %v2412
        %v2442 = vmul.f32 %v2385, %v2416
        %v2443 = vmul.f32 %v2389, %v2412
        %v2444 = vmul.f32 %v2389, %v2416
        %v2445 = vmul.f32 %v2393, %v2412
        %v2446 = vmul.f32 %v2393, %v2416
        %v2447 = vmul.f32 %v2397, %v2412
        %v2448 = vmul.f32 %v2397, %v2416
        %v2449 = vmin.f32 %v2303, %v2417
        %v2450 = vmin.f32 %v2304, %v2418
        %v2451 = vmin.f32 %v2305, %v2419
        %v2452 = vmin.f32 %v2306, %v2420
        %v2453 = vmin.f32 %v2307, %v2421
        %v2454 = vmin.f32 %v2308, %v2422
        %v2455 = vmin.f32 %v2309, %v2423
        %v2456 = vmin.f32 %v2310, %v2424
        %v2457 = vmin.f32 %v2311, %v2425
        %v2458 = vmin.f32 %v2312, %v2426
        %v2459 = vmin.f32 %v2313, %v2427
        %v2460 = vmin.f32 %v2314, %v2428
        %v2461 = vmin.f32 %v2315, %v2429
        %v2462 = vmin.f32 %v2316, %v2430
        %v2463 = vmin.f32 %v2317, %v2431
        %v2464 = vmin.f32 %v2318, %v2432
        %v2465 = vmin.f32 %v2319, %v2433
        %v2466 = vmin.f32 %v2320, %v2434
        %v2467 = vmin.f32 %v2321, %v2435
        %v2468 = vmin.f32 %v2322, %v2436
        %v2469 = vmin.f32 %v2323, %v2437
        %v2470 = vmin.f32 %v2324, %v2438
        %v2471 = vmin.f32 %v2325, %v2439
        %v2472 = vmin.f32 %v2326, %v2440
        %v2473 = vmin.f32 %v2327, %v2441
        %v2474 = vmin.f32 %v2328, %v2442
        %v2475 = vmin.f32 %v2329, %v2443
        %v2476 = vmin.f32 %v2330, %v2444
        %v2477 = vmin.f32 %v2331, %v2445
        %v2478 = vmin.f32 %v2332, %v2446
        %v2479 = vmin.f32 %v2333, %v2447
        %v2480 = vmin.f32 %v2334, %v2448
        %v2481 = vmul.f32 %v2449, %v565
        %v2482 = vmul.f32 %v2450, %v566
        %v2483 = vmul.f32 %v2451, %v567
        %v2484 = vmul.f32 %v2452, %v568
        %v2485 = vmul.f32 %v2453, %v569
        %v2486 = vmul.f32 %v2454, %v570
        %v2487 = vmul.f32 %v2455, %v571
        %v2488 = vmul.f32 %v2456, %v572
        %v2489 = vmul.f32 %v2457, %v573
        %v2490 = vmul.f32 %v2458, %v574
        %v2491 = vmul.f32 %v2459, %v575
        %v2492 = vmul.f32 %v2460, %v576
        %v2493 = vmul.f32 %v2461, %v577
        %v2494 = vmul.f32 %v2462, %v578
        %v2495 = vmul.f32 %v2463, %v579
        %v2496 = vmul.f32 %v2464, %v580
        %v2497 = vmul.f32 %v2465, %v581
        %v2498 = vmul.f32 %v2466, %v582
        %v2499 = vmul.f32 %v2467, %v583
        %v2500 = vmul.f32 %v2468, %v584
        %v2501 = vmul.f32 %v2469, %v585
        %v2502 = vmul.f32 %v2470, %v586
        %v2503 = vmul.f32 %v2471, %v587
        %v2504 = vmul.f32 %v2472, %v588
        %v2505 = vmul.f32 %v2473, %v589
        %v2506 = vmul.f32 %v2474, %v590
        %v2507 = vmul.f32 %v2475, %v591
        %v2508 = vmul.f32 %v2476, %v592
        %v2509 = vmul.f32 %v2477, %v593
        %v2510 = vmul.f32 %v2478, %v594
        %v2511 = vmul.f32 %v2479, %v595
        %v2512 = vmul.f32 %v2480, %v596
        %s2513 = scalar_lea.vmem [#allocation2], 384
        %v2514 = vld [vmem:[%s2513] sm:$0xff]
        %v2515 = vld [vmem:[%s2513 + $0x8] sm:$0xff]
        %v2516 = vld [vmem:[%s2513 + $0x10] sm:$0xff]
        %v2517 = vld [vmem:[%s2513 + $0x18] sm:$0xff]
        %v2518 = vld [vmem:[%s2513 + $0x20] sm:$0xff]
        %v2519 = vld [vmem:[%s2513 + $0x28] sm:$0xff]
        %v2520 = vld [vmem:[%s2513 + $0x30] sm:$0xff]
        %v2521 = vld [vmem:[%s2513 + $0x38] sm:$0xff]
        %v2522 = vld [vmem:[%s2513 + $0x40] sm:$0xff]
        %v2523 = vld [vmem:[%s2513 + $0x48] sm:$0xff]
        %v2524 = vld [vmem:[%s2513 + $0x50] sm:$0xff]
        %v2525 = vld [vmem:[%s2513 + $0x58] sm:$0xff]
        %v2526 = vld [vmem:[%s2513 + $0x60] sm:$0xff]
        %v2527 = vld [vmem:[%s2513 + $0x68] sm:$0xff]
        %v2528 = vld [vmem:[%s2513 + $0x70] sm:$0xff]
        %v2529 = vld [vmem:[%s2513 + $0x78] sm:$0xff]
        %s2530 = scalar_lea.vmem %s436, 768
        %v2531 = vld [vmem:[%s2530] sm:$0xff]
        %v2532 = vld [vmem:[%s2530 + $0x8] sm:$0xff]
        %v2533 = vld [vmem:[%s2530 + $0x10] sm:$0xff]
        %v2534 = vld [vmem:[%s2530 + $0x18] sm:$0xff]
        %v2535 = vld [vmem:[%s2530 + $0x20] sm:$0xff]
        %v2536 = vld [vmem:[%s2530 + $0x28] sm:$0xff]
        %v2537 = vld [vmem:[%s2530 + $0x30] sm:$0xff]
        %v2538 = vld [vmem:[%s2530 + $0x38] sm:$0xff]
        %v2539 = vld [vmem:[%s2530 + $0x40] sm:$0xff]
        %v2540 = vld [vmem:[%s2530 + $0x48] sm:$0xff]
        %v2541 = vld [vmem:[%s2530 + $0x50] sm:$0xff]
        %v2542 = vld [vmem:[%s2530 + $0x58] sm:$0xff]
        %v2543 = vld [vmem:[%s2530 + $0x60] sm:$0xff]
        %v2544 = vld [vmem:[%s2530 + $0x68] sm:$0xff]
        %v2545 = vld [vmem:[%s2530 + $0x70] sm:$0xff]
        %v2546 = vld [vmem:[%s2530 + $0x78] sm:$0xff]
        %v2547 = vld [vmem:[%s2530 + $0x80] sm:$0xff]
        %v2548 = vld [vmem:[%s2530 + $0x88] sm:$0xff]
        %v2549 = vld [vmem:[%s2530 + $0x90] sm:$0xff]
        %v2550 = vld [vmem:[%s2530 + $0x98] sm:$0xff]
        %v2551 = vld [vmem:[%s2530 + $0xa0] sm:$0xff]
        %v2552 = vld [vmem:[%s2530 + $0xa8] sm:$0xff]
        %v2553 = vld [vmem:[%s2530 + $0xb0] sm:$0xff]
        %v2554 = vld [vmem:[%s2530 + $0xb8] sm:$0xff]
        %v2555 = vld [vmem:[%s2530 + $0xc0] sm:$0xff]
        %v2556 = vld [vmem:[%s2530 + $0xc8] sm:$0xff]
        %v2557 = vld [vmem:[%s2530 + $0xd0] sm:$0xff]
        %v2558 = vld [vmem:[%s2530 + $0xd8] sm:$0xff]
        %v2559 = vld [vmem:[%s2530 + $0xe0] sm:$0xff]
        %v2560 = vld [vmem:[%s2530 + $0xe8] sm:$0xff]
        %v2561 = vld [vmem:[%s2530 + $0xf0] sm:$0xff]
        %v2562 = vld [vmem:[%s2530 + $0xf8] sm:$0xff]
        %2563 = vmatprep.subr.mxu0 0.0
        %2564 = vmatpush1.msra.mxu0 %v2531
        %2565 = vmatprep.subr.mxu0 0.0
        %2566 = vmatpush1.msra.mxu0 %v2532
        %2567 = vmatprep.subr.mxu0 0.0
        %2568 = vmatpush1.msra.mxu0 %v2533
        %2569 = vmatprep.subr.mxu0 0.0
        %2570 = vmatpush1.msra.mxu0 %v2534
        %2571 = vmatprep.subr.mxu0 0.0
        %2572 = vmatpush1.msra.mxu0 %v2535
        %2573 = vmatprep.subr.mxu0 0.0
        %2574 = vmatpush1.msra.mxu0 %v2536
        %2575 = vmatprep.subr.mxu0 0.0
        %2576 = vmatpush1.msra.mxu0 %v2537
        %2577 = vmatprep.subr.mxu0 0.0
        %2578 = vmatpush1.msra.mxu0 %v2538
        %2579 = vmatprep.subr.mxu0 0.0
        %2580 = vmatpush1.msra.mxu0 %v2539
        %2581 = vmatprep.subr.mxu0 0.0
        %2582 = vmatpush1.msra.mxu0 %v2540
        %2583 = vmatprep.subr.mxu0 0.0
        %2584 = vmatpush1.msra.mxu0 %v2541
        %2585 = vmatprep.subr.mxu0 0.0
        %2586 = vmatpush1.msra.mxu0 %v2542
        %2587 = vmatprep.subr.mxu0 0.0
        %2588 = vmatpush1.msra.mxu0 %v2543
        %2589 = vmatprep.subr.mxu0 0.0
        %2590 = vmatpush1.msra.mxu0 %v2544
        %2591 = vmatprep.subr.mxu0 0.0
        %2592 = vmatpush1.msra.mxu0 %v2545
        %2593 = vmatprep.subr.mxu0 0.0
        %2594 = vmatpush1.msra.mxu0 %v2546
        %2595 = vmatprep.subr.mxu0 0.0
        %2596 = vmatpush1.msra.mxu0 %v2547
        %2597 = vmatprep.subr.mxu0 0.0
        %2598 = vmatpush1.msra.mxu0 %v2548
        %2599 = vmatprep.subr.mxu0 0.0
        %2600 = vmatpush1.msra.mxu0 %v2549
        %2601 = vmatprep.subr.mxu0 0.0
        %2602 = vmatpush1.msra.mxu0 %v2550
        %2603 = vmatprep.subr.mxu0 0.0
        %2604 = vmatpush1.msra.mxu0 %v2551
        %2605 = vmatprep.subr.mxu0 0.0
        %2606 = vmatpush1.msra.mxu0 %v2552
        %2607 = vmatprep.subr.mxu0 0.0
        %2608 = vmatpush1.msra.mxu0 %v2553
        %2609 = vmatprep.subr.mxu0 0.0
        %2610 = vmatpush1.msra.mxu0 %v2554
        %2611 = vmatprep.subr.mxu0 0.0
        %2612 = vmatpush1.msra.mxu0 %v2555
        %2613 = vmatprep.subr.mxu0 0.0
        %2614 = vmatpush1.msra.mxu0 %v2556
        %2615 = vmatprep.subr.mxu0 0.0
        %2616 = vmatpush1.msra.mxu0 %v2557
        %2617 = vmatprep.subr.mxu0 0.0
        %2618 = vmatpush1.msra.mxu0 %v2558
        %2619 = vmatprep.subr.mxu0 0.0
        %2620 = vmatpush1.msra.mxu0 %v2559
        %2621 = vmatprep.subr.mxu0 0.0
        %2622 = vmatpush1.msra.mxu0 %v2560
        %2623 = vmatprep.subr.mxu0 0.0
        %2624 = vmatpush1.msra.mxu0 %v2561
        %2625 = vmatprep.subr.mxu0 0.0
        %2626 = vmatpush1.msra.mxu0 %v2562
        %2627 = vmatprep.mubr.f32.mxu0 %v2482
        %2628 = vmatmul.mubr.f32.gmra.mrb[0].mxu0 %v2481
        %v2629 = vpop.f32.mrb[0].mxu0
        %v2630 = vadd.f32 0.0, %v2629
        %v2631 = vpop.f32.mrb[0].mxu0
        %2632 = vmatprep.mubr.f32.mxu0 %v2484
        %2633 = vmatmul.mubr.f32.gmra.mrb[0].mxu0 %v2483
        %v2634 = vpop.f32.mrb[0].mxu0
        %v2635 = vadd.f32 0.0, %v2634
        %v2636 = vpop.f32.mrb[0].mxu0
        %2637 = vmatprep.mubr.f32.mxu0 %v2486
        %2638 = vmatmul.mubr.f32.gmra.mrb[0].mxu0 %v2485
        %v2639 = vpop.f32.mrb[0].mxu0
        %v2640 = vadd.f32 0.0, %v2639
        %v2641 = vpop.f32.mrb[0].mxu0
        %2642 = vmatprep.mubr.f32.mxu0 %v2488
        %2643 = vmatmul.mubr.f32.gmra.mrb[0].mxu0 %v2487
        %v2644 = vpop.f32.mrb[0].mxu0
        %v2645 = vadd.f32 0.0, %v2644
        %v2646 = vpop.f32.mrb[0].mxu0
        %2647 = vmatprep.mubr.f32.mxu0 %v2490
        %2648 = vmatmul.mubr.f32.gmra.mrb[0].mxu0 %v2489
        %v2649 = vpop.f32.mrb[0].mxu0
        %v2650 = vadd.f32 0.0, %v2649
        %v2651 = vpop.f32.mrb[0].mxu0
        %2652 = vmatprep.mubr.f32.mxu0 %v2492
        %2653 = vmatmul.mubr.f32.gmra.mrb[0].mxu0 %v2491
        %v2654 = vpop.f32.mrb[0].mxu0
        %v2655 = vadd.f32 0.0, %v2654
        %v2656 = vpop.f32.mrb[0].mxu0
        %2657 = vmatprep.mubr.f32.mxu0 %v2494
        %2658 = vmatmul.mubr.f32.gmra.mrb[0].mxu0 %v2493
        %v2659 = vpop.f32.mrb[0].mxu0
        %v2660 = vadd.f32 0.0, %v2659
        %v2661 = vpop.f32.mrb[0].mxu0
        %2662 = vmatprep.mubr.f32.mxu0 %v2496
        %2663 = vmatmul.mubr.f32.gmra.mrb[0].mxu0 %v2495
        %v2664 = vpop.f32.mrb[0].mxu0
        %v2665 = vadd.f32 0.0, %v2664
        %v2666 = vpop.f32.mrb[0].mxu0
        %2667 = vmatprep.mubr.f32.mxu0 %v2498
        %2668 = vmatmul.mubr.f32.gmra.mrb[0].mxu0 %v2497
        %v2669 = vpop.f32.mrb[0].mxu0
        %v2670 = vadd.f32 0.0, %v2669
        %v2671 = vpop.f32.mrb[0].mxu0
        %2672 = vmatprep.mubr.f32.mxu0 %v2500
        %2673 = vmatmul.mubr.f32.gmra.mrb[0].mxu0 %v2499
        %v2674 = vpop.f32.mrb[0].mxu0
        %v2675 = vadd.f32 0.0, %v2674
        %v2676 = vpop.f32.mrb[0].mxu0
        %2677 = vmatprep.mubr.f32.mxu0 %v2502
        %2678 = vmatmul.mubr.f32.gmra.mrb[0].mxu0 %v2501
        %v2679 = vpop.f32.mrb[0].mxu0
        %v2680 = vadd.f32 0.0, %v2679
        %v2681 = vpop.f32.mrb[0].mxu0
        %2682 = vmatprep.mubr.f32.mxu0 %v2504
        %2683 = vmatmul.mubr.f32.gmra.mrb[0].mxu0 %v2503
        %v2684 = vpop.f32.mrb[0].mxu0
        %v2685 = vadd.f32 0.0, %v2684
        %v2686 = vpop.f32.mrb[0].mxu0
        %2687 = vmatprep.mubr.f32.mxu0 %v2506
        %2688 = vmatmul.mubr.f32.gmra.mrb[0].mxu0 %v2505
        %v2689 = vpop.f32.mrb[0].mxu0
        %v2690 = vadd.f32 0.0, %v2689
        %v2691 = vpop.f32.mrb[0].mxu0
        %2692 = vmatprep.mubr.f32.mxu0 %v2508
        %2693 = vmatmul.mubr.f32.gmra.mrb[0].mxu0 %v2507
        %v2694 = vpop.f32.mrb[0].mxu0
        %v2695 = vadd.f32 0.0, %v2694
        %v2696 = vpop.f32.mrb[0].mxu0
        %2697 = vmatprep.mubr.f32.mxu0 %v2510
        %2698 = vmatmul.mubr.f32.gmra.mrb[0].mxu0 %v2509
        %v2699 = vpop.f32.mrb[0].mxu0
        %v2700 = vadd.f32 0.0, %v2699
        %v2701 = vpop.f32.mrb[0].mxu0
        %2702 = vmatprep.mubr.f32.mxu0 %v2512
        %2703 = vmatmul.mubr.f32.gmra.mrb[0].mxu0 %v2511
        %v2704 = vpop.f32.mrb[0].mxu0
        %v2705 = vadd.f32 0.0, %v2704
        %v2706 = vpop.f32.mrb[0].mxu0
        %2707 = vdwg.mxu0
        %v2708 = vadd.f32 %v2514, %v2630
        %v2709 = vadd.f32 %v2515, %v2635
        %v2710 = vadd.f32 %v2516, %v2640
        %v2711 = vadd.f32 %v2517, %v2645
        %v2712 = vadd.f32 %v2518, %v2650
        %v2713 = vadd.f32 %v2519, %v2655
        %v2714 = vadd.f32 %v2520, %v2660
        %v2715 = vadd.f32 %v2521, %v2665
        %v2716 = vadd.f32 %v2522, %v2670
        %v2717 = vadd.f32 %v2523, %v2675
        %v2718 = vadd.f32 %v2524, %v2680
        %v2719 = vadd.f32 %v2525, %v2685
        %v2720 = vadd.f32 %v2526, %v2690
        %v2721 = vadd.f32 %v2527, %v2695
        %v2722 = vadd.f32 %v2528, %v2700
        %v2723 = vadd.f32 %v2529, %v2705
        %2724 = vst.msk [vmem:[%s2513] sm:$0xff] %vm1166, %v2708
        %2725 = vst.msk [vmem:[%s2513 + $0x8] sm:$0xff] %vm1166, %v2709
        %2726 = vst.msk [vmem:[%s2513 + $0x10] sm:$0xff] %vm1166, %v2710
        %2727 = vst.msk [vmem:[%s2513 + $0x18] sm:$0xff] %vm1166, %v2711
        %2728 = vst.msk [vmem:[%s2513 + $0x20] sm:$0xff] %vm1166, %v2712
        %2729 = vst.msk [vmem:[%s2513 + $0x28] sm:$0xff] %vm1166, %v2713
        %2730 = vst.msk [vmem:[%s2513 + $0x30] sm:$0xff] %vm1166, %v2714
        %2731 = vst.msk [vmem:[%s2513 + $0x38] sm:$0xff] %vm1166, %v2715
        %2732 = vst.msk [vmem:[%s2513 + $0x40] sm:$0xff] %vm1166, %v2716
        %2733 = vst.msk [vmem:[%s2513 + $0x48] sm:$0xff] %vm1166, %v2717
        %2734 = vst.msk [vmem:[%s2513 + $0x50] sm:$0xff] %vm1166, %v2718
        %2735 = vst.msk [vmem:[%s2513 + $0x58] sm:$0xff] %vm1166, %v2719
        %2736 = vst.msk [vmem:[%s2513 + $0x60] sm:$0xff] %vm1166, %v2720
        %2737 = vst.msk [vmem:[%s2513 + $0x68] sm:$0xff] %vm1166, %v2721
        %2738 = vst.msk [vmem:[%s2513 + $0x70] sm:$0xff] %vm1166, %v2722
        %2739 = vst.msk [vmem:[%s2513 + $0x78] sm:$0xff] %vm1166, %v2723
        // Predicated region
        $region79: #{_lambda_.3} parent=69 // pred_check
          %p2740 = pneg %p456
        $region80: #{_lambda_.3} parent=69 // pred_check_branch
          %2742 = sbr.rel (%p2740) target = $region82
        $region81: #{_lambda_.3} parent=69 // pred_region
          %v2743 = vld [vmem:[#allocation2] sm:$0xff]
          %v2744 = vld [vmem:[#allocation2 + $0x8] sm:$0xff]
          %v2745 = vld [vmem:[#allocation2 + $0x10] sm:$0xff]
          %v2746 = vld [vmem:[#allocation2 + $0x18] sm:$0xff]
          %v2747 = vld [vmem:[#allocation2 + $0x20] sm:$0xff]
          %v2748 = vld [vmem:[#allocation2 + $0x28] sm:$0xff]
          %v2749 = vld [vmem:[#allocation2 + $0x30] sm:$0xff]
          %v2750 = vld [vmem:[#allocation2 + $0x38] sm:$0xff]
          %v2751 = vld [vmem:[#allocation2 + $0x40] sm:$0xff]
          %v2752 = vld [vmem:[#allocation2 + $0x48] sm:$0xff]
          %v2753 = vld [vmem:[#allocation2 + $0x50] sm:$0xff]
          %v2754 = vld [vmem:[#allocation2 + $0x58] sm:$0xff]
          %v2755 = vld [vmem:[#allocation2 + $0x60] sm:$0xff]
          %v2756 = vld [vmem:[#allocation2 + $0x68] sm:$0xff]
          %v2757 = vld [vmem:[#allocation2 + $0x70] sm:$0xff]
          %v2758 = vld [vmem:[#allocation2 + $0x78] sm:$0xff]
          %v2759 = vmax.f32 %v2743, 1e-30
          %v2760 = vmax.f32 %v2744, 1e-30
          %v2761 = vmax.f32 %v2745, 1e-30
          %v2762 = vmax.f32 %v2746, 1e-30
          %v2763 = vmax.f32 %v2747, 1e-30
          %v2764 = vmax.f32 %v2748, 1e-30
          %v2765 = vmax.f32 %v2749, 1e-30
          %v2766 = vmax.f32 %v2750, 1e-30
          %v2767 = vmax.f32 %v2751, 1e-30
          %v2768 = vmax.f32 %v2752, 1e-30
          %v2769 = vmax.f32 %v2753, 1e-30
          %v2770 = vmax.f32 %v2754, 1e-30
          %v2771 = vmax.f32 %v2755, 1e-30
          %v2772 = vmax.f32 %v2756, 1e-30
          %v2773 = vmax.f32 %v2757, 1e-30
          %v2774 = vmax.f32 %v2758, 1e-30
          %2776 = vset.pattern.permute.xlu0 16
          %2777 = vperm.xlu0 %2776, %v2759
          %v2778 = vpop.permute.xlu0 %2777
          %2781 = vset.pattern.permute.xlu0 16
          %2782 = vperm.xlu0 %2781, %v2760
          %v2783 = vpop.permute.xlu0 %2782
          %2786 = vset.pattern.permute.xlu0 16
          %2787 = vperm.xlu0 %2786, %v2761
          %v2788 = vpop.permute.xlu0 %2787
          %2791 = vset.pattern.permute.xlu0 16
          %2792 = vperm.xlu0 %2791, %v2762
          %v2793 = vpop.permute.xlu0 %2792
          %2796 = vset.pattern.permute.xlu0 16
          %2797 = vperm.xlu0 %2796, %v2763
          %v2798 = vpop.permute.xlu0 %2797
          %2801 = vset.pattern.permute.xlu0 16
          %2802 = vperm.xlu0 %2801, %v2764
          %v2803 = vpop.permute.xlu0 %2802
          %2806 = vset.pattern.permute.xlu0 16
          %2807 = vperm.xlu0 %2806, %v2765
          %v2808 = vpop.permute.xlu0 %2807
          %2811 = vset.pattern.permute.xlu0 16
          %2812 = vperm.xlu0 %2811, %v2766
          %v2813 = vpop.permute.xlu0 %2812
          %2816 = vset.pattern.permute.xlu0 16
          %2817 = vperm.xlu0 %2816, %v2767
          %v2818 = vpop.permute.xlu0 %2817
          %2821 = vset.pattern.permute.xlu0 16
          %2822 = vperm.xlu0 %2821, %v2768
          %v2823 = vpop.permute.xlu0 %2822
          %2826 = vset.pattern.permute.xlu0 16
          %2827 = vperm.xlu0 %2826, %v2769
          %v2828 = vpop.permute.xlu0 %2827
          %2831 = vset.pattern.permute.xlu0 16
          %2832 = vperm.xlu0 %2831, %v2770
          %v2833 = vpop.permute.xlu0 %2832
          %2836 = vset.pattern.permute.xlu0 16
          %2837 = vperm.xlu0 %2836, %v2771
          %v2838 = vpop.permute.xlu0 %2837
          %2841 = vset.pattern.permute.xlu0 16
          %2842 = vperm.xlu0 %2841, %v2772
          %v2843 = vpop.permute.xlu0 %2842
          %2846 = vset.pattern.permute.xlu0 16
          %2847 = vperm.xlu0 %2846, %v2773
          %v2848 = vpop.permute.xlu0 %2847
          %2851 = vset.pattern.permute.xlu0 16
          %2852 = vperm.xlu0 %2851, %v2774
          %v2853 = vpop.permute.xlu0 %2852
          %v2855 = vrcp.pop %v2778
          %v2856 = vmul.f32 %v2743, %v2855
          %v2857 = vrcp.pop %v2783
          %v2858 = vmul.f32 %v2744, %v2857
          %v2859 = vrcp.pop %v2788
          %v2860 = vmul.f32 %v2745, %v2859
          %v2861 = vrcp.pop %v2793
          %v2862 = vmul.f32 %v2746, %v2861
          %v2863 = vrcp.pop %v2798
          %v2864 = vmul.f32 %v2747, %v2863
          %v2865 = vrcp.pop %v2803
          %v2866 = vmul.f32 %v2748, %v2865
          %v2867 = vrcp.pop %v2808
          %v2868 = vmul.f32 %v2749, %v2867
          %v2869 = vrcp.pop %v2813
          %v2870 = vmul.f32 %v2750, %v2869
          %v2871 = vrcp.pop %v2818
          %v2872 = vmul.f32 %v2751, %v2871
          %v2873 = vrcp.pop %v2823
          %v2874 = vmul.f32 %v2752, %v2873
          %v2875 = vrcp.pop %v2828
          %v2876 = vmul.f32 %v2753, %v2875
          %v2877 = vrcp.pop %v2833
          %v2878 = vmul.f32 %v2754, %v2877
          %v2879 = vrcp.pop %v2838
          %v2880 = vmul.f32 %v2755, %v2879
          %v2881 = vrcp.pop %v2843
          %v2882 = vmul.f32 %v2756, %v2881
          %v2883 = vrcp.pop %v2848
          %v2884 = vmul.f32 %v2757, %v2883
          %v2885 = vrcp.pop %v2853
          %v2886 = vmul.f32 %v2758, %v2885
          %vm2887 = vcmp.gt.f32.partialorder %v2856, 0.0
          %vm2888 = vcmp.gt.f32.partialorder %v2858, 0.0
          %vm2889 = vcmp.gt.f32.partialorder %v2860, 0.0
          %vm2890 = vcmp.gt.f32.partialorder %v2862, 0.0
          %vm2891 = vcmp.gt.f32.partialorder %v2864, 0.0
          %vm2892 = vcmp.gt.f32.partialorder %v2866, 0.0
          %vm2893 = vcmp.gt.f32.partialorder %v2868, 0.0
          %vm2894 = vcmp.gt.f32.partialorder %v2870, 0.0
          %vm2895 = vcmp.gt.f32.partialorder %v2872, 0.0
          %vm2896 = vcmp.gt.f32.partialorder %v2874, 0.0
          %vm2897 = vcmp.gt.f32.partialorder %v2876, 0.0
          %vm2898 = vcmp.gt.f32.partialorder %v2878, 0.0
          %vm2899 = vcmp.gt.f32.partialorder %v2880, 0.0
          %vm2900 = vcmp.gt.f32.partialorder %v2882, 0.0
          %vm2901 = vcmp.gt.f32.partialorder %v2884, 0.0
          %vm2902 = vcmp.gt.f32.partialorder %v2886, 0.0
          %v2903 = vmin.f32 %v2856, 0.0
          %v2904 = vmin.f32 %v2858, 0.0
          %v2905 = vmin.f32 %v2860, 0.0
          %v2906 = vmin.f32 %v2862, 0.0
          %v2907 = vmin.f32 %v2864, 0.0
          %v2908 = vmin.f32 %v2866, 0.0
          %v2909 = vmin.f32 %v2868, 0.0
          %v2910 = vmin.f32 %v2870, 0.0
          %v2911 = vmin.f32 %v2872, 0.0
          %v2912 = vmin.f32 %v2874, 0.0
          %v2913 = vmin.f32 %v2876, 0.0
          %v2914 = vmin.f32 %v2878, 0.0
          %v2915 = vmin.f32 %v2880, 0.0
          %v2916 = vmin.f32 %v2882, 0.0
          %v2917 = vmin.f32 %v2884, 0.0
          %v2918 = vmin.f32 %v2886, 0.0
          %v2919 = vmul.f32 %v2903, 1.442695
          %v2920 = vpow.pop %v2919
          %v2921 = vmul.f32 %v2904, 1.442695
          %v2922 = vpow.pop %v2921
          %v2923 = vmul.f32 %v2905, 1.442695
          %v2924 = vpow.pop %v2923
          %v2925 = vmul.f32 %v2906, 1.442695
          %v2926 = vpow.pop %v2925
          %v2927 = vmul.f32 %v2907, 1.442695
          %v2928 = vpow.pop %v2927
          %v2929 = vmul.f32 %v2908, 1.442695
          %v2930 = vpow.pop %v2929
          %v2931 = vmul.f32 %v2909, 1.442695
          %v2932 = vpow.pop %v2931
          %v2933 = vmul.f32 %v2910, 1.442695
          %v2934 = vpow.pop %v2933
          %v2935 = vmul.f32 %v2911, 1.442695
          %v2936 = vpow.pop %v2935
          %v2937 = vmul.f32 %v2912, 1.442695
          %v2938 = vpow.pop %v2937
          %v2939 = vmul.f32 %v2913, 1.442695
          %v2940 = vpow.pop %v2939
          %v2941 = vmul.f32 %v2914, 1.442695
          %v2942 = vpow.pop %v2941
          %v2943 = vmul.f32 %v2915, 1.442695
          %v2944 = vpow.pop %v2943
          %v2945 = vmul.f32 %v2916, 1.442695
          %v2946 = vpow.pop %v2945
          %v2947 = vmul.f32 %v2917, 1.442695
          %v2948 = vpow.pop %v2947
          %v2949 = vmul.f32 %v2918, 1.442695
          %v2950 = vpow.pop %v2949
          %v2951 = vsub.f32 %v2920, 1.0
          %v2952 = vsub.f32 %v2922, 1.0
          %v2953 = vsub.f32 %v2924, 1.0
          %v2954 = vsub.f32 %v2926, 1.0
          %v2955 = vsub.f32 %v2928, 1.0
          %v2956 = vsub.f32 %v2930, 1.0
          %v2957 = vsub.f32 %v2932, 1.0
          %v2958 = vsub.f32 %v2934, 1.0
          %v2959 = vsub.f32 %v2936, 1.0
          %v2960 = vsub.f32 %v2938, 1.0
          %v2961 = vsub.f32 %v2940, 1.0
          %v2962 = vsub.f32 %v2942, 1.0
          %v2963 = vsub.f32 %v2944, 1.0
          %v2964 = vsub.f32 %v2946, 1.0
          %v2965 = vsub.f32 %v2948, 1.0
          %v2966 = vsub.f32 %v2950, 1.0
          %v2967 = vsel %vm2887, %v2856, %v2951
          %v2968 = vsel %vm2888, %v2858, %v2952
          %v2969 = vsel %vm2889, %v2860, %v2953
          %v2970 = vsel %vm2890, %v2862, %v2954
          %v2971 = vsel %vm2891, %v2864, %v2955
          %v2972 = vsel %vm2892, %v2866, %v2956
          %v2973 = vsel %vm2893, %v2868, %v2957
          %v2974 = vsel %vm2894, %v2870, %v2958
          %v2975 = vsel %vm2895, %v2872, %v2959
          %v2976 = vsel %vm2896, %v2874, %v2960
          %v2977 = vsel %vm2897, %v2876, %v2961
          %v2978 = vsel %vm2898, %v2878, %v2962
          %v2979 = vsel %vm2899, %v2880, %v2963
          %v2980 = vsel %vm2900, %v2882, %v2964
          %v2981 = vsel %vm2901, %v2884, %v2965
          %v2982 = vsel %vm2902, %v2886, %v2966
          %v2983 = vld [vmem:[%s1475] sm:$0xff]
          %v2984 = vld [vmem:[%s1475 + $0x8] sm:$0xff]
          %v2985 = vld [vmem:[%s1475 + $0x10] sm:$0xff]
          %v2986 = vld [vmem:[%s1475 + $0x18] sm:$0xff]
          %v2987 = vld [vmem:[%s1475 + $0x20] sm:$0xff]
          %v2988 = vld [vmem:[%s1475 + $0x28] sm:$0xff]
          %v2989 = vld [vmem:[%s1475 + $0x30] sm:$0xff]
          %v2990 = vld [vmem:[%s1475 + $0x38] sm:$0xff]
          %v2991 = vld [vmem:[%s1475 + $0x40] sm:$0xff]
          %v2992 = vld [vmem:[%s1475 + $0x48] sm:$0xff]
          %v2993 = vld [vmem:[%s1475 + $0x50] sm:$0xff]
          %v2994 = vld [vmem:[%s1475 + $0x58] sm:$0xff]
          %v2995 = vld [vmem:[%s1475 + $0x60] sm:$0xff]
          %v2996 = vld [vmem:[%s1475 + $0x68] sm:$0xff]
          %v2997 = vld [vmem:[%s1475 + $0x70] sm:$0xff]
          %v2998 = vld [vmem:[%s1475 + $0x78] sm:$0xff]
          %v2999 = vmax.f32 %v2983, 1e-30
          %v3000 = vmax.f32 %v2984, 1e-30
          %v3001 = vmax.f32 %v2985, 1e-30
          %v3002 = vmax.f32 %v2986, 1e-30
          %v3003 = vmax.f32 %v2987, 1e-30
          %v3004 = vmax.f32 %v2988, 1e-30
          %v3005 = vmax.f32 %v2989, 1e-30
          %v3006 = vmax.f32 %v2990, 1e-30
          %v3007 = vmax.f32 %v2991, 1e-30
          %v3008 = vmax.f32 %v2992, 1e-30
          %v3009 = vmax.f32 %v2993, 1e-30
          %v3010 = vmax.f32 %v2994, 1e-30
          %v3011 = vmax.f32 %v2995, 1e-30
          %v3012 = vmax.f32 %v2996, 1e-30
          %v3013 = vmax.f32 %v2997, 1e-30
          %v3014 = vmax.f32 %v2998, 1e-30
          %3016 = vset.pattern.permute.xlu0 16
          %3017 = vperm.xlu0 %3016, %v2999
          %v3018 = vpop.permute.xlu0 %3017
          %3021 = vset.pattern.permute.xlu0 16
          %3022 = vperm.xlu0 %3021, %v3000
          %v3023 = vpop.permute.xlu0 %3022
          %3026 = vset.pattern.permute.xlu0 16
          %3027 = vperm.xlu0 %3026, %v3001
          %v3028 = vpop.permute.xlu0 %3027
          %3031 = vset.pattern.permute.xlu0 16
          %3032 = vperm.xlu0 %3031, %v3002
          %v3033 = vpop.permute.xlu0 %3032
          %3036 = vset.pattern.permute.xlu0 16
          %3037 = vperm.xlu0 %3036, %v3003
          %v3038 = vpop.permute.xlu0 %3037
          %3041 = vset.pattern.permute.xlu0 16
          %3042 = vperm.xlu0 %3041, %v3004
          %v3043 = vpop.permute.xlu0 %3042
          %3046 = vset.pattern.permute.xlu0 16
          %3047 = vperm.xlu0 %3046, %v3005
          %v3048 = vpop.permute.xlu0 %3047
          %3051 = vset.pattern.permute.xlu0 16
          %3052 = vperm.xlu0 %3051, %v3006
          %v3053 = vpop.permute.xlu0 %3052
          %3056 = vset.pattern.permute.xlu0 16
          %3057 = vperm.xlu0 %3056, %v3007
          %v3058 = vpop.permute.xlu0 %3057
          %3061 = vset.pattern.permute.xlu0 16
          %3062 = vperm.xlu0 %3061, %v3008
          %v3063 = vpop.permute.xlu0 %3062
          %3066 = vset.pattern.permute.xlu0 16
          %3067 = vperm.xlu0 %3066, %v3009
          %v3068 = vpop.permute.xlu0 %3067
          %3071 = vset.pattern.permute.xlu0 16
          %3072 = vperm.xlu0 %3071, %v3010
          %v3073 = vpop.permute.xlu0 %3072
          %3076 = vset.pattern.permute.xlu0 16
          %3077 = vperm.xlu0 %3076, %v3011
          %v3078 = vpop.permute.xlu0 %3077
          %3081 = vset.pattern.permute.xlu0 16
          %3082 = vperm.xlu0 %3081, %v3012
          %v3083 = vpop.permute.xlu0 %3082
          %3086 = vset.pattern.permute.xlu0 16
          %3087 = vperm.xlu0 %3086, %v3013
          %v3088 = vpop.permute.xlu0 %3087
          %3091 = vset.pattern.permute.xlu0 16
          %3092 = vperm.xlu0 %3091, %v3014
          %v3093 = vpop.permute.xlu0 %3092
          %v3095 = vrcp.pop %v3018
          %v3096 = vmul.f32 %v2983, %v3095
          %v3097 = vrcp.pop %v3023
          %v3098 = vmul.f32 %v2984, %v3097
          %v3099 = vrcp.pop %v3028
          %v3100 = vmul.f32 %v2985, %v3099
          %v3101 = vrcp.pop %v3033
          %v3102 = vmul.f32 %v2986, %v3101
          %v3103 = vrcp.pop %v3038
          %v3104 = vmul.f32 %v2987, %v3103
          %v3105 = vrcp.pop %v3043
          %v3106 = vmul.f32 %v2988, %v3105
          %v3107 = vrcp.pop %v3048
          %v3108 = vmul.f32 %v2989, %v3107
          %v3109 = vrcp.pop %v3053
          %v3110 = vmul.f32 %v2990, %v3109
          %v3111 = vrcp.pop %v3058
          %v3112 = vmul.f32 %v2991, %v3111
          %v3113 = vrcp.pop %v3063
          %v3114 = vmul.f32 %v2992, %v3113
          %v3115 = vrcp.pop %v3068
          %v3116 = vmul.f32 %v2993, %v3115
          %v3117 = vrcp.pop %v3073
          %v3118 = vmul.f32 %v2994, %v3117
          %v3119 = vrcp.pop %v3078
          %v3120 = vmul.f32 %v2995, %v3119
          %v3121 = vrcp.pop %v3083
          %v3122 = vmul.f32 %v2996, %v3121
          %v3123 = vrcp.pop %v3088
          %v3124 = vmul.f32 %v2997, %v3123
          %v3125 = vrcp.pop %v3093
          %v3126 = vmul.f32 %v2998, %v3125
          %vm3127 = vcmp.gt.f32.partialorder %v3096, 0.0
          %vm3128 = vcmp.gt.f32.partialorder %v3098, 0.0
          %vm3129 = vcmp.gt.f32.partialorder %v3100, 0.0
          %vm3130 = vcmp.gt.f32.partialorder %v3102, 0.0
          %vm3131 = vcmp.gt.f32.partialorder %v3104, 0.0
          %vm3132 = vcmp.gt.f32.partialorder %v3106, 0.0
          %vm3133 = vcmp.gt.f32.partialorder %v3108, 0.0
          %vm3134 = vcmp.gt.f32.partialorder %v3110, 0.0
          %vm3135 = vcmp.gt.f32.partialorder %v3112, 0.0
          %vm3136 = vcmp.gt.f32.partialorder %v3114, 0.0
          %vm3137 = vcmp.gt.f32.partialorder %v3116, 0.0
          %vm3138 = vcmp.gt.f32.partialorder %v3118, 0.0
          %vm3139 = vcmp.gt.f32.partialorder %v3120, 0.0
          %vm3140 = vcmp.gt.f32.partialorder %v3122, 0.0
          %vm3141 = vcmp.gt.f32.partialorder %v3124, 0.0
          %vm3142 = vcmp.gt.f32.partialorder %v3126, 0.0
          %v3143 = vmin.f32 %v3096, 0.0
          %v3144 = vmin.f32 %v3098, 0.0
          %v3145 = vmin.f32 %v3100, 0.0
          %v3146 = vmin.f32 %v3102, 0.0
          %v3147 = vmin.f32 %v3104, 0.0
          %v3148 = vmin.f32 %v3106, 0.0
          %v3149 = vmin.f32 %v3108, 0.0
          %v3150 = vmin.f32 %v3110, 0.0
          %v3151 = vmin.f32 %v3112, 0.0
          %v3152 = vmin.f32 %v3114, 0.0
          %v3153 = vmin.f32 %v3116, 0.0
          %v3154 = vmin.f32 %v3118, 0.0
          %v3155 = vmin.f32 %v3120, 0.0
          %v3156 = vmin.f32 %v3122, 0.0
          %v3157 = vmin.f32 %v3124, 0.0
          %v3158 = vmin.f32 %v3126, 0.0
          %v3159 = vmul.f32 %v3143, 1.442695
          %v3160 = vpow.pop %v3159
          %v3161 = vmul.f32 %v3144, 1.442695
          %v3162 = vpow.pop %v3161
          %v3163 = vmul.f32 %v3145, 1.442695
          %v3164 = vpow.pop %v3163
          %v3165 = vmul.f32 %v3146, 1.442695
          %v3166 = vpow.pop %v3165
          %v3167 = vmul.f32 %v3147, 1.442695
          %v3168 = vpow.pop %v3167
          %v3169 = vmul.f32 %v3148, 1.442695
          %v3170 = vpow.pop %v3169
          %v3171 = vmul.f32 %v3149, 1.442695
          %v3172 = vpow.pop %v3171
          %v3173 = vmul.f32 %v3150, 1.442695
          %v3174 = vpow.pop %v3173
          %v3175 = vmul.f32 %v3151, 1.442695
          %v3176 = vpow.pop %v3175
          %v3177 = vmul.f32 %v3152, 1.442695
          %v3178 = vpow.pop %v3177
          %v3179 = vmul.f32 %v3153, 1.442695
          %v3180 = vpow.pop %v3179
          %v3181 = vmul.f32 %v3154, 1.442695
          %v3182 = vpow.pop %v3181
          %v3183 = vmul.f32 %v3155, 1.442695
          %v3184 = vpow.pop %v3183
          %v3185 = vmul.f32 %v3156, 1.442695
          %v3186 = vpow.pop %v3185
          %v3187 = vmul.f32 %v3157, 1.442695
          %v3188 = vpow.pop %v3187
          %v3189 = vmul.f32 %v3158, 1.442695
          %v3190 = vpow.pop %v3189
          %v3191 = vsub.f32 %v3160, 1.0
          %v3192 = vsub.f32 %v3162, 1.0
          %v3193 = vsub.f32 %v3164, 1.0
          %v3194 = vsub.f32 %v3166, 1.0
          %v3195 = vsub.f32 %v3168, 1.0
          %v3196 = vsub.f32 %v3170, 1.0
          %v3197 = vsub.f32 %v3172, 1.0
          %v3198 = vsub.f32 %v3174, 1.0
          %v3199 = vsub.f32 %v3176, 1.0
          %v3200 = vsub.f32 %v3178, 1.0
          %v3201 = vsub.f32 %v3180, 1.0
          %v3202 = vsub.f32 %v3182, 1.0
          %v3203 = vsub.f32 %v3184, 1.0
          %v3204 = vsub.f32 %v3186, 1.0
          %v3205 = vsub.f32 %v3188, 1.0
          %v3206 = vsub.f32 %v3190, 1.0
          %v3207 = vsel %vm3127, %v3096, %v3191
          %v3208 = vsel %vm3128, %v3098, %v3192
          %v3209 = vsel %vm3129, %v3100, %v3193
          %v3210 = vsel %vm3130, %v3102, %v3194
          %v3211 = vsel %vm3131, %v3104, %v3195
          %v3212 = vsel %vm3132, %v3106, %v3196
          %v3213 = vsel %vm3133, %v3108, %v3197
          %v3214 = vsel %vm3134, %v3110, %v3198
          %v3215 = vsel %vm3135, %v3112, %v3199
          %v3216 = vsel %vm3136, %v3114, %v3200
          %v3217 = vsel %vm3137, %v3116, %v3201
          %v3218 = vsel %vm3138, %v3118, %v3202
          %v3219 = vsel %vm3139, %v3120, %v3203
          %v3220 = vsel %vm3140, %v3122, %v3204
          %v3221 = vsel %vm3141, %v3124, %v3205
          %v3222 = vsel %vm3142, %v3126, %v3206
          %v3223 = vld [vmem:[%s1994] sm:$0xff]
          %v3224 = vld [vmem:[%s1994 + $0x8] sm:$0xff]
          %v3225 = vld [vmem:[%s1994 + $0x10] sm:$0xff]
          %v3226 = vld [vmem:[%s1994 + $0x18] sm:$0xff]
          %v3227 = vld [vmem:[%s1994 + $0x20] sm:$0xff]
          %v3228 = vld [vmem:[%s1994 + $0x28] sm:$0xff]
          %v3229 = vld [vmem:[%s1994 + $0x30] sm:$0xff]
          %v3230 = vld [vmem:[%s1994 + $0x38] sm:$0xff]
          %v3231 = vld [vmem:[%s1994 + $0x40] sm:$0xff]
          %v3232 = vld [vmem:[%s1994 + $0x48] sm:$0xff]
          %v3233 = vld [vmem:[%s1994 + $0x50] sm:$0xff]
          %v3234 = vld [vmem:[%s1994 + $0x58] sm:$0xff]
          %v3235 = vld [vmem:[%s1994 + $0x60] sm:$0xff]
          %v3236 = vld [vmem:[%s1994 + $0x68] sm:$0xff]
          %v3237 = vld [vmem:[%s1994 + $0x70] sm:$0xff]
          %v3238 = vld [vmem:[%s1994 + $0x78] sm:$0xff]
          %v3239 = vmax.f32 %v3223, 1e-30
          %v3240 = vmax.f32 %v3224, 1e-30
          %v3241 = vmax.f32 %v3225, 1e-30
          %v3242 = vmax.f32 %v3226, 1e-30
          %v3243 = vmax.f32 %v3227, 1e-30
          %v3244 = vmax.f32 %v3228, 1e-30
          %v3245 = vmax.f32 %v3229, 1e-30
          %v3246 = vmax.f32 %v3230, 1e-30
          %v3247 = vmax.f32 %v3231, 1e-30
          %v3248 = vmax.f32 %v3232, 1e-30
          %v3249 = vmax.f32 %v3233, 1e-30
          %v3250 = vmax.f32 %v3234, 1e-30
          %v3251 = vmax.f32 %v3235, 1e-30
          %v3252 = vmax.f32 %v3236, 1e-30
          %v3253 = vmax.f32 %v3237, 1e-30
          %v3254 = vmax.f32 %v3238, 1e-30
          %3256 = vset.pattern.permute.xlu0 16
          %3257 = vperm.xlu0 %3256, %v3239
          %v3258 = vpop.permute.xlu0 %3257
          %3261 = vset.pattern.permute.xlu0 16
          %3262 = vperm.xlu0 %3261, %v3240
          %v3263 = vpop.permute.xlu0 %3262
          %3266 = vset.pattern.permute.xlu0 16
          %3267 = vperm.xlu0 %3266, %v3241
          %v3268 = vpop.permute.xlu0 %3267
          %3271 = vset.pattern.permute.xlu0 16
          %3272 = vperm.xlu0 %3271, %v3242
          %v3273 = vpop.permute.xlu0 %3272
          %3276 = vset.pattern.permute.xlu0 16
          %3277 = vperm.xlu0 %3276, %v3243
          %v3278 = vpop.permute.xlu0 %3277
          %3281 = vset.pattern.permute.xlu0 16
          %3282 = vperm.xlu0 %3281, %v3244
          %v3283 = vpop.permute.xlu0 %3282
          %3286 = vset.pattern.permute.xlu0 16
          %3287 = vperm.xlu0 %3286, %v3245
          %v3288 = vpop.permute.xlu0 %3287
          %3291 = vset.pattern.permute.xlu0 16
          %3292 = vperm.xlu0 %3291, %v3246
          %v3293 = vpop.permute.xlu0 %3292
          %3296 = vset.pattern.permute.xlu0 16
          %3297 = vperm.xlu0 %3296, %v3247
          %v3298 = vpop.permute.xlu0 %3297
          %3301 = vset.pattern.permute.xlu0 16
          %3302 = vperm.xlu0 %3301, %v3248
          %v3303 = vpop.permute.xlu0 %3302
          %3306 = vset.pattern.permute.xlu0 16
          %3307 = vperm.xlu0 %3306, %v3249
          %v3308 = vpop.permute.xlu0 %3307
          %3311 = vset.pattern.permute.xlu0 16
          %3312 = vperm.xlu0 %3311, %v3250
          %v3313 = vpop.permute.xlu0 %3312
          %3316 = vset.pattern.permute.xlu0 16
          %3317 = vperm.xlu0 %3316, %v3251
          %v3318 = vpop.permute.xlu0 %3317
          %3321 = vset.pattern.permute.xlu0 16
          %3322 = vperm.xlu0 %3321, %v3252
          %v3323 = vpop.permute.xlu0 %3322
          %3326 = vset.pattern.permute.xlu0 16
          %3327 = vperm.xlu0 %3326, %v3253
          %v3328 = vpop.permute.xlu0 %3327
          %3331 = vset.pattern.permute.xlu0 16
          %3332 = vperm.xlu0 %3331, %v3254
          %v3333 = vpop.permute.xlu0 %3332
          %v3335 = vrcp.pop %v3258
          %v3336 = vmul.f32 %v3223, %v3335
          %v3337 = vrcp.pop %v3263
          %v3338 = vmul.f32 %v3224, %v3337
          %v3339 = vrcp.pop %v3268
          %v3340 = vmul.f32 %v3225, %v3339
          %v3341 = vrcp.pop %v3273
          %v3342 = vmul.f32 %v3226, %v3341
          %v3343 = vrcp.pop %v3278
          %v3344 = vmul.f32 %v3227, %v3343
          %v3345 = vrcp.pop %v3283
          %v3346 = vmul.f32 %v3228, %v3345
          %v3347 = vrcp.pop %v3288
          %v3348 = vmul.f32 %v3229, %v3347
          %v3349 = vrcp.pop %v3293
          %v3350 = vmul.f32 %v3230, %v3349
          %v3351 = vrcp.pop %v3298
          %v3352 = vmul.f32 %v3231, %v3351
          %v3353 = vrcp.pop %v3303
          %v3354 = vmul.f32 %v3232, %v3353
          %v3355 = vrcp.pop %v3308
          %v3356 = vmul.f32 %v3233, %v3355
          %v3357 = vrcp.pop %v3313
          %v3358 = vmul.f32 %v3234, %v3357
          %v3359 = vrcp.pop %v3318
          %v3360 = vmul.f32 %v3235, %v3359
          %v3361 = vrcp.pop %v3323
          %v3362 = vmul.f32 %v3236, %v3361
          %v3363 = vrcp.pop %v3328
          %v3364 = vmul.f32 %v3237, %v3363
          %v3365 = vrcp.pop %v3333
          %v3366 = vmul.f32 %v3238, %v3365
          %vm3367 = vcmp.gt.f32.partialorder %v3336, 0.0
          %vm3368 = vcmp.gt.f32.partialorder %v3338, 0.0
          %vm3369 = vcmp.gt.f32.partialorder %v3340, 0.0
          %vm3370 = vcmp.gt.f32.partialorder %v3342, 0.0
          %vm3371 = vcmp.gt.f32.partialorder %v3344, 0.0
          %vm3372 = vcmp.gt.f32.partialorder %v3346, 0.0
          %vm3373 = vcmp.gt.f32.partialorder %v3348, 0.0
          %vm3374 = vcmp.gt.f32.partialorder %v3350, 0.0
          %vm3375 = vcmp.gt.f32.partialorder %v3352, 0.0
          %vm3376 = vcmp.gt.f32.partialorder %v3354, 0.0
          %vm3377 = vcmp.gt.f32.partialorder %v3356, 0.0
          %vm3378 = vcmp.gt.f32.partialorder %v3358, 0.0
          %vm3379 = vcmp.gt.f32.partialorder %v3360, 0.0
          %vm3380 = vcmp.gt.f32.partialorder %v3362, 0.0
          %vm3381 = vcmp.gt.f32.partialorder %v3364, 0.0
          %vm3382 = vcmp.gt.f32.partialorder %v3366, 0.0
          %v3383 = vmin.f32 %v3336, 0.0
          %v3384 = vmin.f32 %v3338, 0.0
          %v3385 = vmin.f32 %v3340, 0.0
          %v3386 = vmin.f32 %v3342, 0.0
          %v3387 = vmin.f32 %v3344, 0.0
          %v3388 = vmin.f32 %v3346, 0.0
          %v3389 = vmin.f32 %v3348, 0.0
          %v3390 = vmin.f32 %v3350, 0.0
          %v3391 = vmin.f32 %v3352, 0.0
          %v3392 = vmin.f32 %v3354, 0.0
          %v3393 = vmin.f32 %v3356, 0.0
          %v3394 = vmin.f32 %v3358, 0.0
          %v3395 = vmin.f32 %v3360, 0.0
          %v3396 = vmin.f32 %v3362, 0.0
          %v3397 = vmin.f32 %v3364, 0.0
          %v3398 = vmin.f32 %v3366, 0.0
          %v3399 = vmul.f32 %v3383, 1.442695
          %v3400 = vpow.pop %v3399
          %v3401 = vmul.f32 %v3384, 1.442695
          %v3402 = vpow.pop %v3401
          %v3403 = vmul.f32 %v3385, 1.442695
          %v3404 = vpow.pop %v3403
          %v3405 = vmul.f32 %v3386, 1.442695
          %v3406 = vpow.pop %v3405
          %v3407 = vmul.f32 %v3387, 1.442695
          %v3408 = vpow.pop %v3407
          %v3409 = vmul.f32 %v3388, 1.442695
          %v3410 = vpow.pop %v3409
          %v3411 = vmul.f32 %v3389, 1.442695
          %v3412 = vpow.pop %v3411
          %v3413 = vmul.f32 %v3390, 1.442695
          %v3414 = vpow.pop %v3413
          %v3415 = vmul.f32 %v3391, 1.442695
          %v3416 = vpow.pop %v3415
          %v3417 = vmul.f32 %v3392, 1.442695
          %v3418 = vpow.pop %v3417
          %v3419 = vmul.f32 %v3393, 1.442695
          %v3420 = vpow.pop %v3419
          %v3421 = vmul.f32 %v3394, 1.442695
          %v3422 = vpow.pop %v3421
          %v3423 = vmul.f32 %v3395, 1.442695
          %v3424 = vpow.pop %v3423
          %v3425 = vmul.f32 %v3396, 1.442695
          %v3426 = vpow.pop %v3425
          %v3427 = vmul.f32 %v3397, 1.442695
          %v3428 = vpow.pop %v3427
          %v3429 = vmul.f32 %v3398, 1.442695
          %v3430 = vpow.pop %v3429
          %v3431 = vsub.f32 %v3400, 1.0
          %v3432 = vsub.f32 %v3402, 1.0
          %v3433 = vsub.f32 %v3404, 1.0
          %v3434 = vsub.f32 %v3406, 1.0
          %v3435 = vsub.f32 %v3408, 1.0
          %v3436 = vsub.f32 %v3410, 1.0
          %v3437 = vsub.f32 %v3412, 1.0
          %v3438 = vsub.f32 %v3414, 1.0
          %v3439 = vsub.f32 %v3416, 1.0
          %v3440 = vsub.f32 %v3418, 1.0
          %v3441 = vsub.f32 %v3420, 1.0
          %v3442 = vsub.f32 %v3422, 1.0
          %v3443 = vsub.f32 %v3424, 1.0
          %v3444 = vsub.f32 %v3426, 1.0
          %v3445 = vsub.f32 %v3428, 1.0
          %v3446 = vsub.f32 %v3430, 1.0
          %v3447 = vsel %vm3367, %v3336, %v3431
          %v3448 = vsel %vm3368, %v3338, %v3432
          %v3449 = vsel %vm3369, %v3340, %v3433
          %v3450 = vsel %vm3370, %v3342, %v3434
          %v3451 = vsel %vm3371, %v3344, %v3435
          %v3452 = vsel %vm3372, %v3346, %v3436
          %v3453 = vsel %vm3373, %v3348, %v3437
          %v3454 = vsel %vm3374, %v3350, %v3438
          %v3455 = vsel %vm3375, %v3352, %v3439
          %v3456 = vsel %vm3376, %v3354, %v3440
          %v3457 = vsel %vm3377, %v3356, %v3441
          %v3458 = vsel %vm3378, %v3358, %v3442
          %v3459 = vsel %vm3379, %v3360, %v3443
          %v3460 = vsel %vm3380, %v3362, %v3444
          %v3461 = vsel %vm3381, %v3364, %v3445
          %v3462 = vsel %vm3382, %v3366, %v3446
          %v3463 = vld [vmem:[%s2513] sm:$0xff]
          %v3464 = vld [vmem:[%s2513 + $0x8] sm:$0xff]
          %v3465 = vld [vmem:[%s2513 + $0x10] sm:$0xff]
          %v3466 = vld [vmem:[%s2513 + $0x18] sm:$0xff]
          %v3467 = vld [vmem:[%s2513 + $0x20] sm:$0xff]
          %v3468 = vld [vmem:[%s2513 + $0x28] sm:$0xff]
          %v3469 = vld [vmem:[%s2513 + $0x30] sm:$0xff]
          %v3470 = vld [vmem:[%s2513 + $0x38] sm:$0xff]
          %v3471 = vld [vmem:[%s2513 + $0x40] sm:$0xff]
          %v3472 = vld [vmem:[%s2513 + $0x48] sm:$0xff]
          %v3473 = vld [vmem:[%s2513 + $0x50] sm:$0xff]
          %v3474 = vld [vmem:[%s2513 + $0x58] sm:$0xff]
          %v3475 = vld [vmem:[%s2513 + $0x60] sm:$0xff]
          %v3476 = vld [vmem:[%s2513 + $0x68] sm:$0xff]
          %v3477 = vld [vmem:[%s2513 + $0x70] sm:$0xff]
          %v3478 = vld [vmem:[%s2513 + $0x78] sm:$0xff]
          %v3479 = vmax.f32 %v3463, 1e-30
          %v3480 = vmax.f32 %v3464, 1e-30
          %v3481 = vmax.f32 %v3465, 1e-30
          %v3482 = vmax.f32 %v3466, 1e-30
          %v3483 = vmax.f32 %v3467, 1e-30
          %v3484 = vmax.f32 %v3468, 1e-30
          %v3485 = vmax.f32 %v3469, 1e-30
          %v3486 = vmax.f32 %v3470, 1e-30
          %v3487 = vmax.f32 %v3471, 1e-30
          %v3488 = vmax.f32 %v3472, 1e-30
          %v3489 = vmax.f32 %v3473, 1e-30
          %v3490 = vmax.f32 %v3474, 1e-30
          %v3491 = vmax.f32 %v3475, 1e-30
          %v3492 = vmax.f32 %v3476, 1e-30
          %v3493 = vmax.f32 %v3477, 1e-30
          %v3494 = vmax.f32 %v3478, 1e-30
          %3496 = vset.pattern.permute.xlu0 16
          %3497 = vperm.xlu0 %3496, %v3479
          %v3498 = vpop.permute.xlu0 %3497
          %3501 = vset.pattern.permute.xlu0 16
          %3502 = vperm.xlu0 %3501, %v3480
          %v3503 = vpop.permute.xlu0 %3502
          %3506 = vset.pattern.permute.xlu0 16
          %3507 = vperm.xlu0 %3506, %v3481
          %v3508 = vpop.permute.xlu0 %3507
          %3511 = vset.pattern.permute.xlu0 16
          %3512 = vperm.xlu0 %3511, %v3482
          %v3513 = vpop.permute.xlu0 %3512
          %3516 = vset.pattern.permute.xlu0 16
          %3517 = vperm.xlu0 %3516, %v3483
          %v3518 = vpop.permute.xlu0 %3517
          %3521 = vset.pattern.permute.xlu0 16
          %3522 = vperm.xlu0 %3521, %v3484
          %v3523 = vpop.permute.xlu0 %3522
          %3526 = vset.pattern.permute.xlu0 16
          %3527 = vperm.xlu0 %3526, %v3485
          %v3528 = vpop.permute.xlu0 %3527
          %3531 = vset.pattern.permute.xlu0 16
          %3532 = vperm.xlu0 %3531, %v3486
          %v3533 = vpop.permute.xlu0 %3532
          %3536 = vset.pattern.permute.xlu0 16
          %3537 = vperm.xlu0 %3536, %v3487
          %v3538 = vpop.permute.xlu0 %3537
          %3541 = vset.pattern.permute.xlu0 16
          %3542 = vperm.xlu0 %3541, %v3488
          %v3543 = vpop.permute.xlu0 %3542
          %3546 = vset.pattern.permute.xlu0 16
          %3547 = vperm.xlu0 %3546, %v3489
          %v3548 = vpop.permute.xlu0 %3547
          %3551 = vset.pattern.permute.xlu0 16
          %3552 = vperm.xlu0 %3551, %v3490
          %v3553 = vpop.permute.xlu0 %3552
          %3556 = vset.pattern.permute.xlu0 16
          %3557 = vperm.xlu0 %3556, %v3491
          %v3558 = vpop.permute.xlu0 %3557
          %3561 = vset.pattern.permute.xlu0 16
          %3562 = vperm.xlu0 %3561, %v3492
          %v3563 = vpop.permute.xlu0 %3562
          %3566 = vset.pattern.permute.xlu0 16
          %3567 = vperm.xlu0 %3566, %v3493
          %v3568 = vpop.permute.xlu0 %3567
          %3571 = vset.pattern.permute.xlu0 16
          %3572 = vperm.xlu0 %3571, %v3494
          %v3573 = vpop.permute.xlu0 %3572
          %v3575 = vrcp.pop %v3498
          %v3576 = vmul.f32 %v3463, %v3575
          %v3577 = vrcp.pop %v3503
          %v3578 = vmul.f32 %v3464, %v3577
          %v3579 = vrcp.pop %v3508
          %v3580 = vmul.f32 %v3465, %v3579
          %v3581 = vrcp.pop %v3513
          %v3582 = vmul.f32 %v3466, %v3581
          %v3583 = vrcp.pop %v3518
          %v3584 = vmul.f32 %v3467, %v3583
          %v3585 = vrcp.pop %v3523
          %v3586 = vmul.f32 %v3468, %v3585
          %v3587 = vrcp.pop %v3528
          %v3588 = vmul.f32 %v3469, %v3587
          %v3589 = vrcp.pop %v3533
          %v3590 = vmul.f32 %v3470, %v3589
          %v3591 = vrcp.pop %v3538
          %v3592 = vmul.f32 %v3471, %v3591
          %v3593 = vrcp.pop %v3543
          %v3594 = vmul.f32 %v3472, %v3593
          %v3595 = vrcp.pop %v3548
          %v3596 = vmul.f32 %v3473, %v3595
          %v3597 = vrcp.pop %v3553
          %v3598 = vmul.f32 %v3474, %v3597
          %v3599 = vrcp.pop %v3558
          %v3600 = vmul.f32 %v3475, %v3599
          %v3601 = vrcp.pop %v3563
          %v3602 = vmul.f32 %v3476, %v3601
          %v3603 = vrcp.pop %v3568
          %v3604 = vmul.f32 %v3477, %v3603
          %v3605 = vrcp.pop %v3573
          %v3606 = vmul.f32 %v3478, %v3605
          %vm3607 = vcmp.gt.f32.partialorder %v3576, 0.0
          %vm3608 = vcmp.gt.f32.partialorder %v3578, 0.0
          %vm3609 = vcmp.gt.f32.partialorder %v3580, 0.0
          %vm3610 = vcmp.gt.f32.partialorder %v3582, 0.0
          %vm3611 = vcmp.gt.f32.partialorder %v3584, 0.0
          %vm3612 = vcmp.gt.f32.partialorder %v3586, 0.0
          %vm3613 = vcmp.gt.f32.partialorder %v3588, 0.0
          %vm3614 = vcmp.gt.f32.partialorder %v3590, 0.0
          %vm3615 = vcmp.gt.f32.partialorder %v3592, 0.0
          %vm3616 = vcmp.gt.f32.partialorder %v3594, 0.0
          %vm3617 = vcmp.gt.f32.partialorder %v3596, 0.0
          %vm3618 = vcmp.gt.f32.partialorder %v3598, 0.0
          %vm3619 = vcmp.gt.f32.partialorder %v3600, 0.0
          %vm3620 = vcmp.gt.f32.partialorder %v3602, 0.0
          %vm3621 = vcmp.gt.f32.partialorder %v3604, 0.0
          %vm3622 = vcmp.gt.f32.partialorder %v3606, 0.0
          %v3623 = vmin.f32 %v3576, 0.0
          %v3624 = vmin.f32 %v3578, 0.0
          %v3625 = vmin.f32 %v3580, 0.0
          %v3626 = vmin.f32 %v3582, 0.0
          %v3627 = vmin.f32 %v3584, 0.0
          %v3628 = vmin.f32 %v3586, 0.0
          %v3629 = vmin.f32 %v3588, 0.0
          %v3630 = vmin.f32 %v3590, 0.0
          %v3631 = vmin.f32 %v3592, 0.0
          %v3632 = vmin.f32 %v3594, 0.0
          %v3633 = vmin.f32 %v3596, 0.0
          %v3634 = vmin.f32 %v3598, 0.0
          %v3635 = vmin.f32 %v3600, 0.0
          %v3636 = vmin.f32 %v3602, 0.0
          %v3637 = vmin.f32 %v3604, 0.0
          %v3638 = vmin.f32 %v3606, 0.0
          %v3639 = vmul.f32 %v3623, 1.442695
          %v3640 = vpow.pop %v3639
          %v3641 = vmul.f32 %v3624, 1.442695
          %v3642 = vpow.pop %v3641
          %v3643 = vmul.f32 %v3625, 1.442695
          %v3644 = vpow.pop %v3643
          %v3645 = vmul.f32 %v3626, 1.442695
          %v3646 = vpow.pop %v3645
          %v3647 = vmul.f32 %v3627, 1.442695
          %v3648 = vpow.pop %v3647
          %v3649 = vmul.f32 %v3628, 1.442695
          %v3650 = vpow.pop %v3649
          %v3651 = vmul.f32 %v3629, 1.442695
          %v3652 = vpow.pop %v3651
          %v3653 = vmul.f32 %v3630, 1.442695
          %v3654 = vpow.pop %v3653
          %v3655 = vmul.f32 %v3631, 1.442695
          %v3656 = vpow.pop %v3655
          %v3657 = vmul.f32 %v3632, 1.442695
          %v3658 = vpow.pop %v3657
          %v3659 = vmul.f32 %v3633, 1.442695
          %v3660 = vpow.pop %v3659
          %v3661 = vmul.f32 %v3634, 1.442695
          %v3662 = vpow.pop %v3661
          %v3663 = vmul.f32 %v3635, 1.442695
          %v3664 = vpow.pop %v3663
          %v3665 = vmul.f32 %v3636, 1.442695
          %v3666 = vpow.pop %v3665
          %v3667 = vmul.f32 %v3637, 1.442695
          %v3668 = vpow.pop %v3667
          %v3669 = vmul.f32 %v3638, 1.442695
          %v3670 = vpow.pop %v3669
          %v3671 = vsub.f32 %v3640, 1.0
          %v3672 = vsub.f32 %v3642, 1.0
          %v3673 = vsub.f32 %v3644, 1.0
          %v3674 = vsub.f32 %v3646, 1.0
          %v3675 = vsub.f32 %v3648, 1.0
          %v3676 = vsub.f32 %v3650, 1.0
          %v3677 = vsub.f32 %v3652, 1.0
          %v3678 = vsub.f32 %v3654, 1.0
          %v3679 = vsub.f32 %v3656, 1.0
          %v3680 = vsub.f32 %v3658, 1.0
          %v3681 = vsub.f32 %v3660, 1.0
          %v3682 = vsub.f32 %v3662, 1.0
          %v3683 = vsub.f32 %v3664, 1.0
          %v3684 = vsub.f32 %v3666, 1.0
          %v3685 = vsub.f32 %v3668, 1.0
          %v3686 = vsub.f32 %v3670, 1.0
          %v3687 = vsel %vm3607, %v3576, %v3671
          %v3688 = vsel %vm3608, %v3578, %v3672
          %v3689 = vsel %vm3609, %v3580, %v3673
          %v3690 = vsel %vm3610, %v3582, %v3674
          %v3691 = vsel %vm3611, %v3584, %v3675
          %v3692 = vsel %vm3612, %v3586, %v3676
          %v3693 = vsel %vm3613, %v3588, %v3677
          %v3694 = vsel %vm3614, %v3590, %v3678
          %v3695 = vsel %vm3615, %v3592, %v3679
          %v3696 = vsel %vm3616, %v3594, %v3680
          %v3697 = vsel %vm3617, %v3596, %v3681
          %v3698 = vsel %vm3618, %v3598, %v3682
          %v3699 = vsel %vm3619, %v3600, %v3683
          %v3700 = vsel %vm3620, %v3602, %v3684
          %v3701 = vsel %vm3621, %v3604, %v3685
          %v3702 = vsel %vm3622, %v3606, %v3686
          %3719 = vrot.lane.b32.xlu0 %v3207, 16
          %v3720 = vpop.permute.xlu0 %3719
          %3721 = vrot.lane.b32.xlu0 %v3208, 16
          %v3722 = vpop.permute.xlu0 %3721
          %3723 = vrot.lane.b32.xlu0 %v3209, 16
          %v3724 = vpop.permute.xlu0 %3723
          %3725 = vrot.lane.b32.xlu0 %v3210, 16
          %v3726 = vpop.permute.xlu0 %3725
          %3727 = vrot.lane.b32.xlu0 %v3211, 16
          %v3728 = vpop.permute.xlu0 %3727
          %3729 = vrot.lane.b32.xlu0 %v3212, 16
          %v3730 = vpop.permute.xlu0 %3729
          %3731 = vrot.lane.b32.xlu0 %v3213, 16
          %v3732 = vpop.permute.xlu0 %3731
          %3733 = vrot.lane.b32.xlu0 %v3214, 16
          %v3734 = vpop.permute.xlu0 %3733
          %3735 = vrot.lane.b32.xlu0 %v3215, 16
          %v3736 = vpop.permute.xlu0 %3735
          %3737 = vrot.lane.b32.xlu0 %v3216, 16
          %v3738 = vpop.permute.xlu0 %3737
          %3739 = vrot.lane.b32.xlu0 %v3217, 16
          %v3740 = vpop.permute.xlu0 %3739
          %3741 = vrot.lane.b32.xlu0 %v3218, 16
          %v3742 = vpop.permute.xlu0 %3741
          %3743 = vrot.lane.b32.xlu0 %v3219, 16
          %v3744 = vpop.permute.xlu0 %3743
          %3745 = vrot.lane.b32.xlu0 %v3220, 16
          %v3746 = vpop.permute.xlu0 %3745
          %3747 = vrot.lane.b32.xlu0 %v3221, 16
          %v3748 = vpop.permute.xlu0 %3747
          %3749 = vrot.lane.b32.xlu0 %v3222, 16
          %v3750 = vpop.permute.xlu0 %3749
          %3783 = vrot.lane.b32.xlu0 %v3447, 32
          %v3784 = vpop.permute.xlu0 %3783
          %3785 = vrot.lane.b32.xlu0 %v3448, 32
          %v3786 = vpop.permute.xlu0 %3785
          %3787 = vrot.lane.b32.xlu0 %v3449, 32
          %v3788 = vpop.permute.xlu0 %3787
          %3789 = vrot.lane.b32.xlu0 %v3450, 32
          %v3790 = vpop.permute.xlu0 %3789
          %3791 = vrot.lane.b32.xlu0 %v3451, 32
          %v3792 = vpop.permute.xlu0 %3791
          %3793 = vrot.lane.b32.xlu0 %v3452, 32
          %v3794 = vpop.permute.xlu0 %3793
          %3795 = vrot.lane.b32.xlu0 %v3453, 32
          %v3796 = vpop.permute.xlu0 %3795
          %3797 = vrot.lane.b32.xlu0 %v3454, 32
          %v3798 = vpop.permute.xlu0 %3797
          %3799 = vrot.lane.b32.xlu0 %v3455, 32
          %v3800 = vpop.permute.xlu0 %3799
          %3801 = vrot.lane.b32.xlu0 %v3456, 32
          %v3802 = vpop.permute.xlu0 %3801
          %3803 = vrot.lane.b32.xlu0 %v3457, 32
          %v3804 = vpop.permute.xlu0 %3803
          %3805 = vrot.lane.b32.xlu0 %v3458, 32
          %v3806 = vpop.permute.xlu0 %3805
          %3807 = vrot.lane.b32.xlu0 %v3459, 32
          %v3808 = vpop.permute.xlu0 %3807
          %3809 = vrot.lane.b32.xlu0 %v3460, 32
          %v3810 = vpop.permute.xlu0 %3809
          %3811 = vrot.lane.b32.xlu0 %v3461, 32
          %v3812 = vpop.permute.xlu0 %3811
          %3813 = vrot.lane.b32.xlu0 %v3462, 32
          %v3814 = vpop.permute.xlu0 %3813
          %3847 = vrot.lane.b32.xlu0 %v3687, 48
          %v3848 = vpop.permute.xlu0 %3847
          %3849 = vrot.lane.b32.xlu0 %v3688, 48
          %v3850 = vpop.permute.xlu0 %3849
          %3851 = vrot.lane.b32.xlu0 %v3689, 48
          %v3852 = vpop.permute.xlu0 %3851
          %3853 = vrot.lane.b32.xlu0 %v3690, 48
          %v3854 = vpop.permute.xlu0 %3853
          %3855 = vrot.lane.b32.xlu0 %v3691, 48
          %v3856 = vpop.permute.xlu0 %3855
          %3857 = vrot.lane.b32.xlu0 %v3692, 48
          %v3858 = vpop.permute.xlu0 %3857
          %3859 = vrot.lane.b32.xlu0 %v3693, 48
          %v3860 = vpop.permute.xlu0 %3859
          %3861 = vrot.lane.b32.xlu0 %v3694, 48
          %v3862 = vpop.permute.xlu0 %3861
          %3863 = vrot.lane.b32.xlu0 %v3695, 48
          %v3864 = vpop.permute.xlu0 %3863
          %3865 = vrot.lane.b32.xlu0 %v3696, 48
          %v3866 = vpop.permute.xlu0 %3865
          %3867 = vrot.lane.b32.xlu0 %v3697, 48
          %v3868 = vpop.permute.xlu0 %3867
          %3869 = vrot.lane.b32.xlu0 %v3698, 48
          %v3870 = vpop.permute.xlu0 %3869
          %3871 = vrot.lane.b32.xlu0 %v3699, 48
          %v3872 = vpop.permute.xlu0 %3871
          %3873 = vrot.lane.b32.xlu0 %v3700, 48
          %v3874 = vpop.permute.xlu0 %3873
          %3875 = vrot.lane.b32.xlu0 %v3701, 48
          %v3876 = vpop.permute.xlu0 %3875
          %3877 = vrot.lane.b32.xlu0 %v3702, 48
          %v3878 = vpop.permute.xlu0 %3877
          %vm3895 = vcmask 130048
          %v3896 = vsel %vm3895, %v2967, %v3720
          %v3897 = vsel %vm3895, %v2968, %v3722
          %v3898 = vsel %vm3895, %v2969, %v3724
          %v3899 = vsel %vm3895, %v2970, %v3726
          %v3900 = vsel %vm3895, %v2971, %v3728
          %v3901 = vsel %vm3895, %v2972, %v3730
          %v3902 = vsel %vm3895, %v2973, %v3732
          %v3903 = vsel %vm3895, %v2974, %v3734
          %v3904 = vsel %vm3895, %v2975, %v3736
          %v3905 = vsel %vm3895, %v2976, %v3738
          %v3906 = vsel %vm3895, %v2977, %v3740
          %v3907 = vsel %vm3895, %v2978, %v3742
          %v3908 = vsel %vm3895, %v2979, %v3744
          %v3909 = vsel %vm3895, %v2980, %v3746
          %v3910 = vsel %vm3895, %v2981, %v3748
          %v3911 = vsel %vm3895, %v2982, %v3750
          %vm3912 = vcmask 261120
          %v3913 = vsel %vm3912, %v3896, %v3784
          %v3914 = vsel %vm3912, %v3897, %v3786
          %v3915 = vsel %vm3912, %v3898, %v3788
          %v3916 = vsel %vm3912, %v3899, %v3790
          %v3917 = vsel %vm3912, %v3900, %v3792
          %v3918 = vsel %vm3912, %v3901, %v3794
          %v3919 = vsel %vm3912, %v3902, %v3796
          %v3920 = vsel %vm3912, %v3903, %v3798
          %v3921 = vsel %vm3912, %v3904, %v3800
          %v3922 = vsel %vm3912, %v3905, %v3802
          %v3923 = vsel %vm3912, %v3906, %v3804
          %v3924 = vsel %vm3912, %v3907, %v3806
          %v3925 = vsel %vm3912, %v3908, %v3808
          %v3926 = vsel %vm3912, %v3909, %v3810
          %v3927 = vsel %vm3912, %v3910, %v3812
          %v3928 = vsel %vm3912, %v3911, %v3814
          %vm3929 = vcmask 392192
          %v3930 = vsel %vm3929, %v3913, %v3848
          %v3931 = vsel %vm3929, %v3914, %v3850
          %v3932 = vsel %vm3929, %v3915, %v3852
          %v3933 = vsel %vm3929, %v3916, %v3854
          %v3934 = vsel %vm3929, %v3917, %v3856
          %v3935 = vsel %vm3929, %v3918, %v3858
          %v3936 = vsel %vm3929, %v3919, %v3860
          %v3937 = vsel %vm3929, %v3920, %v3862
          %v3938 = vsel %vm3929, %v3921, %v3864
          %v3939 = vsel %vm3929, %v3922, %v3866
          %v3940 = vsel %vm3929, %v3923, %v3868
          %v3941 = vsel %vm3929, %v3924, %v3870
          %v3942 = vsel %vm3929, %v3925, %v3872
          %v3943 = vsel %vm3929, %v3926, %v3874
          %v3944 = vsel %vm3929, %v3927, %v3876
          %v3945 = vsel %vm3929, %v3928, %v3878
          %vm3946 = vcmask 523264
          %v3947 = vsel %vm3946, %v3930, 0.0
          %v3948 = vsel %vm3946, %v3931, 0.0
          %v3949 = vsel %vm3946, %v3932, 0.0
          %v3950 = vsel %vm3946, %v3933, 0.0
          %v3951 = vsel %vm3946, %v3934, 0.0
          %v3952 = vsel %vm3946, %v3935, 0.0
          %v3953 = vsel %vm3946, %v3936, 0.0
          %v3954 = vsel %vm3946, %v3937, 0.0
          %v3955 = vsel %vm3946, %v3938, 0.0
          %v3956 = vsel %vm3946, %v3939, 0.0
          %v3957 = vsel %vm3946, %v3940, 0.0
          %v3958 = vsel %vm3946, %v3941, 0.0
          %v3959 = vsel %vm3946, %v3942, 0.0
          %v3960 = vsel %vm3946, %v3943, 0.0
          %v3961 = vsel %vm3946, %v3944, 0.0
          %v3962 = vsel %vm3946, %v3945, 0.0
          %3963 = vst [vmem:[%s454] sm:$0xff] %v3947
          %3964 = vst [vmem:[%s454 + $0x8] sm:$0xff] %v3948
          %3965 = vst [vmem:[%s454 + $0x10] sm:$0xff] %v3949
          %3966 = vst [vmem:[%s454 + $0x18] sm:$0xff] %v3950
          %3967 = vst [vmem:[%s454 + $0x20] sm:$0xff] %v3951
          %3968 = vst [vmem:[%s454 + $0x28] sm:$0xff] %v3952
          %3969 = vst [vmem:[%s454 + $0x30] sm:$0xff] %v3953
          %3970 = vst [vmem:[%s454 + $0x38] sm:$0xff] %v3954
          %3971 = vst [vmem:[%s454 + $0x40] sm:$0xff] %v3955
          %3972 = vst [vmem:[%s454 + $0x48] sm:$0xff] %v3956
          %3973 = vst [vmem:[%s454 + $0x50] sm:$0xff] %v3957
          %3974 = vst [vmem:[%s454 + $0x58] sm:$0xff] %v3958
          %3975 = vst [vmem:[%s454 + $0x60] sm:$0xff] %v3959
          %3976 = vst [vmem:[%s454 + $0x68] sm:$0xff] %v3960
          %3977 = vst [vmem:[%s454 + $0x70] sm:$0xff] %v3961
          %3978 = vst [vmem:[%s454 + $0x78] sm:$0xff] %v3962
        $region82: #{_lambda_.3} parent=69 // pred_fallthru
          _
        %s3979 = smul.u32 16, %s19
        %p3980 = scmp.lt.s32.totalorder %s3979, 31
        %s3981 = scalar_select %p3980, %s3979, 31
        %s3982 = smul.addr %s3981, 8
        %s3983 = scalar_lea.vmem %s4, %s3982
        // Predicated region
        $region83: #{_lambda_.3} parent=69 // pred_check
          %p3984 = pneg %p151
        $region84: #{_lambda_.3} parent=69 // pred_check_branch
          %3986 = sbr.rel (%p3984) target = $region86
        $region85: #{_lambda_.3} parent=69 // pred_region
          %s3987 = smul.u32 16, %s19
        $region86: #{_lambda_.3} parent=69 // pred_fallthru
          _
      $region70: #{_lambda_.3} parent=5 // pred_fallthru
        _
      %p3988 = scmp.le.s32.totalorder 2, %s10
      // Predicated region
      $region87: #{_lambda_.3} parent=5 // pred_check
        %p3989 = pneg %p3988
      $region88: #{_lambda_.3} parent=5 // pred_check_branch
        %3991 = sbr.rel (%p3989) target = $region90
      $region89: #{_lambda_.3} parent=5 // pred_region
        %s3992 = ssub.s32 %s10, 2
        // Predicated region
        $region91: #{_lambda_.3} parent=89 // pred_check
          %p3993 = pneg %p157
        $region92: #{_lambda_.3} parent=89 // pred_check_branch
          %3995 = sbr.rel (%p3993) target = $region94
        $region93: #{_lambda_.3} parent=89 // pred_region
          %s3996 = smul.u32 16, %s21
          %p3997 = scmp.lt.s32.totalorder %s3996, 31
          %s3998 = scalar_select %p3997, %s3996, 31
          %s3999 = smul.addr %s3998, 8
          %s4000 = scalar_lea.vmem %s4, %s3999
        $region94: #{_lambda_.3} parent=89 // pred_fallthru
          _
      $region90: #{_lambda_.3} parent=5 // pred_fallthru
        _
    $region6: #{_lambda_.3} parent=1 // loop_footer
      %s14 = sadd.s32 1, %s10
    $region7: #{_lambda_.3} parent=1 // loop_footer_branch
      %9 = sbr.rel target = $region3
    $region8: #{_lambda_.3} parent=1 // loop_exit
      _

</llo_original>
